<compile_context>
chip_gen: v7x
topology: tpu7x:2x2x1
jax: 0.10.0
libtpu: 0.0.40
codegen_flags: <defaults>
</compile_context>

<pallas_src>
import math

import jax
import jax.numpy as jnp
from jax.experimental import pallas as pl
from jax.experimental.pallas import tpu as pltpu

# ----- model hyper-parameters (small, consistent with the module signature) --
N_LAYERS = 2          # N
D_MODEL = 32          # d_model
D_K = 8               # d_k
D_V = 8               # d_v
N_HEADS = 4           # h
D_FF = 64             # d_ff
PADDING_IDX = 0
LN_EPS = 1e-5         # torch.nn.LayerNorm default
NEG_BIAS = -1e9       # additive mask bias (finite stand-in for -inf)

# Packed-weight column offsets: every region starts on a 128-lane boundary so
# the in-kernel static slices never need a lane rotate.
_QKV_OFF = 0          # width 2*h*d_k + h*d_v (= 96)
_WO_OFF = 128         # width d_model          (= 32)
_W1_OFF = 256         # width d_ff             (= 64)
_W_IN_COLS = 384


def _layer_norm(v, g, b):
    mean = jnp.mean(v, axis=-1, keepdims=True)
    var = jnp.mean((v - mean) ** 2, axis=-1, keepdims=True)
    return (v - mean) * jax.lax.rsqrt(var + LN_EPS) * g + b


def fused_encoder_stack_kernel(x_ref, bias_ref, w_in_ref, w2_ref, vec_ref, out_ref):
    """All N encoder layers, whole batch, one invocation.

    x_ref    : (B, S, D)      input activations
    bias_ref : (B, 1, S)      additive key-padding bias (0 / NEG_BIAS)
    w_in_ref : (N, D, 384)    [Wqkv | Wo | W1] packed on 128-lane boundaries
    w2_ref   : (N, D_FF, D)   FFN second matmul weight
    vec_ref  : (N, 8, 128)    rows: bqkv, bo, b1, b2, ln1_g, ln1_b, ln2_g, ln2_b
    out_ref  : (B, N, S, D)   per-layer outputs
    """
    B, S, D = x_ref.shape
    n_layers = w_in_ref.shape[0]
    hdk = N_HEADS * D_K
    hdv = N_HEADS * D_V
    qkv_w = 2 * hdk + hdv
    scale = 1.0 / math.sqrt(D_K)

    # Hoisted once (not per head / per layer): broadcast the key-padding bias
    # to the (B, S_q, S_k) score shape.
    bias_b = jnp.broadcast_to(bias_ref[...], (B, S, S))

    # Flatten batch into the MXU M-dimension.
    h2 = x_ref[...].reshape(B * S, D).astype(jnp.float32)          # (B*S, D)

    for l in range(n_layers):                                      # static unroll
        wqkv = w_in_ref[l, :, _QKV_OFF:_QKV_OFF + qkv_w]           # (D, 96)
        wo = w_in_ref[l, :, _WO_OFF:_WO_OFF + D]                   # (h*d_v==D, D)
        w1 = w_in_ref[l, :, _W1_OFF:_W1_OFF + D_FF]                # (D, D_FF)
        w2 = w2_ref[l]                                             # (D_FF, D)
        bqkv = vec_ref[l, 0:1, 0:qkv_w]                            # (1, 96)
        bo = vec_ref[l, 1:2, 0:D]
        b1 = vec_ref[l, 2:3, 0:D_FF]
        b2 = vec_ref[l, 3:4, 0:D]
        ln1_g = vec_ref[l, 4:5, 0:D]
        ln1_b = vec_ref[l, 5:6, 0:D]
        ln2_g = vec_ref[l, 6:7, 0:D]
        ln2_b = vec_ref[l, 7:8, 0:D]

        # ---- fused QKV projection over the whole (B*S, D) slab (one MXU pass)
        qkv = jnp.dot(h2, wqkv, preferred_element_type=jnp.float32) + bqkv
        qkv3 = qkv.reshape(B, S, qkv_w)                            # (B, S, 96)

        # ---- multi-head attention: batched over B; static loop over heads ---
        mha = jnp.zeros((B * S, D), jnp.float32)
        for hh in range(N_HEADS):
            q_h = qkv3[:, :, hh * D_K:(hh + 1) * D_K]                      # (B,S,dk)
            k_h = qkv3[:, :, hdk + hh * D_K:hdk + (hh + 1) * D_K]          # (B,S,dk)
            v_h = qkv3[:, :, 2 * hdk + hh * D_V:2 * hdk + (hh + 1) * D_V]  # (B,S,dv)

            s = jnp.einsum('bqd,bkd->bqk', q_h, k_h,
                           preferred_element_type=jnp.float32) * scale + bias_b
            s = s - jnp.max(s, axis=-1, keepdims=True)
            p = jnp.exp(s)
            p = p * pl.reciprocal(jnp.sum(p, axis=-1, keepdims=True), approx=True)
            o_h = jnp.einsum('bqk,bkd->bqd', p, v_h,
                             preferred_element_type=jnp.float32)           # (B,S,dv)

            # Accumulate this head's slice of the output projection
            # (== concat(heads) @ Wo, but without the lane concat).
            mha = mha + jnp.dot(o_h.reshape(B * S, D_V),
                                wo[hh * D_V:(hh + 1) * D_V, :],
                                preferred_element_type=jnp.float32)
        mha = mha + bo

        # TODO(synk): dropout layers are identity here (eval/inference semantics).
        y = _layer_norm(h2 + mha, ln1_g, ln1_b)                    # residual + LN

        # ---- position-wise feed-forward -------------------------------------
        f = jnp.maximum(
            jnp.dot(y, w1, preferred_element_type=jnp.float32) + b1, 0.0)
        f = jnp.dot(f, w2, preferred_element_type=jnp.float32) + b2
        h2 = _layer_norm(y + f, ln2_g, ln2_b)

        out_ref[:, l, :, :] = h2.reshape(B, S, D).astype(out_ref.dtype)


def _pack_layer_params(p):
    """Pack one EncoderLayer's 16 parameter tensors into 3 dense arrays."""
    (wq, bq, wk, bk, wv, bv, wo, bo, ln1_g, ln1_b,
     w1, b1, w2, b2, ln2_g, ln2_b) = p
    d_model = wq.shape[0]
    qkv_w = wq.shape[1] + wk.shape[1] + wv.shape[1]
    d_ff = w1.shape[1]
    assert wo.shape[0] == d_model, "packing assumes h*d_v == d_model"
    assert qkv_w <= 128 and d_model <= 128 and d_ff <= 128

    w_in = jnp.zeros((d_model, _W_IN_COLS), jnp.float32)
    w_in = w_in.at[:, _QKV_OFF:_QKV_OFF + qkv_w].set(
        jnp.concatenate([wq, wk, wv], axis=1))
    w_in = w_in.at[:, _WO_OFF:_WO_OFF + d_model].set(wo)
    w_in = w_in.at[:, _W1_OFF:_W1_OFF + d_ff].set(w1)

    vec = jnp.zeros((8, 128), jnp.float32)
    vec = vec.at[0, 0:qkv_w].set(jnp.concatenate([bq, bk, bv], axis=1)[0])
    vec = vec.at[1, 0:d_model].set(bo[0])
    vec = vec.at[2, 0:d_ff].set(b1[0])
    vec = vec.at[3, 0:d_model].set(b2[0])
    vec = vec.at[4, 0:d_model].set(ln1_g[0])
    vec = vec.at[5, 0:d_model].set(ln1_b[0])
    vec = vec.at[6, 0:d_model].set(ln2_g[0])
    vec = vec.at[7, 0:d_model].set(ln2_b[0])
    return w_in, w2, vec


def multi_level_encoder_col(x, layer_params, padding_idx):
    """Forward pass of MultiLevelEncoder_Col.

    Returns (outs, attention_mask):
      outs:           (B, N_layers, S, d_model)
      attention_mask: (B, 1, 1, S) bool  (True where sum(x, -1) == padding_idx)
    """
    B, S, D = x.shape
    n_layers = len(layer_params)

    mask_bool = jnp.sum(x, axis=-1) == padding_idx                  # (B, S)
    bias = jnp.where(mask_bool, NEG_BIAS, 0.0).astype(jnp.float32)[:, None, :]

    packed = [_pack_layer_params(p) for p in layer_params]
    w_in_all = jnp.stack([w for (w, _, _) in packed])               # (N, D, 384)
    w2_all = jnp.stack([w2 for (_, w2, _) in packed])               # (N, D_FF, D)
    vec_all = jnp.stack([v for (_, _, v) in packed])                # (N, 8, 128)

    # Single fused invocation: no grid, every (tiny) operand is DMA'd to VMEM
    # once and stays resident, so there is exactly one launch and one HBM
    # round trip for the whole layer stack.
    # TODO(synk): on v7x one could split the batch over a 2-wide "parallel"
    # grid to feed both TensorCores; at these shapes a single core is faster.
    outs = pl.pallas_call(
        fused_encoder_stack_kernel,
        out_shape=jax.ShapeDtypeStruct((B, n_layers, S, D), x.dtype),
        compiler_params=pltpu.CompilerParams(
            # Usage here is ~200 KiB; the explicit cap just documents the budget
            # if S/D are scaled up (v7x has only 64 MiB physical VMEM).
            vmem_limit_bytes=32 * 1024 * 1024,
        ),
    )(x, bias, w_in_all, w2_all, vec_all)

    attention_mask = mask_bool[:, None, None, :]
    return outs, attention_mask


def init_layer_params(key):
    """Deterministic synthetic parameters for one EncoderLayer."""
    ks = jax.random.split(key, 6)
    s = 0.05
    wq = jax.random.normal(ks[0], (D_MODEL, N_HEADS * D_K), jnp.float32) * s
    wk = jax.random.normal(ks[1], (D_MODEL, N_HEADS * D_K), jnp.float32) * s
    wv = jax.random.normal(ks[2], (D_MODEL, N_HEADS * D_V), jnp.float32) * s
    wo = jax.random.normal(ks[3], (N_HEADS * D_V, D_MODEL), jnp.float32) * s
    w1 = jax.random.normal(ks[4], (D_MODEL, D_FF), jnp.float32) * s
    w2 = jax.random.normal(ks[5], (D_FF, D_MODEL), jnp.float32) * s
    bq = jnp.zeros((1, N_HEADS * D_K), jnp.float32)
    bk = jnp.zeros((1, N_HEADS * D_K), jnp.float32)
    bv = jnp.zeros((1, N_HEADS * D_V), jnp.float32)
    bo = jnp.zeros((1, D_MODEL), jnp.float32)
    b1 = jnp.zeros((1, D_FF), jnp.float32)
    b2 = jnp.zeros((1, D_MODEL), jnp.float32)
    ln1_g = jnp.ones((1, D_MODEL), jnp.float32)
    ln1_b = jnp.zeros((1, D_MODEL), jnp.float32)
    ln2_g = jnp.ones((1, D_MODEL), jnp.float32)
    ln2_b = jnp.zeros((1, D_MODEL), jnp.float32)
    return (wq, bq, wk, bk, wv, bv, wo, bo, ln1_g, ln1_b,
            w1, b1, w2, b2, ln2_g, ln2_b)


def _reference_forward(x, layer_params, padding_idx):
    """Pure-JAX reference (unpacked params) for a numerical sanity check."""
    B, S, _ = x.shape
    mask = jnp.sum(x, axis=-1) == padding_idx
    bias = jnp.where(mask, NEG_BIAS, 0.0)[:, None, None, :]         # (B,1,1,S)
    out = x
    outs = []
    for (wq, bq, wk, bk, wv, bv, wo, bo, ln1_g, ln1_b,
         w1, b1, w2, b2, ln2_g, ln2_b) in layer_params:
        q = (out @ wq + bq).reshape(B, S, N_HEADS, D_K).transpose(0, 2, 1, 3)
        k = (out @ wk + bk).reshape(B, S, N_HEADS, D_K).transpose(0, 2, 1, 3)
        v = (out @ wv + bv).reshape(B, S, N_HEADS, D_V).transpose(0, 2, 1, 3)
        sc = jnp.einsum('bhqd,bhkd->bhqk', q, k) / math.sqrt(D_K) + bias
        p = jax.nn.softmax(sc, axis=-1)
        o = jnp.einsum('bhqk,bhkd->bhqd', p, v).transpose(0, 2, 1, 3)
        o = o.reshape(B, S, N_HEADS * D_V)
        y = _layer_norm(out + (o @ wo + bo), ln1_g, ln1_b)
        f = jax.nn.relu(y @ w1 + b1) @ w2 + b2
        out = _layer_norm(y + f, ln2_g, ln2_b)
        outs.append(out[:, None])
    return jnp.concatenate(outs, axis=1), mask[:, None, None, :]


if __name__ == "__main__":
    key = jax.random.PRNGKey(0)
    B, S = 2, 8

    x = jax.random.normal(jax.random.fold_in(key, 123), (B, S, D_MODEL), jnp.float32)
    # make one position of batch 1 a "pad" token: features sum to padding_idx (0)
    x = x.at[1, -1, :].set(0.0)

    layer_params = [init_layer_params(jax.random.fold_in(key, i))
                    for i in range(N_LAYERS)]

    outs, attn_mask = multi_level_encoder_col(x, layer_params, PADDING_IDX)
    jax.block_until_ready(outs)
    jax.block_until_ready(attn_mask)

    assert outs.shape == (B, N_LAYERS, S, D_MODEL)
    assert attn_mask.shape == (B, 1, 1, S)

    # numerical sanity check vs. pure-JAX reference (loose tol: approx reciprocal)
    ref_outs, ref_mask = _reference_forward(x, layer_params, PADDING_IDX)
    max_err = float(jnp.max(jnp.abs(outs - ref_outs)))
    assert max_err < 1e-2, f"max abs error vs reference: {max_err}"
    assert bool(jnp.all(attn_mask == ref_mask))

    print("KERNEL_OK")
</pallas_src>

<mosaic_0001>
module attributes {stable_mosaic.version = 11 : i64} {
  func.func @fused_encoder_stack_kernel(%arg0: memref<2x8x32xf32, #tpu.memory_space<vmem>>, %arg1: memref<2x1x8xf32, #tpu.memory_space<vmem>>, %arg2: memref<2x32x384xf32, #tpu.memory_space<vmem>>, %arg3: memref<2x64x32xf32, #tpu.memory_space<vmem>>, %arg4: memref<2x8x128xf32, #tpu.memory_space<vmem>>, %arg5: memref<2x2x8x32xf32, #tpu.memory_space<vmem>>) attributes {dimension_semantics = [], scalar_prefetch = 0 : i64, scratch_operands = 0 : i64, tpu.core_type = #tpu.core_type<tc>} {
    %c0 = arith.constant 0 : index
    %c0_0 = arith.constant 0 : index
    %c0_1 = arith.constant 0 : index
    %0 = vector.load %arg1[%c0, %c0_0, %c0_1] : memref<2x1x8xf32, #tpu.memory_space<vmem>>, vector<2x1x8xf32>
    %1 = vector.shape_cast %0 : vector<2x1x8xf32> to vector<2x1x8xf32>
    %2 = vector.broadcast %1 : vector<2x1x8xf32> to vector<2x8x8xf32>
    %c0_2 = arith.constant 0 : index
    %c0_3 = arith.constant 0 : index
    %c0_4 = arith.constant 0 : index
    %3 = vector.load %arg0[%c0_2, %c0_3, %c0_4] : memref<2x8x32xf32, #tpu.memory_space<vmem>>, vector<2x8x32xf32>
    %4 = vector.shape_cast %3 : vector<2x8x32xf32> to vector<16x32xf32>
    %c0_5 = arith.constant 0 : index
    %c0_6 = arith.constant 0 : index
    %c0_7 = arith.constant 0 : index
    %5 = vector.load %arg2[%c0_5, %c0_6, %c0_7] : memref<2x32x384xf32, #tpu.memory_space<vmem>>, vector<1x32x96xf32>
    %6 = vector.shape_cast %5 : vector<1x32x96xf32> to vector<32x96xf32>
    %c0_8 = arith.constant 0 : index
    %c0_9 = arith.constant 0 : index
    %c128 = arith.constant 128 : index
    %7 = vector.load %arg2[%c0_8, %c0_9, %c128] : memref<2x32x384xf32, #tpu.memory_space<vmem>>, vector<1x32x32xf32>
    %8 = vector.shape_cast %7 : vector<1x32x32xf32> to vector<32x32xf32>
    %c0_10 = arith.constant 0 : index
    %c0_11 = arith.constant 0 : index
    %c256 = arith.constant 256 : index
    %9 = vector.load %arg2[%c0_10, %c0_11, %c256] : memref<2x32x384xf32, #tpu.memory_space<vmem>>, vector<1x32x64xf32>
    %10 = vector.shape_cast %9 : vector<1x32x64xf32> to vector<32x64xf32>
    %c0_12 = arith.constant 0 : index
    %c0_13 = arith.constant 0 : index
    %c0_14 = arith.constant 0 : index
    %11 = vector.load %arg3[%c0_12, %c0_13, %c0_14] : memref<2x64x32xf32, #tpu.memory_space<vmem>>, vector<1x64x32xf32>
    %12 = vector.shape_cast %11 : vector<1x64x32xf32> to vector<64x32xf32>
    %c0_15 = arith.constant 0 : index
    %c0_16 = arith.constant 0 : index
    %c0_17 = arith.constant 0 : index
    %13 = vector.load %arg4[%c0_15, %c0_16, %c0_17] : memref<2x8x128xf32, #tpu.memory_space<vmem>>, vector<1x1x96xf32>
    %14 = vector.shape_cast %13 : vector<1x1x96xf32> to vector<1x96xf32>
    %c0_18 = arith.constant 0 : index
    %c1 = arith.constant 1 : index
    %c0_19 = arith.constant 0 : index
    %15 = vector.load %arg4[%c0_18, %c1, %c0_19] : memref<2x8x128xf32, #tpu.memory_space<vmem>>, vector<1x1x32xf32>
    %16 = vector.shape_cast %15 : vector<1x1x32xf32> to vector<1x32xf32>
    %c0_20 = arith.constant 0 : index
    %c2 = arith.constant 2 : index
    %c0_21 = arith.constant 0 : index
    %17 = vector.load %arg4[%c0_20, %c2, %c0_21] : memref<2x8x128xf32, #tpu.memory_space<vmem>>, vector<1x1x64xf32>
    %18 = vector.shape_cast %17 : vector<1x1x64xf32> to vector<1x64xf32>
    %c0_22 = arith.constant 0 : index
    %c3 = arith.constant 3 : index
    %c0_23 = arith.constant 0 : index
    %19 = vector.load %arg4[%c0_22, %c3, %c0_23] : memref<2x8x128xf32, #tpu.memory_space<vmem>>, vector<1x1x32xf32>
    %20 = vector.shape_cast %19 : vector<1x1x32xf32> to vector<1x32xf32>
    %c0_24 = arith.constant 0 : index
    %c4 = arith.constant 4 : index
    %c0_25 = arith.constant 0 : index
    %21 = vector.load %arg4[%c0_24, %c4, %c0_25] : memref<2x8x128xf32, #tpu.memory_space<vmem>>, vector<1x1x32xf32>
    %22 = vector.shape_cast %21 : vector<1x1x32xf32> to vector<1x32xf32>
    %c0_26 = arith.constant 0 : index
    %c5 = arith.constant 5 : index
    %c0_27 = arith.constant 0 : index
    %23 = vector.load %arg4[%c0_26, %c5, %c0_27] : memref<2x8x128xf32, #tpu.memory_space<vmem>>, vector<1x1x32xf32>
    %24 = vector.shape_cast %23 : vector<1x1x32xf32> to vector<1x32xf32>
    %c0_28 = arith.constant 0 : index
    %c6 = arith.constant 6 : index
    %c0_29 = arith.constant 0 : index
    %25 = vector.load %arg4[%c0_28, %c6, %c0_29] : memref<2x8x128xf32, #tpu.memory_space<vmem>>, vector<1x1x32xf32>
    %26 = vector.shape_cast %25 : vector<1x1x32xf32> to vector<1x32xf32>
    %c0_30 = arith.constant 0 : index
    %c7 = arith.constant 7 : index
    %c0_31 = arith.constant 0 : index
    %27 = vector.load %arg4[%c0_30, %c7, %c0_31] : memref<2x8x128xf32, #tpu.memory_space<vmem>>, vector<1x1x32xf32>
    %28 = vector.shape_cast %27 : vector<1x1x32xf32> to vector<1x32xf32>
    %cst = arith.constant dense<0.000000e+00> : vector<16x96xf32>
    %29 = tpu.matmul %4, %6, %cst {dimension_numbers = #tpu.dot_dimension_numbers<[1], [0], [0], [1], [0, 0, 1, 1], [], []>} : vector<16x32xf32>, vector<32x96xf32>, vector<16x96xf32> -> vector<16x96xf32>
    %30 = vector.broadcast %14 : vector<1x96xf32> to vector<16x96xf32>
    %31 = arith.addf %29, %30 : vector<16x96xf32>
    %32 = vector.shape_cast %31 : vector<16x96xf32> to vector<2x8x96xf32>
    %cst_32 = arith.constant 0.000000e+00 : f32
    %33 = vector.broadcast %cst_32 : f32 to vector<16x32xf32>
    %34 = vector.extract_strided_slice %32 {offsets = [0, 0, 0], sizes = [2, 8, 8], strides = [1, 1, 1]} : vector<2x8x96xf32> to vector<2x8x8xf32>
    %35 = vector.extract_strided_slice %32 {offsets = [0, 0, 32], sizes = [2, 8, 8], strides = [1, 1, 1]} : vector<2x8x96xf32> to vector<2x8x8xf32>
    %36 = vector.extract_strided_slice %32 {offsets = [0, 0, 64], sizes = [2, 8, 8], strides = [1, 1, 1]} : vector<2x8x96xf32> to vector<2x8x8xf32>
    "tpu.trace_start"() <{level = 10 : i32, message = "bqd,bkd->bqk"}> : () -> ()
    %cst_33 = arith.constant dense<0.000000e+00> : vector<2x8x8xf32>
    %37 = tpu.matmul %34, %35, %cst_33 {dimension_numbers = #tpu.dot_dimension_numbers<[2], [2], [1], [1], [0, 0, 0, 1, 1, 1], [0], [0]>} : vector<2x8x8xf32>, vector<2x8x8xf32>, vector<2x8x8xf32> -> vector<2x8x8xf32>
    "tpu.trace_stop"() : () -> ()
    %cst_34 = arith.constant 0.353553385 : f32
    %38 = vector.broadcast %cst_34 : f32 to vector<2x8x8xf32>
    %39 = arith.mulf %37, %38 : vector<2x8x8xf32>
    %40 = arith.addf %39, %2 : vector<2x8x8xf32>
    %cst_35 = arith.constant dense<0xFF800000> : vector<2x8xf32>
    %41 = vector.multi_reduction <maximumf>, %40, %cst_35 [2] : vector<2x8x8xf32> to vector<2x8xf32>
    %42 = vector.shape_cast %41 : vector<2x8xf32> to vector<2x8x1xf32>
    %43 = vector.broadcast %42 : vector<2x8x1xf32> to vector<2x8x8xf32>
    %44 = arith.subf %40, %43 : vector<2x8x8xf32>
    %45 = math.exp %44 : vector<2x8x8xf32>
    %cst_36 = arith.constant dense<0.000000e+00> : vector<2x8xf32>
    %46 = vector.multi_reduction <add>, %45, %cst_36 [2] : vector<2x8x8xf32> to vector<2x8xf32>
    %47 = vector.shape_cast %46 : vector<2x8xf32> to vector<2x8x1xf32>
    %48 = tpu.reciprocal %47 {approx = true} : vector<2x8x1xf32> -> vector<2x8x1xf32>
    %49 = vector.broadcast %48 : vector<2x8x1xf32> to vector<2x8x8xf32>
    %50 = arith.mulf %45, %49 : vector<2x8x8xf32>
    "tpu.trace_start"() <{level = 10 : i32, message = "bqk,bkd->bqd"}> : () -> ()
    %cst_37 = arith.constant dense<0.000000e+00> : vector<2x8x8xf32>
    %51 = tpu.matmul %50, %36, %cst_37 {dimension_numbers = #tpu.dot_dimension_numbers<[2], [1], [1], [2], [0, 0, 0, 1, 1, 2], [0], [0]>} : vector<2x8x8xf32>, vector<2x8x8xf32>, vector<2x8x8xf32> -> vector<2x8x8xf32>
    "tpu.trace_stop"() : () -> ()
    %52 = vector.shape_cast %51 : vector<2x8x8xf32> to vector<16x8xf32>
    %53 = vector.extract_strided_slice %8 {offsets = [0, 0], sizes = [8, 32], strides = [1, 1]} : vector<32x32xf32> to vector<8x32xf32>
    %cst_38 = arith.constant dense<0.000000e+00> : vector<16x32xf32>
    %54 = tpu.matmul %52, %53, %cst_38 {dimension_numbers = #tpu.dot_dimension_numbers<[1], [0], [0], [1], [0, 0, 1, 1], [], []>} : vector<16x8xf32>, vector<8x32xf32>, vector<16x32xf32> -> vector<16x32xf32>
    %55 = arith.addf %33, %54 : vector<16x32xf32>
    %56 = vector.extract_strided_slice %32 {offsets = [0, 0, 8], sizes = [2, 8, 8], strides = [1, 1, 1]} : vector<2x8x96xf32> to vector<2x8x8xf32>
    %57 = vector.extract_strided_slice %32 {offsets = [0, 0, 40], sizes = [2, 8, 8], strides = [1, 1, 1]} : vector<2x8x96xf32> to vector<2x8x8xf32>
    %58 = vector.extract_strided_slice %32 {offsets = [0, 0, 72], sizes = [2, 8, 8], strides = [1, 1, 1]} : vector<2x8x96xf32> to vector<2x8x8xf32>
    "tpu.trace_start"() <{level = 10 : i32, message = "bqd,bkd->bqk"}> : () -> ()
    %cst_39 = arith.constant dense<0.000000e+00> : vector<2x8x8xf32>
    %59 = tpu.matmul %56, %57, %cst_39 {dimension_numbers = #tpu.dot_dimension_numbers<[2], [2], [1], [1], [0, 0, 0, 1, 1, 1], [0], [0]>} : vector<2x8x8xf32>, vector<2x8x8xf32>, vector<2x8x8xf32> -> vector<2x8x8xf32>
    "tpu.trace_stop"() : () -> ()
    %cst_40 = arith.constant 0.353553385 : f32
    %60 = vector.broadcast %cst_40 : f32 to vector<2x8x8xf32>
    %61 = arith.mulf %59, %60 : vector<2x8x8xf32>
    %62 = arith.addf %61, %2 : vector<2x8x8xf32>
    %cst_41 = arith.constant dense<0xFF800000> : vector<2x8xf32>
    %63 = vector.multi_reduction <maximumf>, %62, %cst_41 [2] : vector<2x8x8xf32> to vector<2x8xf32>
    %64 = vector.shape_cast %63 : vector<2x8xf32> to vector<2x8x1xf32>
    %65 = vector.broadcast %64 : vector<2x8x1xf32> to vector<2x8x8xf32>
    %66 = arith.subf %62, %65 : vector<2x8x8xf32>
    %67 = math.exp %66 : vector<2x8x8xf32>
    %cst_42 = arith.constant dense<0.000000e+00> : vector<2x8xf32>
    %68 = vector.multi_reduction <add>, %67, %cst_42 [2] : vector<2x8x8xf32> to vector<2x8xf32>
    %69 = vector.shape_cast %68 : vector<2x8xf32> to vector<2x8x1xf32>
    %70 = tpu.reciprocal %69 {approx = true} : vector<2x8x1xf32> -> vector<2x8x1xf32>
    %71 = vector.broadcast %70 : vector<2x8x1xf32> to vector<2x8x8xf32>
    %72 = arith.mulf %67, %71 : vector<2x8x8xf32>
    "tpu.trace_start"() <{level = 10 : i32, message = "bqk,bkd->bqd"}> : () -> ()
    %cst_43 = arith.constant dense<0.000000e+00> : vector<2x8x8xf32>
    %73 = tpu.matmul %72, %58, %cst_43 {dimension_numbers = #tpu.dot_dimension_numbers<[2], [1], [1], [2], [0, 0, 0, 1, 1, 2], [0], [0]>} : vector<2x8x8xf32>, vector<2x8x8xf32>, vector<2x8x8xf32> -> vector<2x8x8xf32>
    "tpu.trace_stop"() : () -> ()
    %74 = vector.shape_cast %73 : vector<2x8x8xf32> to vector<16x8xf32>
    %75 = vector.extract_strided_slice %8 {offsets = [8, 0], sizes = [8, 32], strides = [1, 1]} : vector<32x32xf32> to vector<8x32xf32>
    %cst_44 = arith.constant dense<0.000000e+00> : vector<16x32xf32>
    %76 = tpu.matmul %74, %75, %cst_44 {dimension_numbers = #tpu.dot_dimension_numbers<[1], [0], [0], [1], [0, 0, 1, 1], [], []>} : vector<16x8xf32>, vector<8x32xf32>, vector<16x32xf32> -> vector<16x32xf32>
    %77 = arith.addf %55, %76 : vector<16x32xf32>
    %78 = vector.extract_strided_slice %32 {offsets = [0, 0, 16], sizes = [2, 8, 8], strides = [1, 1, 1]} : vector<2x8x96xf32> to vector<2x8x8xf32>
    %79 = vector.extract_strided_slice %32 {offsets = [0, 0, 48], sizes = [2, 8, 8], strides = [1, 1, 1]} : vector<2x8x96xf32> to vector<2x8x8xf32>
    %80 = vector.extract_strided_slice %32 {offsets = [0, 0, 80], sizes = [2, 8, 8], strides = [1, 1, 1]} : vector<2x8x96xf32> to vector<2x8x8xf32>
    "tpu.trace_start"() <{level = 10 : i32, message = "bqd,bkd->bqk"}> : () -> ()
    %cst_45 = arith.constant dense<0.000000e+00> : vector<2x8x8xf32>
    %81 = tpu.matmul %78, %79, %cst_45 {dimension_numbers = #tpu.dot_dimension_numbers<[2], [2], [1], [1], [0, 0, 0, 1, 1, 1], [0], [0]>} : vector<2x8x8xf32>, vector<2x8x8xf32>, vector<2x8x8xf32> -> vector<2x8x8xf32>
    "tpu.trace_stop"() : () -> ()
    %cst_46 = arith.constant 0.353553385 : f32
    %82 = vector.broadcast %cst_46 : f32 to vector<2x8x8xf32>
    %83 = arith.mulf %81, %82 : vector<2x8x8xf32>
    %84 = arith.addf %83, %2 : vector<2x8x8xf32>
    %cst_47 = arith.constant dense<0xFF800000> : vector<2x8xf32>
    %85 = vector.multi_reduction <maximumf>, %84, %cst_47 [2] : vector<2x8x8xf32> to vector<2x8xf32>
    %86 = vector.shape_cast %85 : vector<2x8xf32> to vector<2x8x1xf32>
    %87 = vector.broadcast %86 : vector<2x8x1xf32> to vector<2x8x8xf32>
    %88 = arith.subf %84, %87 : vector<2x8x8xf32>
    %89 = math.exp %88 : vector<2x8x8xf32>
    %cst_48 = arith.constant dense<0.000000e+00> : vector<2x8xf32>
    %90 = vector.multi_reduction <add>, %89, %cst_48 [2] : vector<2x8x8xf32> to vector<2x8xf32>
    %91 = vector.shape_cast %90 : vector<2x8xf32> to vector<2x8x1xf32>
    %92 = tpu.reciprocal %91 {approx = true} : vector<2x8x1xf32> -> vector<2x8x1xf32>
    %93 = vector.broadcast %92 : vector<2x8x1xf32> to vector<2x8x8xf32>
    %94 = arith.mulf %89, %93 : vector<2x8x8xf32>
    "tpu.trace_start"() <{level = 10 : i32, message = "bqk,bkd->bqd"}> : () -> ()
    %cst_49 = arith.constant dense<0.000000e+00> : vector<2x8x8xf32>
    %95 = tpu.matmul %94, %80, %cst_49 {dimension_numbers = #tpu.dot_dimension_numbers<[2], [1], [1], [2], [0, 0, 0, 1, 1, 2], [0], [0]>} : vector<2x8x8xf32>, vector<2x8x8xf32>, vector<2x8x8xf32> -> vector<2x8x8xf32>
    "tpu.trace_stop"() : () -> ()
    %96 = vector.shape_cast %95 : vector<2x8x8xf32> to vector<16x8xf32>
    %97 = vector.extract_strided_slice %8 {offsets = [16, 0], sizes = [8, 32], strides = [1, 1]} : vector<32x32xf32> to vector<8x32xf32>
    %cst_50 = arith.constant dense<0.000000e+00> : vector<16x32xf32>
    %98 = tpu.matmul %96, %97, %cst_50 {dimension_numbers = #tpu.dot_dimension_numbers<[1], [0], [0], [1], [0, 0, 1, 1], [], []>} : vector<16x8xf32>, vector<8x32xf32>, vector<16x32xf32> -> vector<16x32xf32>
    %99 = arith.addf %77, %98 : vector<16x32xf32>
    %100 = vector.extract_strided_slice %32 {offsets = [0, 0, 24], sizes = [2, 8, 8], strides = [1, 1, 1]} : vector<2x8x96xf32> to vector<2x8x8xf32>
    %101 = vector.extract_strided_slice %32 {offsets = [0, 0, 56], sizes = [2, 8, 8], strides = [1, 1, 1]} : vector<2x8x96xf32> to vector<2x8x8xf32>
    %102 = vector.extract_strided_slice %32 {offsets = [0, 0, 88], sizes = [2, 8, 8], strides = [1, 1, 1]} : vector<2x8x96xf32> to vector<2x8x8xf32>
    "tpu.trace_start"() <{level = 10 : i32, message = "bqd,bkd->bqk"}> : () -> ()
    %cst_51 = arith.constant dense<0.000000e+00> : vector<2x8x8xf32>
    %103 = tpu.matmul %100, %101, %cst_51 {dimension_numbers = #tpu.dot_dimension_numbers<[2], [2], [1], [1], [0, 0, 0, 1, 1, 1], [0], [0]>} : vector<2x8x8xf32>, vector<2x8x8xf32>, vector<2x8x8xf32> -> vector<2x8x8xf32>
    "tpu.trace_stop"() : () -> ()
    %cst_52 = arith.constant 0.353553385 : f32
    %104 = vector.broadcast %cst_52 : f32 to vector<2x8x8xf32>
    %105 = arith.mulf %103, %104 : vector<2x8x8xf32>
    %106 = arith.addf %105, %2 : vector<2x8x8xf32>
    %cst_53 = arith.constant dense<0xFF800000> : vector<2x8xf32>
    %107 = vector.multi_reduction <maximumf>, %106, %cst_53 [2] : vector<2x8x8xf32> to vector<2x8xf32>
    %108 = vector.shape_cast %107 : vector<2x8xf32> to vector<2x8x1xf32>
    %109 = vector.broadcast %108 : vector<2x8x1xf32> to vector<2x8x8xf32>
    %110 = arith.subf %106, %109 : vector<2x8x8xf32>
    %111 = math.exp %110 : vector<2x8x8xf32>
    %cst_54 = arith.constant dense<0.000000e+00> : vector<2x8xf32>
    %112 = vector.multi_reduction <add>, %111, %cst_54 [2] : vector<2x8x8xf32> to vector<2x8xf32>
    %113 = vector.shape_cast %112 : vector<2x8xf32> to vector<2x8x1xf32>
    %114 = tpu.reciprocal %113 {approx = true} : vector<2x8x1xf32> -> vector<2x8x1xf32>
    %115 = vector.broadcast %114 : vector<2x8x1xf32> to vector<2x8x8xf32>
    %116 = arith.mulf %111, %115 : vector<2x8x8xf32>
    "tpu.trace_start"() <{level = 10 : i32, message = "bqk,bkd->bqd"}> : () -> ()
    %cst_55 = arith.constant dense<0.000000e+00> : vector<2x8x8xf32>
    %117 = tpu.matmul %116, %102, %cst_55 {dimension_numbers = #tpu.dot_dimension_numbers<[2], [1], [1], [2], [0, 0, 0, 1, 1, 2], [0], [0]>} : vector<2x8x8xf32>, vector<2x8x8xf32>, vector<2x8x8xf32> -> vector<2x8x8xf32>
    "tpu.trace_stop"() : () -> ()
    %118 = vector.shape_cast %117 : vector<2x8x8xf32> to vector<16x8xf32>
    %119 = vector.extract_strided_slice %8 {offsets = [24, 0], sizes = [8, 32], strides = [1, 1]} : vector<32x32xf32> to vector<8x32xf32>
    %cst_56 = arith.constant dense<0.000000e+00> : vector<16x32xf32>
    %120 = tpu.matmul %118, %119, %cst_56 {dimension_numbers = #tpu.dot_dimension_numbers<[1], [0], [0], [1], [0, 0, 1, 1], [], []>} : vector<16x8xf32>, vector<8x32xf32>, vector<16x32xf32> -> vector<16x32xf32>
    %121 = arith.addf %99, %120 : vector<16x32xf32>
    %122 = vector.broadcast %16 : vector<1x32xf32> to vector<16x32xf32>
    %123 = arith.addf %121, %122 : vector<16x32xf32>
    %124 = arith.addf %4, %123 : vector<16x32xf32>
    %cst_57 = arith.constant dense<0.000000e+00> : vector<16xf32>
    %125 = vector.multi_reduction <add>, %124, %cst_57 [1] : vector<16x32xf32> to vector<16xf32>
    %126 = vector.shape_cast %125 : vector<16xf32> to vector<16x1xf32>
    %cst_58 = arith.constant 3.200000e+01 : f32
    %127 = vector.broadcast %cst_58 : f32 to vector<16x1xf32>
    %128 = arith.divf %126, %127 : vector<16x1xf32>
    %129 = vector.broadcast %128 : vector<16x1xf32> to vector<16x32xf32>
    %130 = arith.subf %124, %129 : vector<16x32xf32>
    %131 = arith.mulf %130, %130 : vector<16x32xf32>
    %cst_59 = arith.constant dense<0.000000e+00> : vector<16xf32>
    %132 = vector.multi_reduction <add>, %131, %cst_59 [1] : vector<16x32xf32> to vector<16xf32>
    %133 = vector.shape_cast %132 : vector<16xf32> to vector<16x1xf32>
    %cst_60 = arith.constant 3.200000e+01 : f32
    %134 = vector.broadcast %cst_60 : f32 to vector<16x1xf32>
    %135 = arith.divf %133, %134 : vector<16x1xf32>
    %136 = vector.broadcast %128 : vector<16x1xf32> to vector<16x32xf32>
    %137 = arith.subf %124, %136 : vector<16x32xf32>
    %cst_61 = arith.constant 9.99999974E-6 : f32
    %138 = vector.broadcast %cst_61 : f32 to vector<16x1xf32>
    %139 = arith.addf %135, %138 : vector<16x1xf32>
    %140 = math.rsqrt %139 : vector<16x1xf32>
    %141 = vector.broadcast %140 : vector<16x1xf32> to vector<16x32xf32>
    %142 = arith.mulf %137, %141 : vector<16x32xf32>
    %143 = vector.broadcast %22 : vector<1x32xf32> to vector<16x32xf32>
    %144 = arith.mulf %142, %143 : vector<16x32xf32>
    %145 = vector.broadcast %24 : vector<1x32xf32> to vector<16x32xf32>
    %146 = arith.addf %144, %145 : vector<16x32xf32>
    %cst_62 = arith.constant dense<0.000000e+00> : vector<16x64xf32>
    %147 = tpu.matmul %146, %10, %cst_62 {dimension_numbers = #tpu.dot_dimension_numbers<[1], [0], [0], [1], [0, 0, 1, 1], [], []>} : vector<16x32xf32>, vector<32x64xf32>, vector<16x64xf32> -> vector<16x64xf32>
    %148 = vector.broadcast %18 : vector<1x64xf32> to vector<16x64xf32>
    %149 = arith.addf %147, %148 : vector<16x64xf32>
    %cst_63 = arith.constant 0.000000e+00 : f32
    %150 = vector.broadcast %cst_63 : f32 to vector<16x64xf32>
    %151 = arith.maximumf %149, %150 : vector<16x64xf32>
    %cst_64 = arith.constant dense<0.000000e+00> : vector<16x32xf32>
    %152 = tpu.matmul %151, %12, %cst_64 {dimension_numbers = #tpu.dot_dimension_numbers<[1], [0], [0], [1], [0, 0, 1, 1], [], []>} : vector<16x64xf32>, vector<64x32xf32>, vector<16x32xf32> -> vector<16x32xf32>
    %153 = vector.broadcast %20 : vector<1x32xf32> to vector<16x32xf32>
    %154 = arith.addf %152, %153 : vector<16x32xf32>
    %155 = arith.addf %146, %154 : vector<16x32xf32>
    %cst_65 = arith.constant dense<0.000000e+00> : vector<16xf32>
    %156 = vector.multi_reduction <add>, %155, %cst_65 [1] : vector<16x32xf32> to vector<16xf32>
    %157 = vector.shape_cast %156 : vector<16xf32> to vector<16x1xf32>
    %cst_66 = arith.constant 3.200000e+01 : f32
    %158 = vector.broadcast %cst_66 : f32 to vector<16x1xf32>
    %159 = arith.divf %157, %158 : vector<16x1xf32>
    %160 = vector.broadcast %159 : vector<16x1xf32> to vector<16x32xf32>
    %161 = arith.subf %155, %160 : vector<16x32xf32>
    %162 = arith.mulf %161, %161 : vector<16x32xf32>
    %cst_67 = arith.constant dense<0.000000e+00> : vector<16xf32>
    %163 = vector.multi_reduction <add>, %162, %cst_67 [1] : vector<16x32xf32> to vector<16xf32>
    %164 = vector.shape_cast %163 : vector<16xf32> to vector<16x1xf32>
    %cst_68 = arith.constant 3.200000e+01 : f32
    %165 = vector.broadcast %cst_68 : f32 to vector<16x1xf32>
    %166 = arith.divf %164, %165 : vector<16x1xf32>
    %167 = vector.broadcast %159 : vector<16x1xf32> to vector<16x32xf32>
    %168 = arith.subf %155, %167 : vector<16x32xf32>
    %cst_69 = arith.constant 9.99999974E-6 : f32
    %169 = vector.broadcast %cst_69 : f32 to vector<16x1xf32>
    %170 = arith.addf %166, %169 : vector<16x1xf32>
    %171 = math.rsqrt %170 : vector<16x1xf32>
    %172 = vector.broadcast %171 : vector<16x1xf32> to vector<16x32xf32>
    %173 = arith.mulf %168, %172 : vector<16x32xf32>
    %174 = vector.broadcast %26 : vector<1x32xf32> to vector<16x32xf32>
    %175 = arith.mulf %173, %174 : vector<16x32xf32>
    %176 = vector.broadcast %28 : vector<1x32xf32> to vector<16x32xf32>
    %177 = arith.addf %175, %176 : vector<16x32xf32>
    %178 = vector.shape_cast %177 : vector<16x32xf32> to vector<2x8x32xf32>
    %c0_70 = arith.constant 0 : index
    %c0_71 = arith.constant 0 : index
    %c0_72 = arith.constant 0 : index
    %c0_73 = arith.constant 0 : index
    %179 = vector.load %arg5[%c0_70, %c0_71, %c0_72, %c0_73] : memref<2x2x8x32xf32, #tpu.memory_space<vmem>>, vector<2x1x8x32xf32>
    %180 = vector.shape_cast %179 : vector<2x1x8x32xf32> to vector<2x8x32xf32>
    %181 = vector.shape_cast %178 : vector<2x8x32xf32> to vector<2x1x8x32xf32>
    tpu.vector_store %arg5[%c0_70, %c0_71, %c0_72, %c0_73], %181 {strides = array<i32>} : memref<2x2x8x32xf32, #tpu.memory_space<vmem>>, vector<2x1x8x32xf32>,
    %c1_74 = arith.constant 1 : index
    %c0_75 = arith.constant 0 : index
    %c0_76 = arith.constant 0 : index
    %182 = vector.load %arg2[%c1_74, %c0_75, %c0_76] : memref<2x32x384xf32, #tpu.memory_space<vmem>>, vector<1x32x96xf32>
    %183 = vector.shape_cast %182 : vector<1x32x96xf32> to vector<32x96xf32>
    %c1_77 = arith.constant 1 : index
    %c0_78 = arith.constant 0 : index
    %c128_79 = arith.constant 128 : index
    %184 = vector.load %arg2[%c1_77, %c0_78, %c128_79] : memref<2x32x384xf32, #tpu.memory_space<vmem>>, vector<1x32x32xf32>
    %185 = vector.shape_cast %184 : vector<1x32x32xf32> to vector<32x32xf32>
    %c1_80 = arith.constant 1 : index
    %c0_81 = arith.constant 0 : index
    %c256_82 = arith.constant 256 : index
    %186 = vector.load %arg2[%c1_80, %c0_81, %c256_82] : memref<2x32x384xf32, #tpu.memory_space<vmem>>, vector<1x32x64xf32>
    %187 = vector.shape_cast %186 : vector<1x32x64xf32> to vector<32x64xf32>
    %c1_83 = arith.constant 1 : index
    %c0_84 = arith.constant 0 : index
    %c0_85 = arith.constant 0 : index
    %188 = vector.load %arg3[%c1_83, %c0_84, %c0_85] : memref<2x64x32xf32, #tpu.memory_space<vmem>>, vector<1x64x32xf32>
    %189 = vector.shape_cast %188 : vector<1x64x32xf32> to vector<64x32xf32>
    %c1_86 = arith.constant 1 : index
    %c0_87 = arith.constant 0 : index
    %c0_88 = arith.constant 0 : index
    %190 = vector.load %arg4[%c1_86, %c0_87, %c0_88] : memref<2x8x128xf32, #tpu.memory_space<vmem>>, vector<1x1x96xf32>
    %191 = vector.shape_cast %190 : vector<1x1x96xf32> to vector<1x96xf32>
    %c1_89 = arith.constant 1 : index
    %c1_90 = arith.constant 1 : index
    %c0_91 = arith.constant 0 : index
    %192 = vector.load %arg4[%c1_89, %c1_90, %c0_91] : memref<2x8x128xf32, #tpu.memory_space<vmem>>, vector<1x1x32xf32>
    %193 = vector.shape_cast %192 : vector<1x1x32xf32> to vector<1x32xf32>
    %c1_92 = arith.constant 1 : index
    %c2_93 = arith.constant 2 : index
    %c0_94 = arith.constant 0 : index
    %194 = vector.load %arg4[%c1_92, %c2_93, %c0_94] : memref<2x8x128xf32, #tpu.memory_space<vmem>>, vector<1x1x64xf32>
    %195 = vector.shape_cast %194 : vector<1x1x64xf32> to vector<1x64xf32>
    %c1_95 = arith.constant 1 : index
    %c3_96 = arith.constant 3 : index
    %c0_97 = arith.constant 0 : index
    %196 = vector.load %arg4[%c1_95, %c3_96, %c0_97] : memref<2x8x128xf32, #tpu.memory_space<vmem>>, vector<1x1x32xf32>
    %197 = vector.shape_cast %196 : vector<1x1x32xf32> to vector<1x32xf32>
    %c1_98 = arith.constant 1 : index
    %c4_99 = arith.constant 4 : index
    %c0_100 = arith.constant 0 : index
    %198 = vector.load %arg4[%c1_98, %c4_99, %c0_100] : memref<2x8x128xf32, #tpu.memory_space<vmem>>, vector<1x1x32xf32>
    %199 = vector.shape_cast %198 : vector<1x1x32xf32> to vector<1x32xf32>
    %c1_101 = arith.constant 1 : index
    %c5_102 = arith.constant 5 : index
    %c0_103 = arith.constant 0 : index
    %200 = vector.load %arg4[%c1_101, %c5_102, %c0_103] : memref<2x8x128xf32, #tpu.memory_space<vmem>>, vector<1x1x32xf32>
    %201 = vector.shape_cast %200 : vector<1x1x32xf32> to vector<1x32xf32>
    %c1_104 = arith.constant 1 : index
    %c6_105 = arith.constant 6 : index
    %c0_106 = arith.constant 0 : index
    %202 = vector.load %arg4[%c1_104, %c6_105, %c0_106] : memref<2x8x128xf32, #tpu.memory_space<vmem>>, vector<1x1x32xf32>
    %203 = vector.shape_cast %202 : vector<1x1x32xf32> to vector<1x32xf32>
    %c1_107 = arith.constant 1 : index
    %c7_108 = arith.constant 7 : index
    %c0_109 = arith.constant 0 : index
    %204 = vector.load %arg4[%c1_107, %c7_108, %c0_109] : memref<2x8x128xf32, #tpu.memory_space<vmem>>, vector<1x1x32xf32>
    %205 = vector.shape_cast %204 : vector<1x1x32xf32> to vector<1x32xf32>
    %cst_110 = arith.constant dense<0.000000e+00> : vector<16x96xf32>
    %206 = tpu.matmul %177, %183, %cst_110 {dimension_numbers = #tpu.dot_dimension_numbers<[1], [0], [0], [1], [0, 0, 1, 1], [], []>} : vector<16x32xf32>, vector<32x96xf32>, vector<16x96xf32> -> vector<16x96xf32>
    %207 = vector.broadcast %191 : vector<1x96xf32> to vector<16x96xf32>
    %208 = arith.addf %206, %207 : vector<16x96xf32>
    %209 = vector.shape_cast %208 : vector<16x96xf32> to vector<2x8x96xf32>
    %cst_111 = arith.constant 0.000000e+00 : f32
    %210 = vector.broadcast %cst_111 : f32 to vector<16x32xf32>
    %211 = vector.extract_strided_slice %209 {offsets = [0, 0, 0], sizes = [2, 8, 8], strides = [1, 1, 1]} : vector<2x8x96xf32> to vector<2x8x8xf32>
    %212 = vector.extract_strided_slice %209 {offsets = [0, 0, 32], sizes = [2, 8, 8], strides = [1, 1, 1]} : vector<2x8x96xf32> to vector<2x8x8xf32>
    %213 = vector.extract_strided_slice %209 {offsets = [0, 0, 64], sizes = [2, 8, 8], strides = [1, 1, 1]} : vector<2x8x96xf32> to vector<2x8x8xf32>
    "tpu.trace_start"() <{level = 10 : i32, message = "bqd,bkd->bqk"}> : () -> ()
    %cst_112 = arith.constant dense<0.000000e+00> : vector<2x8x8xf32>
    %214 = tpu.matmul %211, %212, %cst_112 {dimension_numbers = #tpu.dot_dimension_numbers<[2], [2], [1], [1], [0, 0, 0, 1, 1, 1], [0], [0]>} : vector<2x8x8xf32>, vector<2x8x8xf32>, vector<2x8x8xf32> -> vector<2x8x8xf32>
    "tpu.trace_stop"() : () -> ()
    %cst_113 = arith.constant 0.353553385 : f32
    %215 = vector.broadcast %cst_113 : f32 to vector<2x8x8xf32>
    %216 = arith.mulf %214, %215 : vector<2x8x8xf32>
    %217 = arith.addf %216, %2 : vector<2x8x8xf32>
    %cst_114 = arith.constant dense<0xFF800000> : vector<2x8xf32>
    %218 = vector.multi_reduction <maximumf>, %217, %cst_114 [2] : vector<2x8x8xf32> to vector<2x8xf32>
    %219 = vector.shape_cast %218 : vector<2x8xf32> to vector<2x8x1xf32>
    %220 = vector.broadcast %219 : vector<2x8x1xf32> to vector<2x8x8xf32>
    %221 = arith.subf %217, %220 : vector<2x8x8xf32>
    %222 = math.exp %221 : vector<2x8x8xf32>
    %cst_115 = arith.constant dense<0.000000e+00> : vector<2x8xf32>
    %223 = vector.multi_reduction <add>, %222, %cst_115 [2] : vector<2x8x8xf32> to vector<2x8xf32>
    %224 = vector.shape_cast %223 : vector<2x8xf32> to vector<2x8x1xf32>
    %225 = tpu.reciprocal %224 {approx = true} : vector<2x8x1xf32> -> vector<2x8x1xf32>
    %226 = vector.broadcast %225 : vector<2x8x1xf32> to vector<2x8x8xf32>
    %227 = arith.mulf %222, %226 : vector<2x8x8xf32>
    "tpu.trace_start"() <{level = 10 : i32, message = "bqk,bkd->bqd"}> : () -> ()
    %cst_116 = arith.constant dense<0.000000e+00> : vector<2x8x8xf32>
    %228 = tpu.matmul %227, %213, %cst_116 {dimension_numbers = #tpu.dot_dimension_numbers<[2], [1], [1], [2], [0, 0, 0, 1, 1, 2], [0], [0]>} : vector<2x8x8xf32>, vector<2x8x8xf32>, vector<2x8x8xf32> -> vector<2x8x8xf32>
    "tpu.trace_stop"() : () -> ()
    %229 = vector.shape_cast %228 : vector<2x8x8xf32> to vector<16x8xf32>
    %230 = vector.extract_strided_slice %185 {offsets = [0, 0], sizes = [8, 32], strides = [1, 1]} : vector<32x32xf32> to vector<8x32xf32>
    %cst_117 = arith.constant dense<0.000000e+00> : vector<16x32xf32>
    %231 = tpu.matmul %229, %230, %cst_117 {dimension_numbers = #tpu.dot_dimension_numbers<[1], [0], [0], [1], [0, 0, 1, 1], [], []>} : vector<16x8xf32>, vector<8x32xf32>, vector<16x32xf32> -> vector<16x32xf32>
    %232 = arith.addf %210, %231 : vector<16x32xf32>
    %233 = vector.extract_strided_slice %209 {offsets = [0, 0, 8], sizes = [2, 8, 8], strides = [1, 1, 1]} : vector<2x8x96xf32> to vector<2x8x8xf32>
    %234 = vector.extract_strided_slice %209 {offsets = [0, 0, 40], sizes = [2, 8, 8], strides = [1, 1, 1]} : vector<2x8x96xf32> to vector<2x8x8xf32>
    %235 = vector.extract_strided_slice %209 {offsets = [0, 0, 72], sizes = [2, 8, 8], strides = [1, 1, 1]} : vector<2x8x96xf32> to vector<2x8x8xf32>
    "tpu.trace_start"() <{level = 10 : i32, message = "bqd,bkd->bqk"}> : () -> ()
    %cst_118 = arith.constant dense<0.000000e+00> : vector<2x8x8xf32>
    %236 = tpu.matmul %233, %234, %cst_118 {dimension_numbers = #tpu.dot_dimension_numbers<[2], [2], [1], [1], [0, 0, 0, 1, 1, 1], [0], [0]>} : vector<2x8x8xf32>, vector<2x8x8xf32>, vector<2x8x8xf32> -> vector<2x8x8xf32>
    "tpu.trace_stop"() : () -> ()
    %cst_119 = arith.constant 0.353553385 : f32
    %237 = vector.broadcast %cst_119 : f32 to vector<2x8x8xf32>
    %238 = arith.mulf %236, %237 : vector<2x8x8xf32>
    %239 = arith.addf %238, %2 : vector<2x8x8xf32>
    %cst_120 = arith.constant dense<0xFF800000> : vector<2x8xf32>
    %240 = vector.multi_reduction <maximumf>, %239, %cst_120 [2] : vector<2x8x8xf32> to vector<2x8xf32>
    %241 = vector.shape_cast %240 : vector<2x8xf32> to vector<2x8x1xf32>
    %242 = vector.broadcast %241 : vector<2x8x1xf32> to vector<2x8x8xf32>
    %243 = arith.subf %239, %242 : vector<2x8x8xf32>
    %244 = math.exp %243 : vector<2x8x8xf32>
    %cst_121 = arith.constant dense<0.000000e+00> : vector<2x8xf32>
    %245 = vector.multi_reduction <add>, %244, %cst_121 [2] : vector<2x8x8xf32> to vector<2x8xf32>
    %246 = vector.shape_cast %245 : vector<2x8xf32> to vector<2x8x1xf32>
    %247 = tpu.reciprocal %246 {approx = true} : vector<2x8x1xf32> -> vector<2x8x1xf32>
    %248 = vector.broadcast %247 : vector<2x8x1xf32> to vector<2x8x8xf32>
    %249 = arith.mulf %244, %248 : vector<2x8x8xf32>
    "tpu.trace_start"() <{level = 10 : i32, message = "bqk,bkd->bqd"}> : () -> ()
    %cst_122 = arith.constant dense<0.000000e+00> : vector<2x8x8xf32>
    %250 = tpu.matmul %249, %235, %cst_122 {dimension_numbers = #tpu.dot_dimension_numbers<[2], [1], [1], [2], [0, 0, 0, 1, 1, 2], [0], [0]>} : vector<2x8x8xf32>, vector<2x8x8xf32>, vector<2x8x8xf32> -> vector<2x8x8xf32>
    "tpu.trace_stop"() : () -> ()
    %251 = vector.shape_cast %250 : vector<2x8x8xf32> to vector<16x8xf32>
    %252 = vector.extract_strided_slice %185 {offsets = [8, 0], sizes = [8, 32], strides = [1, 1]} : vector<32x32xf32> to vector<8x32xf32>
    %cst_123 = arith.constant dense<0.000000e+00> : vector<16x32xf32>
    %253 = tpu.matmul %251, %252, %cst_123 {dimension_numbers = #tpu.dot_dimension_numbers<[1], [0], [0], [1], [0, 0, 1, 1], [], []>} : vector<16x8xf32>, vector<8x32xf32>, vector<16x32xf32> -> vector<16x32xf32>
    %254 = arith.addf %232, %253 : vector<16x32xf32>
    %255 = vector.extract_strided_slice %209 {offsets = [0, 0, 16], sizes = [2, 8, 8], strides = [1, 1, 1]} : vector<2x8x96xf32> to vector<2x8x8xf32>
    %256 = vector.extract_strided_slice %209 {offsets = [0, 0, 48], sizes = [2, 8, 8], strides = [1, 1, 1]} : vector<2x8x96xf32> to vector<2x8x8xf32>
    %257 = vector.extract_strided_slice %209 {offsets = [0, 0, 80], sizes = [2, 8, 8], strides = [1, 1, 1]} : vector<2x8x96xf32> to vector<2x8x8xf32>
    "tpu.trace_start"() <{level = 10 : i32, message = "bqd,bkd->bqk"}> : () -> ()
    %cst_124 = arith.constant dense<0.000000e+00> : vector<2x8x8xf32>
    %258 = tpu.matmul %255, %256, %cst_124 {dimension_numbers = #tpu.dot_dimension_numbers<[2], [2], [1], [1], [0, 0, 0, 1, 1, 1], [0], [0]>} : vector<2x8x8xf32>, vector<2x8x8xf32>, vector<2x8x8xf32> -> vector<2x8x8xf32>
    "tpu.trace_stop"() : () -> ()
    %cst_125 = arith.constant 0.353553385 : f32
    %259 = vector.broadcast %cst_125 : f32 to vector<2x8x8xf32>
    %260 = arith.mulf %258, %259 : vector<2x8x8xf32>
    %261 = arith.addf %260, %2 : vector<2x8x8xf32>
    %cst_126 = arith.constant dense<0xFF800000> : vector<2x8xf32>
    %262 = vector.multi_reduction <maximumf>, %261, %cst_126 [2] : vector<2x8x8xf32> to vector<2x8xf32>
    %263 = vector.shape_cast %262 : vector<2x8xf32> to vector<2x8x1xf32>
    %264 = vector.broadcast %263 : vector<2x8x1xf32> to vector<2x8x8xf32>
    %265 = arith.subf %261, %264 : vector<2x8x8xf32>
    %266 = math.exp %265 : vector<2x8x8xf32>
    %cst_127 = arith.constant dense<0.000000e+00> : vector<2x8xf32>
    %267 = vector.multi_reduction <add>, %266, %cst_127 [2] : vector<2x8x8xf32> to vector<2x8xf32>
    %268 = vector.shape_cast %267 : vector<2x8xf32> to vector<2x8x1xf32>
    %269 = tpu.reciprocal %268 {approx = true} : vector<2x8x1xf32> -> vector<2x8x1xf32>
    %270 = vector.broadcast %269 : vector<2x8x1xf32> to vector<2x8x8xf32>
    %271 = arith.mulf %266, %270 : vector<2x8x8xf32>
    "tpu.trace_start"() <{level = 10 : i32, message = "bqk,bkd->bqd"}> : () -> ()
    %cst_128 = arith.constant dense<0.000000e+00> : vector<2x8x8xf32>
    %272 = tpu.matmul %271, %257, %cst_128 {dimension_numbers = #tpu.dot_dimension_numbers<[2], [1], [1], [2], [0, 0, 0, 1, 1, 2], [0], [0]>} : vector<2x8x8xf32>, vector<2x8x8xf32>, vector<2x8x8xf32> -> vector<2x8x8xf32>
    "tpu.trace_stop"() : () -> ()
    %273 = vector.shape_cast %272 : vector<2x8x8xf32> to vector<16x8xf32>
    %274 = vector.extract_strided_slice %185 {offsets = [16, 0], sizes = [8, 32], strides = [1, 1]} : vector<32x32xf32> to vector<8x32xf32>
    %cst_129 = arith.constant dense<0.000000e+00> : vector<16x32xf32>
    %275 = tpu.matmul %273, %274, %cst_129 {dimension_numbers = #tpu.dot_dimension_numbers<[1], [0], [0], [1], [0, 0, 1, 1], [], []>} : vector<16x8xf32>, vector<8x32xf32>, vector<16x32xf32> -> vector<16x32xf32>
    %276 = arith.addf %254, %275 : vector<16x32xf32>
    %277 = vector.extract_strided_slice %209 {offsets = [0, 0, 24], sizes = [2, 8, 8], strides = [1, 1, 1]} : vector<2x8x96xf32> to vector<2x8x8xf32>
    %278 = vector.extract_strided_slice %209 {offsets = [0, 0, 56], sizes = [2, 8, 8], strides = [1, 1, 1]} : vector<2x8x96xf32> to vector<2x8x8xf32>
    %279 = vector.extract_strided_slice %209 {offsets = [0, 0, 88], sizes = [2, 8, 8], strides = [1, 1, 1]} : vector<2x8x96xf32> to vector<2x8x8xf32>
    "tpu.trace_start"() <{level = 10 : i32, message = "bqd,bkd->bqk"}> : () -> ()
    %cst_130 = arith.constant dense<0.000000e+00> : vector<2x8x8xf32>
    %280 = tpu.matmul %277, %278, %cst_130 {dimension_numbers = #tpu.dot_dimension_numbers<[2], [2], [1], [1], [0, 0, 0, 1, 1, 1], [0], [0]>} : vector<2x8x8xf32>, vector<2x8x8xf32>, vector<2x8x8xf32> -> vector<2x8x8xf32>
    "tpu.trace_stop"() : () -> ()
    %cst_131 = arith.constant 0.353553385 : f32
    %281 = vector.broadcast %cst_131 : f32 to vector<2x8x8xf32>
    %282 = arith.mulf %280, %281 : vector<2x8x8xf32>
    %283 = arith.addf %282, %2 : vector<2x8x8xf32>
    %cst_132 = arith.constant dense<0xFF800000> : vector<2x8xf32>
    %284 = vector.multi_reduction <maximumf>, %283, %cst_132 [2] : vector<2x8x8xf32> to vector<2x8xf32>
    %285 = vector.shape_cast %284 : vector<2x8xf32> to vector<2x8x1xf32>
    %286 = vector.broadcast %285 : vector<2x8x1xf32> to vector<2x8x8xf32>
    %287 = arith.subf %283, %286 : vector<2x8x8xf32>
    %288 = math.exp %287 : vector<2x8x8xf32>
    %cst_133 = arith.constant dense<0.000000e+00> : vector<2x8xf32>
    %289 = vector.multi_reduction <add>, %288, %cst_133 [2] : vector<2x8x8xf32> to vector<2x8xf32>
    %290 = vector.shape_cast %289 : vector<2x8xf32> to vector<2x8x1xf32>
    %291 = tpu.reciprocal %290 {approx = true} : vector<2x8x1xf32> -> vector<2x8x1xf32>
    %292 = vector.broadcast %291 : vector<2x8x1xf32> to vector<2x8x8xf32>
    %293 = arith.mulf %288, %292 : vector<2x8x8xf32>
    "tpu.trace_start"() <{level = 10 : i32, message = "bqk,bkd->bqd"}> : () -> ()
    %cst_134 = arith.constant dense<0.000000e+00> : vector<2x8x8xf32>
    %294 = tpu.matmul %293, %279, %cst_134 {dimension_numbers = #tpu.dot_dimension_numbers<[2], [1], [1], [2], [0, 0, 0, 1, 1, 2], [0], [0]>} : vector<2x8x8xf32>, vector<2x8x8xf32>, vector<2x8x8xf32> -> vector<2x8x8xf32>
    "tpu.trace_stop"() : () -> ()
    %295 = vector.shape_cast %294 : vector<2x8x8xf32> to vector<16x8xf32>
    %296 = vector.extract_strided_slice %185 {offsets = [24, 0], sizes = [8, 32], strides = [1, 1]} : vector<32x32xf32> to vector<8x32xf32>
    %cst_135 = arith.constant dense<0.000000e+00> : vector<16x32xf32>
    %297 = tpu.matmul %295, %296, %cst_135 {dimension_numbers = #tpu.dot_dimension_numbers<[1], [0], [0], [1], [0, 0, 1, 1], [], []>} : vector<16x8xf32>, vector<8x32xf32>, vector<16x32xf32> -> vector<16x32xf32>
    %298 = arith.addf %276, %297 : vector<16x32xf32>
    %299 = vector.broadcast %193 : vector<1x32xf32> to vector<16x32xf32>
    %300 = arith.addf %298, %299 : vector<16x32xf32>
    %301 = arith.addf %177, %300 : vector<16x32xf32>
    %cst_136 = arith.constant dense<0.000000e+00> : vector<16xf32>
    %302 = vector.multi_reduction <add>, %301, %cst_136 [1] : vector<16x32xf32> to vector<16xf32>
    %303 = vector.shape_cast %302 : vector<16xf32> to vector<16x1xf32>
    %cst_137 = arith.constant 3.200000e+01 : f32
    %304 = vector.broadcast %cst_137 : f32 to vector<16x1xf32>
    %305 = arith.divf %303, %304 : vector<16x1xf32>
    %306 = vector.broadcast %305 : vector<16x1xf32> to vector<16x32xf32>
    %307 = arith.subf %301, %306 : vector<16x32xf32>
    %308 = arith.mulf %307, %307 : vector<16x32xf32>
    %cst_138 = arith.constant dense<0.000000e+00> : vector<16xf32>
    %309 = vector.multi_reduction <add>, %308, %cst_138 [1] : vector<16x32xf32> to vector<16xf32>
    %310 = vector.shape_cast %309 : vector<16xf32> to vector<16x1xf32>
    %cst_139 = arith.constant 3.200000e+01 : f32
    %311 = vector.broadcast %cst_139 : f32 to vector<16x1xf32>
    %312 = arith.divf %310, %311 : vector<16x1xf32>
    %313 = vector.broadcast %305 : vector<16x1xf32> to vector<16x32xf32>
    %314 = arith.subf %301, %313 : vector<16x32xf32>
    %cst_140 = arith.constant 9.99999974E-6 : f32
    %315 = vector.broadcast %cst_140 : f32 to vector<16x1xf32>
    %316 = arith.addf %312, %315 : vector<16x1xf32>
    %317 = math.rsqrt %316 : vector<16x1xf32>
    %318 = vector.broadcast %317 : vector<16x1xf32> to vector<16x32xf32>
    %319 = arith.mulf %314, %318 : vector<16x32xf32>
    %320 = vector.broadcast %199 : vector<1x32xf32> to vector<16x32xf32>
    %321 = arith.mulf %319, %320 : vector<16x32xf32>
    %322 = vector.broadcast %201 : vector<1x32xf32> to vector<16x32xf32>
    %323 = arith.addf %321, %322 : vector<16x32xf32>
    %cst_141 = arith.constant dense<0.000000e+00> : vector<16x64xf32>
    %324 = tpu.matmul %323, %187, %cst_141 {dimension_numbers = #tpu.dot_dimension_numbers<[1], [0], [0], [1], [0, 0, 1, 1], [], []>} : vector<16x32xf32>, vector<32x64xf32>, vector<16x64xf32> -> vector<16x64xf32>
    %325 = vector.broadcast %195 : vector<1x64xf32> to vector<16x64xf32>
    %326 = arith.addf %324, %325 : vector<16x64xf32>
    %cst_142 = arith.constant 0.000000e+00 : f32
    %327 = vector.broadcast %cst_142 : f32 to vector<16x64xf32>
    %328 = arith.maximumf %326, %327 : vector<16x64xf32>
    %cst_143 = arith.constant dense<0.000000e+00> : vector<16x32xf32>
    %329 = tpu.matmul %328, %189, %cst_143 {dimension_numbers = #tpu.dot_dimension_numbers<[1], [0], [0], [1], [0, 0, 1, 1], [], []>} : vector<16x64xf32>, vector<64x32xf32>, vector<16x32xf32> -> vector<16x32xf32>
    %330 = vector.broadcast %197 : vector<1x32xf32> to vector<16x32xf32>
    %331 = arith.addf %329, %330 : vector<16x32xf32>
    %332 = arith.addf %323, %331 : vector<16x32xf32>
    %cst_144 = arith.constant dense<0.000000e+00> : vector<16xf32>
    %333 = vector.multi_reduction <add>, %332, %cst_144 [1] : vector<16x32xf32> to vector<16xf32>
    %334 = vector.shape_cast %333 : vector<16xf32> to vector<16x1xf32>
    %cst_145 = arith.constant 3.200000e+01 : f32
    %335 = vector.broadcast %cst_145 : f32 to vector<16x1xf32>
    %336 = arith.divf %334, %335 : vector<16x1xf32>
    %337 = vector.broadcast %336 : vector<16x1xf32> to vector<16x32xf32>
    %338 = arith.subf %332, %337 : vector<16x32xf32>
    %339 = arith.mulf %338, %338 : vector<16x32xf32>
    %cst_146 = arith.constant dense<0.000000e+00> : vector<16xf32>
    %340 = vector.multi_reduction <add>, %339, %cst_146 [1] : vector<16x32xf32> to vector<16xf32>
    %341 = vector.shape_cast %340 : vector<16xf32> to vector<16x1xf32>
    %cst_147 = arith.constant 3.200000e+01 : f32
    %342 = vector.broadcast %cst_147 : f32 to vector<16x1xf32>
    %343 = arith.divf %341, %342 : vector<16x1xf32>
    %344 = vector.broadcast %336 : vector<16x1xf32> to vector<16x32xf32>
    %345 = arith.subf %332, %344 : vector<16x32xf32>
    %cst_148 = arith.constant 9.99999974E-6 : f32
    %346 = vector.broadcast %cst_148 : f32 to vector<16x1xf32>
    %347 = arith.addf %343, %346 : vector<16x1xf32>
    %348 = math.rsqrt %347 : vector<16x1xf32>
    %349 = vector.broadcast %348 : vector<16x1xf32> to vector<16x32xf32>
    %350 = arith.mulf %345, %349 : vector<16x32xf32>
    %351 = vector.broadcast %203 : vector<1x32xf32> to vector<16x32xf32>
    %352 = arith.mulf %350, %351 : vector<16x32xf32>
    %353 = vector.broadcast %205 : vector<1x32xf32> to vector<16x32xf32>
    %354 = arith.addf %352, %353 : vector<16x32xf32>
    %355 = vector.shape_cast %354 : vector<16x32xf32> to vector<2x8x32xf32>
    %c0_149 = arith.constant 0 : index
    %c1_150 = arith.constant 1 : index
    %c0_151 = arith.constant 0 : index
    %c0_152 = arith.constant 0 : index
    %356 = vector.load %arg5[%c0_149, %c1_150, %c0_151, %c0_152] : memref<2x2x8x32xf32, #tpu.memory_space<vmem>>, vector<2x1x8x32xf32>
    %357 = vector.shape_cast %356 : vector<2x1x8x32xf32> to vector<2x8x32xf32>
    %358 = vector.shape_cast %355 : vector<2x8x32xf32> to vector<2x1x8x32xf32>
    tpu.vector_store %arg5[%c0_149, %c1_150, %c0_151, %c0_152], %358 {strides = array<i32>} : memref<2x2x8x32xf32, #tpu.memory_space<vmem>>, vector<2x1x8x32xf32>,
    return
  }
}

</mosaic_0001>

<llo_original>
// kernel: tpu_custom_call.1
$region0: #{tpu_custom_call.1}
  #allocation0 [shape = 'u32[]', space=smem, size = 0x4, offset = 0x4, fixed_abs, tag = 'smem constant byte address 0x4 - core index']
  #allocation1 [shape = 'u32[144,128]{1,0:T(1,128)}', space=vmem, size = 0x12000, scoped, tag = 'internal scratch']
  %s0 = inlined_call_operand.hbm [shape: f32[2,8,32], index: 0, kind: input, shape index: {}]
  %s1 = inlined_call_operand.vmem [shape: f32[2,1,8], index: 1, kind: input, shape index: {}]
  %s2 = inlined_call_operand.vmem [shape: f32[2,32,384], index: 2, kind: input, shape index: {}]
  %s3 = inlined_call_operand.vmem [shape: f32[2,64,32], index: 3, kind: input, shape index: {}]
  %s4 = inlined_call_operand.hbm [shape: f32[2,8,128], index: 4, kind: input, shape index: {}]
  %s5 = inlined_call_operand.hbm [shape: f32[2,2,8,32], index: 5, kind: output, shape index: {}]
  %s6 = sld [smem:[#allocation0]]
  $region38: #{tpu_custom_call.1} parent=0
    _
  %s8 = ssub.s32 1, %s6
  %s9 = scalar_select 0, %s8, %s6
  $region1: #{tpu_custom_call.1} parent=0
    #allocation2 [shape = 'u8[8192]{0}', space=vmem, size = 0x2000, scoped, tag = 'input window, operand 0, single buffered']
    #allocation3 [shape = 's32[1]{0}', space=sflag, size = 0x4, scoped, tag = 'scoped memory for tpu_custom_call.1']
    #allocation4 [shape = 's32[1]{0}', space=sflag, size = 0x4, scoped, tag = 'scoped memory for tpu_custom_call.1']
    #allocation5 [shape = 'u8[8192]{0}', space=vmem, size = 0x2000, scoped, tag = 'input window, operand 4, single buffered']
    #allocation6 [shape = 's32[1]{0}', space=sflag, size = 0x4, scoped, tag = 'scoped memory for tpu_custom_call.1']
    #allocation7 [shape = 'u8[16384]{0}', space=vmem, size = 0x4000, scoped, tag = 'output window, operand 0, single buffered']
    %10 = vsyncpa [#allocation3], 0
    %11 = vsyncpa [#allocation6], 0
    %12 = vsyncpa [#allocation4], 0
    // Predicated region
    $region2: #{tpu_custom_call.1} parent=1 // pred_check
      _
    $region3: #{tpu_custom_call.1} parent=1 // pred_check_branch
      %14 = sbr.rel (0) target = $region5
    $region4: #{tpu_custom_call.1} parent=1 // pred_region
      %s16 = ssub.s32 256, 256
      %17 = vsyncadd [#allocation3], %s16
      %s18 = sshll.u32 [#allocation2], 4
      %s19 = int_to_ptr.vmem [resolvable:$true] %s18
      %24 = dma.hbm_to_vmem [thread:$0]  %s0, 256, %s19, [#allocation3], 128, 128, 8
    $region5: #{tpu_custom_call.1} parent=1 // pred_fallthru
      _
    // Predicated region
    $region6: #{tpu_custom_call.1} parent=1 // pred_check
      _
    $region7: #{tpu_custom_call.1} parent=1 // pred_check_branch
      %26 = sbr.rel (0) target = $region9
    $region8: #{tpu_custom_call.1} parent=1 // pred_region
      _
    $region9: #{tpu_custom_call.1} parent=1 // pred_fallthru
      _
    // Predicated region
    $region10: #{tpu_custom_call.1} parent=1 // pred_check
      _
    $region11: #{tpu_custom_call.1} parent=1 // pred_check_branch
      %28 = sbr.rel (0) target = $region13
    $region12: #{tpu_custom_call.1} parent=1 // pred_region
      _
    $region13: #{tpu_custom_call.1} parent=1 // pred_fallthru
      _
    // Predicated region
    $region14: #{tpu_custom_call.1} parent=1 // pred_check
      _
    $region15: #{tpu_custom_call.1} parent=1 // pred_check_branch
      %30 = sbr.rel (0) target = $region17
    $region16: #{tpu_custom_call.1} parent=1 // pred_region
      _
    $region17: #{tpu_custom_call.1} parent=1 // pred_fallthru
      _
    // Predicated region
    $region18: #{tpu_custom_call.1} parent=1 // pred_check
      _
    $region19: #{tpu_custom_call.1} parent=1 // pred_check_branch
      %32 = sbr.rel (0) target = $region21
    $region20: #{tpu_custom_call.1} parent=1 // pred_region
      %s34 = ssub.s32 256, 256
      %35 = vsyncadd [#allocation6], %s34
      %s36 = sshll.u32 [#allocation5], 4
      %s37 = int_to_ptr.vmem [resolvable:$true] %s36
      %42 = dma.hbm_to_vmem [thread:$0]  %s4, 256, %s37, [#allocation6], 128, 128, 8
    $region21: #{tpu_custom_call.1} parent=1 // pred_fallthru
      _
    // Predicated region
    $region22: #{tpu_custom_call.1} parent=1 // pred_check
      _
    $region23: #{tpu_custom_call.1} parent=1 // pred_check_branch
      %44 = sbr.rel (0) target = $region25
    $region24: #{tpu_custom_call.1} parent=1 // pred_region
      %45 = dma.done [#allocation3], 256
    $region25: #{tpu_custom_call.1} parent=1 // pred_fallthru
      _
    // Predicated region
    $region26: #{tpu_custom_call.1} parent=1 // pred_check
      _
    $region27: #{tpu_custom_call.1} parent=1 // pred_check_branch
      %47 = sbr.rel (0) target = $region29
    $region28: #{tpu_custom_call.1} parent=1 // pred_region
      %48 = dma.done [#allocation6], 256
    $region29: #{tpu_custom_call.1} parent=1 // pred_fallthru
      _
    %v49 = vld [vmem:[%s1] sm:$0x1]
    %v50 = vld [vmem:[%s1 + $0x1] sm:$0x1]
    %v53 = vlaneseq
    %v54 = vshrl.u32 %v53, 7
    %v55 = vsub.s32 0, %v54
    %v56 = vrot.slane %v49, %v55
    %v57 = vlaneseq
    %v58 = vshrl.u32 %v57, 7
    %v59 = vsub.s32 0, %v58
    %v60 = vrot.slane %v50, %v59
    %v63 = vld [vmem:[#allocation2] sm:$0xff]
    %v64 = vld [vmem:[#allocation2 + $0x8] sm:$0xff]
    %v65 = vld [vmem:[%s2] sm:$0xff]
    %v66 = vld [vmem:[%s2 + $0x18] sm:$0xff]
    %v67 = vld [vmem:[%s2 + $0x30] sm:$0xff]
    %v68 = vld [vmem:[%s2 + $0x48] sm:$0xff]
    %v69 = vld [vmem:[%s2 + $0x8] sm:$0xff]
    %v70 = vld [vmem:[%s2 + $0x20] sm:$0xff]
    %v71 = vld [vmem:[%s2 + $0x38] sm:$0xff]
    %v72 = vld [vmem:[%s2 + $0x50] sm:$0xff]
    %v73 = vld [vmem:[%s2 + $0x10] sm:$0xff]
    %v74 = vld [vmem:[%s2 + $0x28] sm:$0xff]
    %v75 = vld [vmem:[%s2 + $0x40] sm:$0xff]
    %v76 = vld [vmem:[%s2 + $0x58] sm:$0xff]
    %v77 = vld [vmem:[%s3] sm:$0xff]
    %v78 = vld [vmem:[%s3 + $0x8] sm:$0xff]
    %v79 = vld [vmem:[%s3 + $0x10] sm:$0xff]
    %v80 = vld [vmem:[%s3 + $0x18] sm:$0xff]
    %v81 = vld [vmem:[%s3 + $0x20] sm:$0xff]
    %v82 = vld [vmem:[%s3 + $0x28] sm:$0xff]
    %v83 = vld [vmem:[%s3 + $0x30] sm:$0xff]
    %v84 = vld [vmem:[%s3 + $0x38] sm:$0xff]
    %v85 = vld [vmem:[#allocation5] sm:$0x1]
    %v86 = vld [vmem:[#allocation5 + $0x1] sm:$0x1]
    %v87 = vld [vmem:[#allocation5 + $0x2] sm:$0x1]
    %v88 = vld [vmem:[#allocation5 + $0x3] sm:$0x1]
    %v89 = vld [vmem:[#allocation5 + $0x4] sm:$0x1]
    %v90 = vld [vmem:[#allocation5 + $0x5] sm:$0x1]
    %v91 = vld [vmem:[#allocation5 + $0x6] sm:$0x1]
    %v92 = vld [vmem:[#allocation5 + $0x7] sm:$0x1]
    %v93 = vlaneseq
    %v94 = vshrl.u32 %v93, 7
    %v95 = vsub.s32 0, %v94
    %v96 = vrot.slane %v85, %v95
    %vm97 = vcmask 261120
    %v99 = vsel %vm97, %v63, 0
    %v102 = vsel %vm97, %v64, 0
    %104 = vmatprep.subr.mxu0 0.0
    %105 = vmatpush1.msra.mxu0 %v65
    %106 = vmatprep.subr.mxu0 0.0
    %107 = vmatpush1.msra.mxu0 %v66
    %108 = vmatprep.subr.mxu0 0.0
    %109 = vmatpush1.msra.mxu0 %v67
    %110 = vmatprep.subr.mxu0 0.0
    %111 = vmatpush1.msra.mxu0 %v68
    %112 = vmatprep.subr.mxu0 0.0
    %113 = vmatpush1.msra.mxu0 0.0
    %114 = vmatprep.subr.mxu0 0.0
    %115 = vmatpush1.msra.mxu0 0.0
    %116 = vmatprep.subr.mxu0 0.0
    %117 = vmatpush1.msra.mxu0 0.0
    %118 = vmatprep.subr.mxu0 0.0
    %119 = vmatpush1.msra.mxu0 0.0
    %120 = vmatprep.subr.mxu0 0.0
    %121 = vmatpush1.msra.mxu0 0.0
    %122 = vmatprep.subr.mxu0 0.0
    %123 = vmatpush1.msra.mxu0 0.0
    %124 = vmatprep.subr.mxu0 0.0
    %125 = vmatpush1.msra.mxu0 0.0
    %126 = vmatprep.subr.mxu0 0.0
    %127 = vmatpush1.msra.mxu0 0.0
    %128 = vmatprep.subr.mxu0 0.0
    %129 = vmatpush1.msra.mxu0 0.0
    %130 = vmatprep.subr.mxu0 0.0
    %131 = vmatpush1.msra.mxu0 0.0
    %132 = vmatprep.subr.mxu0 0.0
    %133 = vmatpush1.msra.mxu0 0.0
    %134 = vmatprep.subr.mxu0 0.0
    %135 = vmatpush1.msra.mxu0 0.0
    %136 = vmatprep.subr.mxu0 0.0
    %137 = vmatpush1.msra.mxu0 0.0
    %138 = vmatprep.subr.mxu0 0.0
    %139 = vmatpush1.msra.mxu0 0.0
    %140 = vmatprep.subr.mxu0 0.0
    %141 = vmatpush1.msra.mxu0 0.0
    %142 = vmatprep.subr.mxu0 0.0
    %143 = vmatpush1.msra.mxu0 0.0
    %144 = vmatprep.subr.mxu0 0.0
    %145 = vmatpush1.msra.mxu0 0.0
    %146 = vmatprep.subr.mxu0 0.0
    %147 = vmatpush1.msra.mxu0 0.0
    %148 = vmatprep.subr.mxu0 0.0
    %149 = vmatpush1.msra.mxu0 0.0
    %150 = vmatprep.subr.mxu0 0.0
    %151 = vmatpush1.msra.mxu0 0.0
    %152 = vmatprep.subr.mxu0 0.0
    %153 = vmatpush1.msra.mxu0 0.0
    %154 = vmatprep.subr.mxu0 0.0
    %155 = vmatpush1.msra.mxu0 0.0
    %156 = vmatprep.subr.mxu0 0.0
    %157 = vmatpush1.msra.mxu0 0.0
    %158 = vmatprep.subr.mxu0 0.0
    %159 = vmatpush1.msra.mxu0 0.0
    %160 = vmatprep.subr.mxu0 0.0
    %161 = vmatpush1.msra.mxu0 0.0
    %162 = vmatprep.subr.mxu0 0.0
    %163 = vmatpush1.msra.mxu0 0.0
    %164 = vmatprep.subr.mxu0 0.0
    %165 = vmatpush1.msra.mxu0 0.0
    %166 = vmatprep.subr.mxu0 0.0
    %167 = vmatpush1.msra.mxu0 0.0
    %168 = vmatprep.mubr.f32.mxu0 0.0
    %169 = vmatmul.mubr.f32.gmra.mrb[0].mxu0 %v99
    %v170 = vpop.f32.mrb[0].mxu0
    %v171 = vadd.f32 %v96, %v170
    %v172 = vpop.f32.mrb[0].mxu0
    %173 = vmatprep.mubr.f32.mxu0 0.0
    %174 = vmatmul.mubr.f32.gmra.mrb[0].mxu0 %v102
    %v175 = vpop.f32.mrb[0].mxu0
    %v176 = vadd.f32 %v96, %v175
    %v177 = vpop.f32.mrb[0].mxu0
    %178 = vdwg.mxu0
    %180 = vrot.lane.b32.xlu0 %v171, 96
    %v181 = vpop.permute.xlu0 %180
    %vm182 = vcmask 64512
    %v183 = vsel %vm182, %v171, 0
    %v185 = vsel %vm182, %v181, 0
    %187 = vmatprep.subr.mxu0 0.0
    %188 = vmatpush1.xpose.msra.mxu0 %v185
    %189 = vmatprep.subr.mxu0 0.0
    %190 = vmatpush1.xpose.msra.mxu0 0.0
    %191 = vmatprep.subr.mxu0 0.0
    %192 = vmatpush1.xpose.msra.mxu0 0.0
    %193 = vmatprep.subr.mxu0 0.0
    %194 = vmatpush1.xpose.msra.mxu0 0.0
    %195 = vmatprep.subr.mxu0 0.0
    %196 = vmatpush1.xpose.msra.mxu0 0.0
    %197 = vmatprep.subr.mxu0 0.0
    %198 = vmatpush1.xpose.msra.mxu0 0.0
    %199 = vmatprep.subr.mxu0 0.0
    %200 = vmatpush1.xpose.msra.mxu0 0.0
    %201 = vmatprep.subr.mxu0 0.0
    %202 = vmatpush1.xpose.msra.mxu0 0.0
    %203 = vmatprep.subr.mxu0 0.0
    %204 = vmatpush1.xpose.msra.mxu0 0.0
    %205 = vmatprep.subr.mxu0 0.0
    %206 = vmatpush1.xpose.msra.mxu0 0.0
    %207 = vmatprep.subr.mxu0 0.0
    %208 = vmatpush1.xpose.msra.mxu0 0.0
    %209 = vmatprep.subr.mxu0 0.0
    %210 = vmatpush1.xpose.msra.mxu0 0.0
    %211 = vmatprep.subr.mxu0 0.0
    %212 = vmatpush1.xpose.msra.mxu0 0.0
    %213 = vmatprep.subr.mxu0 0.0
    %214 = vmatpush1.xpose.msra.mxu0 0.0
    %215 = vmatprep.subr.mxu0 0.0
    %216 = vmatpush1.xpose.msra.mxu0 0.0
    %217 = vmatprep.subr.mxu0 0.0
    %218 = vmatpush1.xpose.msra.mxu0 0.0
    %219 = vmatprep.subr.mxu0 0.0
    %220 = vmatpush1.xpose.msra.mxu0 0.0
    %221 = vmatprep.subr.mxu0 0.0
    %222 = vmatpush1.xpose.msra.mxu0 0.0
    %223 = vmatprep.subr.mxu0 0.0
    %224 = vmatpush1.xpose.msra.mxu0 0.0
    %225 = vmatprep.subr.mxu0 0.0
    %226 = vmatpush1.xpose.msra.mxu0 0.0
    %227 = vmatprep.subr.mxu0 0.0
    %228 = vmatpush1.xpose.msra.mxu0 0.0
    %229 = vmatprep.subr.mxu0 0.0
    %230 = vmatpush1.xpose.msra.mxu0 0.0
    %231 = vmatprep.subr.mxu0 0.0
    %232 = vmatpush1.xpose.msra.mxu0 0.0
    %233 = vmatprep.subr.mxu0 0.0
    %234 = vmatpush1.xpose.msra.mxu0 0.0
    %235 = vmatprep.subr.mxu0 0.0
    %236 = vmatpush1.xpose.msra.mxu0 0.0
    %237 = vmatprep.subr.mxu0 0.0
    %238 = vmatpush1.xpose.msra.mxu0 0.0
    %239 = vmatprep.subr.mxu0 0.0
    %240 = vmatpush1.xpose.msra.mxu0 0.0
    %241 = vmatprep.subr.mxu0 0.0
    %242 = vmatpush1.xpose.msra.mxu0 0.0
    %243 = vmatprep.subr.mxu0 0.0
    %244 = vmatpush1.xpose.msra.mxu0 0.0
    %245 = vmatprep.subr.mxu0 0.0
    %246 = vmatpush1.xpose.msra.mxu0 0.0
    %247 = vmatprep.subr.mxu0 0.0
    %248 = vmatpush1.xpose.msra.mxu0 0.0
    %249 = vmatprep.subr.mxu0 0.0
    %250 = vmatpush1.xpose.msra.mxu0 0.0
    %251 = vmatprep.mubr.f32.mxu0 0.0
    %252 = vmatmul.mubr.f32.gmra.mrb[0].mxu0 %v183
    %v253 = vpop.f32.mrb[0].mxu0
    %v254 = vadd.f32 0.0, %v253
    %v255 = vpop.f32.mrb[0].mxu0
    %256 = vdwg.mxu0
    %258 = vrot.lane.b32.xlu0 %v176, 96
    %v259 = vpop.permute.xlu0 %258
    %v260 = vsel %vm182, %v176, 0
    %v262 = vsel %vm182, %v259, 0
    %264 = vmatprep.subr.mxu0 0.0
    %265 = vmatpush1.xpose.msra.mxu0 %v262
    %266 = vmatprep.subr.mxu0 0.0
    %267 = vmatpush1.xpose.msra.mxu0 0.0
    %268 = vmatprep.subr.mxu0 0.0
    %269 = vmatpush1.xpose.msra.mxu0 0.0
    %270 = vmatprep.subr.mxu0 0.0
    %271 = vmatpush1.xpose.msra.mxu0 0.0
    %272 = vmatprep.subr.mxu0 0.0
    %273 = vmatpush1.xpose.msra.mxu0 0.0
    %274 = vmatprep.subr.mxu0 0.0
    %275 = vmatpush1.xpose.msra.mxu0 0.0
    %276 = vmatprep.subr.mxu0 0.0
    %277 = vmatpush1.xpose.msra.mxu0 0.0
    %278 = vmatprep.subr.mxu0 0.0
    %279 = vmatpush1.xpose.msra.mxu0 0.0
    %280 = vmatprep.subr.mxu0 0.0
    %281 = vmatpush1.xpose.msra.mxu0 0.0
    %282 = vmatprep.subr.mxu0 0.0
    %283 = vmatpush1.xpose.msra.mxu0 0.0
    %284 = vmatprep.subr.mxu0 0.0
    %285 = vmatpush1.xpose.msra.mxu0 0.0
    %286 = vmatprep.subr.mxu0 0.0
    %287 = vmatpush1.xpose.msra.mxu0 0.0
    %288 = vmatprep.subr.mxu0 0.0
    %289 = vmatpush1.xpose.msra.mxu0 0.0
    %290 = vmatprep.subr.mxu0 0.0
    %291 = vmatpush1.xpose.msra.mxu0 0.0
    %292 = vmatprep.subr.mxu0 0.0
    %293 = vmatpush1.xpose.msra.mxu0 0.0
    %294 = vmatprep.subr.mxu0 0.0
    %295 = vmatpush1.xpose.msra.mxu0 0.0
    %296 = vmatprep.subr.mxu0 0.0
    %297 = vmatpush1.xpose.msra.mxu0 0.0
    %298 = vmatprep.subr.mxu0 0.0
    %299 = vmatpush1.xpose.msra.mxu0 0.0
    %300 = vmatprep.subr.mxu0 0.0
    %301 = vmatpush1.xpose.msra.mxu0 0.0
    %302 = vmatprep.subr.mxu0 0.0
    %303 = vmatpush1.xpose.msra.mxu0 0.0
    %304 = vmatprep.subr.mxu0 0.0
    %305 = vmatpush1.xpose.msra.mxu0 0.0
    %306 = vmatprep.subr.mxu0 0.0
    %307 = vmatpush1.xpose.msra.mxu0 0.0
    %308 = vmatprep.subr.mxu0 0.0
    %309 = vmatpush1.xpose.msra.mxu0 0.0
    %310 = vmatprep.subr.mxu0 0.0
    %311 = vmatpush1.xpose.msra.mxu0 0.0
    %312 = vmatprep.subr.mxu0 0.0
    %313 = vmatpush1.xpose.msra.mxu0 0.0
    %314 = vmatprep.subr.mxu0 0.0
    %315 = vmatpush1.xpose.msra.mxu0 0.0
    %316 = vmatprep.subr.mxu0 0.0
    %317 = vmatpush1.xpose.msra.mxu0 0.0
    %318 = vmatprep.subr.mxu0 0.0
    %319 = vmatpush1.xpose.msra.mxu0 0.0
    %320 = vmatprep.subr.mxu0 0.0
    %321 = vmatpush1.xpose.msra.mxu0 0.0
    %322 = vmatprep.subr.mxu0 0.0
    %323 = vmatpush1.xpose.msra.mxu0 0.0
    %324 = vmatprep.subr.mxu0 0.0
    %325 = vmatpush1.xpose.msra.mxu0 0.0
    %326 = vmatprep.subr.mxu0 0.0
    %327 = vmatpush1.xpose.msra.mxu0 0.0
    %328 = vmatprep.mubr.f32.mxu0 0.0
    %329 = vmatmul.mubr.f32.gmra.mrb[0].mxu0 %v260
    %v330 = vpop.f32.mrb[0].mxu0
    %v331 = vadd.f32 0.0, %v330
    %v332 = vpop.f32.mrb[0].mxu0
    %333 = vdwg.mxu0
    %v334 = vmul.f32 %v254, 0.35355338
    %v335 = vmul.f32 %v331, 0.35355338
    %v336 = vadd.f32 %v334, %v56
    %v337 = vadd.f32 %v335, %v60
    %v338 = vsel %vm182, %v336, -inf
    %339 = vmax.xlane.f32.xlu0 %v338
    %v340 = vpop.xlane.xlu0 %339
    %v341 = vsel %vm182, %v337, -inf
    %342 = vmax.xlane.f32.xlu0 %v341
    %v343 = vpop.xlane.xlu0 %342
    %v344 = vsub.f32 %v336, %v340
    %v345 = vsub.f32 %v337, %v343
    %v346 = vmul.f32 %v344, 1.442695
    %v347 = vpow.pop %v346
    %v348 = vmul.f32 %v345, 1.442695
    %v349 = vpow.pop %v348
    %v350 = vsel %vm182, %v347, 0.0
    %351 = vadd.xlane.f32.xlu0 %v350
    %v352 = vpop.xlane.xlu0 %351
    %v353 = vsel %vm182, %v349, 0.0
    %354 = vadd.xlane.f32.xlu0 %v353
    %v355 = vpop.xlane.xlu0 %354
    %v356 = vrcp.pop %v352
    %v357 = vrcp.pop %v355
    %v358 = vmul.f32 %v347, %v356
    %v359 = vmul.f32 %v349, %v357
    %360 = vrot.lane.b32.xlu0 %v171, 64
    %v361 = vpop.permute.xlu0 %360
    %v364 = vsel %vm182, %v358, 0
    %366 = vmatprep.subr.mxu0 0.0
    %367 = vmatpush1.msra.mxu0 %v361
    %368 = vmatprep.subr.mxu0 0.0
    %369 = vmatpush1.msra.mxu0 0.0
    %370 = vmatprep.subr.mxu0 0.0
    %371 = vmatpush1.msra.mxu0 0.0
    %372 = vmatprep.subr.mxu0 0.0
    %373 = vmatpush1.msra.mxu0 0.0
    %374 = vmatprep.subr.mxu0 0.0
    %375 = vmatpush1.msra.mxu0 0.0
    %376 = vmatprep.subr.mxu0 0.0
    %377 = vmatpush1.msra.mxu0 0.0
    %378 = vmatprep.subr.mxu0 0.0
    %379 = vmatpush1.msra.mxu0 0.0
    %380 = vmatprep.subr.mxu0 0.0
    %381 = vmatpush1.msra.mxu0 0.0
    %382 = vmatprep.subr.mxu0 0.0
    %383 = vmatpush1.msra.mxu0 0.0
    %384 = vmatprep.subr.mxu0 0.0
    %385 = vmatpush1.msra.mxu0 0.0
    %386 = vmatprep.subr.mxu0 0.0
    %387 = vmatpush1.msra.mxu0 0.0
    %388 = vmatprep.subr.mxu0 0.0
    %389 = vmatpush1.msra.mxu0 0.0
    %390 = vmatprep.subr.mxu0 0.0
    %391 = vmatpush1.msra.mxu0 0.0
    %392 = vmatprep.subr.mxu0 0.0
    %393 = vmatpush1.msra.mxu0 0.0
    %394 = vmatprep.subr.mxu0 0.0
    %395 = vmatpush1.msra.mxu0 0.0
    %396 = vmatprep.subr.mxu0 0.0
    %397 = vmatpush1.msra.mxu0 0.0
    %398 = vmatprep.subr.mxu0 0.0
    %399 = vmatpush1.msra.mxu0 0.0
    %400 = vmatprep.subr.mxu0 0.0
    %401 = vmatpush1.msra.mxu0 0.0
    %402 = vmatprep.subr.mxu0 0.0
    %403 = vmatpush1.msra.mxu0 0.0
    %404 = vmatprep.subr.mxu0 0.0
    %405 = vmatpush1.msra.mxu0 0.0
    %406 = vmatprep.subr.mxu0 0.0
    %407 = vmatpush1.msra.mxu0 0.0
    %408 = vmatprep.subr.mxu0 0.0
    %409 = vmatpush1.msra.mxu0 0.0
    %410 = vmatprep.subr.mxu0 0.0
    %411 = vmatpush1.msra.mxu0 0.0
    %412 = vmatprep.subr.mxu0 0.0
    %413 = vmatpush1.msra.mxu0 0.0
    %414 = vmatprep.subr.mxu0 0.0
    %415 = vmatpush1.msra.mxu0 0.0
    %416 = vmatprep.subr.mxu0 0.0
    %417 = vmatpush1.msra.mxu0 0.0
    %418 = vmatprep.subr.mxu0 0.0
    %419 = vmatpush1.msra.mxu0 0.0
    %420 = vmatprep.subr.mxu0 0.0
    %421 = vmatpush1.msra.mxu0 0.0
    %422 = vmatprep.subr.mxu0 0.0
    %423 = vmatpush1.msra.mxu0 0.0
    %424 = vmatprep.subr.mxu0 0.0
    %425 = vmatpush1.msra.mxu0 0.0
    %426 = vmatprep.subr.mxu0 0.0
    %427 = vmatpush1.msra.mxu0 0.0
    %428 = vmatprep.subr.mxu0 0.0
    %429 = vmatpush1.msra.mxu0 0.0
    %430 = vmatprep.mubr.f32.mxu0 0.0
    %431 = vmatmul.mubr.f32.gmra.mrb[0].mxu0 %v364
    %v432 = vpop.f32.mrb[0].mxu0
    %v433 = vadd.f32 0.0, %v432
    %v434 = vpop.f32.mrb[0].mxu0
    %435 = vdwg.mxu0
    %436 = vrot.lane.b32.xlu0 %v176, 64
    %v437 = vpop.permute.xlu0 %436
    %v440 = vsel %vm182, %v359, 0
    %442 = vmatprep.subr.mxu0 0.0
    %443 = vmatpush1.msra.mxu0 %v437
    %444 = vmatprep.subr.mxu0 0.0
    %445 = vmatpush1.msra.mxu0 0.0
    %446 = vmatprep.subr.mxu0 0.0
    %447 = vmatpush1.msra.mxu0 0.0
    %448 = vmatprep.subr.mxu0 0.0
    %449 = vmatpush1.msra.mxu0 0.0
    %450 = vmatprep.subr.mxu0 0.0
    %451 = vmatpush1.msra.mxu0 0.0
    %452 = vmatprep.subr.mxu0 0.0
    %453 = vmatpush1.msra.mxu0 0.0
    %454 = vmatprep.subr.mxu0 0.0
    %455 = vmatpush1.msra.mxu0 0.0
    %456 = vmatprep.subr.mxu0 0.0
    %457 = vmatpush1.msra.mxu0 0.0
    %458 = vmatprep.subr.mxu0 0.0
    %459 = vmatpush1.msra.mxu0 0.0
    %460 = vmatprep.subr.mxu0 0.0
    %461 = vmatpush1.msra.mxu0 0.0
    %462 = vmatprep.subr.mxu0 0.0
    %463 = vmatpush1.msra.mxu0 0.0
    %464 = vmatprep.subr.mxu0 0.0
    %465 = vmatpush1.msra.mxu0 0.0
    %466 = vmatprep.subr.mxu0 0.0
    %467 = vmatpush1.msra.mxu0 0.0
    %468 = vmatprep.subr.mxu0 0.0
    %469 = vmatpush1.msra.mxu0 0.0
    %470 = vmatprep.subr.mxu0 0.0
    %471 = vmatpush1.msra.mxu0 0.0
    %472 = vmatprep.subr.mxu0 0.0
    %473 = vmatpush1.msra.mxu0 0.0
    %474 = vmatprep.subr.mxu0 0.0
    %475 = vmatpush1.msra.mxu0 0.0
    %476 = vmatprep.subr.mxu0 0.0
    %477 = vmatpush1.msra.mxu0 0.0
    %478 = vmatprep.subr.mxu0 0.0
    %479 = vmatpush1.msra.mxu0 0.0
    %480 = vmatprep.subr.mxu0 0.0
    %481 = vmatpush1.msra.mxu0 0.0
    %482 = vmatprep.subr.mxu0 0.0
    %483 = vmatpush1.msra.mxu0 0.0
    %484 = vmatprep.subr.mxu0 0.0
    %485 = vmatpush1.msra.mxu0 0.0
    %486 = vmatprep.subr.mxu0 0.0
    %487 = vmatpush1.msra.mxu0 0.0
    %488 = vmatprep.subr.mxu0 0.0
    %489 = vmatpush1.msra.mxu0 0.0
    %490 = vmatprep.subr.mxu0 0.0
    %491 = vmatpush1.msra.mxu0 0.0
    %492 = vmatprep.subr.mxu0 0.0
    %493 = vmatpush1.msra.mxu0 0.0
    %494 = vmatprep.subr.mxu0 0.0
    %495 = vmatpush1.msra.mxu0 0.0
    %496 = vmatprep.subr.mxu0 0.0
    %497 = vmatpush1.msra.mxu0 0.0
    %498 = vmatprep.subr.mxu0 0.0
    %499 = vmatpush1.msra.mxu0 0.0
    %500 = vmatprep.subr.mxu0 0.0
    %501 = vmatpush1.msra.mxu0 0.0
    %502 = vmatprep.subr.mxu0 0.0
    %503 = vmatpush1.msra.mxu0 0.0
    %504 = vmatprep.subr.mxu0 0.0
    %505 = vmatpush1.msra.mxu0 0.0
    %506 = vmatprep.mubr.f32.mxu0 0.0
    %507 = vmatmul.mubr.f32.gmra.mrb[0].mxu0 %v440
    %v508 = vpop.f32.mrb[0].mxu0
    %v509 = vadd.f32 0.0, %v508
    %v510 = vpop.f32.mrb[0].mxu0
    %511 = vdwg.mxu0
    %512 = vrot.lane.b32.xlu0 %v171, 120
    %v513 = vpop.permute.xlu0 %512
    %514 = vrot.lane.b32.xlu0 %v171, 88
    %v515 = vpop.permute.xlu0 %514
    %v516 = vsel %vm182, %v513, 0
    %v518 = vsel %vm182, %v515, 0
    %520 = vmatprep.subr.mxu0 0.0
    %521 = vmatpush1.xpose.msra.mxu0 %v518
    %522 = vmatprep.subr.mxu0 0.0
    %523 = vmatpush1.xpose.msra.mxu0 0.0
    %524 = vmatprep.subr.mxu0 0.0
    %525 = vmatpush1.xpose.msra.mxu0 0.0
    %526 = vmatprep.subr.mxu0 0.0
    %527 = vmatpush1.xpose.msra.mxu0 0.0
    %528 = vmatprep.subr.mxu0 0.0
    %529 = vmatpush1.xpose.msra.mxu0 0.0
    %530 = vmatprep.subr.mxu0 0.0
    %531 = vmatpush1.xpose.msra.mxu0 0.0
    %532 = vmatprep.subr.mxu0 0.0
    %533 = vmatpush1.xpose.msra.mxu0 0.0
    %534 = vmatprep.subr.mxu0 0.0
    %535 = vmatpush1.xpose.msra.mxu0 0.0
    %536 = vmatprep.subr.mxu0 0.0
    %537 = vmatpush1.xpose.msra.mxu0 0.0
    %538 = vmatprep.subr.mxu0 0.0
    %539 = vmatpush1.xpose.msra.mxu0 0.0
    %540 = vmatprep.subr.mxu0 0.0
    %541 = vmatpush1.xpose.msra.mxu0 0.0
    %542 = vmatprep.subr.mxu0 0.0
    %543 = vmatpush1.xpose.msra.mxu0 0.0
    %544 = vmatprep.subr.mxu0 0.0
    %545 = vmatpush1.xpose.msra.mxu0 0.0
    %546 = vmatprep.subr.mxu0 0.0
    %547 = vmatpush1.xpose.msra.mxu0 0.0
    %548 = vmatprep.subr.mxu0 0.0
    %549 = vmatpush1.xpose.msra.mxu0 0.0
    %550 = vmatprep.subr.mxu0 0.0
    %551 = vmatpush1.xpose.msra.mxu0 0.0
    %552 = vmatprep.subr.mxu0 0.0
    %553 = vmatpush1.xpose.msra.mxu0 0.0
    %554 = vmatprep.subr.mxu0 0.0
    %555 = vmatpush1.xpose.msra.mxu0 0.0
    %556 = vmatprep.subr.mxu0 0.0
    %557 = vmatpush1.xpose.msra.mxu0 0.0
    %558 = vmatprep.subr.mxu0 0.0
    %559 = vmatpush1.xpose.msra.mxu0 0.0
    %560 = vmatprep.subr.mxu0 0.0
    %561 = vmatpush1.xpose.msra.mxu0 0.0
    %562 = vmatprep.subr.mxu0 0.0
    %563 = vmatpush1.xpose.msra.mxu0 0.0
    %564 = vmatprep.subr.mxu0 0.0
    %565 = vmatpush1.xpose.msra.mxu0 0.0
    %566 = vmatprep.subr.mxu0 0.0
    %567 = vmatpush1.xpose.msra.mxu0 0.0
    %568 = vmatprep.subr.mxu0 0.0
    %569 = vmatpush1.xpose.msra.mxu0 0.0
    %570 = vmatprep.subr.mxu0 0.0
    %571 = vmatpush1.xpose.msra.mxu0 0.0
    %572 = vmatprep.subr.mxu0 0.0
    %573 = vmatpush1.xpose.msra.mxu0 0.0
    %574 = vmatprep.subr.mxu0 0.0
    %575 = vmatpush1.xpose.msra.mxu0 0.0
    %576 = vmatprep.subr.mxu0 0.0
    %577 = vmatpush1.xpose.msra.mxu0 0.0
    %578 = vmatprep.subr.mxu0 0.0
    %579 = vmatpush1.xpose.msra.mxu0 0.0
    %580 = vmatprep.subr.mxu0 0.0
    %581 = vmatpush1.xpose.msra.mxu0 0.0
    %582 = vmatprep.subr.mxu0 0.0
    %583 = vmatpush1.xpose.msra.mxu0 0.0
    %584 = vmatprep.mubr.f32.mxu0 0.0
    %585 = vmatmul.mubr.f32.gmra.mrb[0].mxu0 %v516
    %v586 = vpop.f32.mrb[0].mxu0
    %v587 = vadd.f32 0.0, %v586
    %v588 = vpop.f32.mrb[0].mxu0
    %589 = vdwg.mxu0
    %590 = vrot.lane.b32.xlu0 %v176, 120
    %v591 = vpop.permute.xlu0 %590
    %592 = vrot.lane.b32.xlu0 %v176, 88
    %v593 = vpop.permute.xlu0 %592
    %v594 = vsel %vm182, %v591, 0
    %v596 = vsel %vm182, %v593, 0
    %598 = vmatprep.subr.mxu0 0.0
    %599 = vmatpush1.xpose.msra.mxu0 %v596
    %600 = vmatprep.subr.mxu0 0.0
    %601 = vmatpush1.xpose.msra.mxu0 0.0
    %602 = vmatprep.subr.mxu0 0.0
    %603 = vmatpush1.xpose.msra.mxu0 0.0
    %604 = vmatprep.subr.mxu0 0.0
    %605 = vmatpush1.xpose.msra.mxu0 0.0
    %606 = vmatprep.subr.mxu0 0.0
    %607 = vmatpush1.xpose.msra.mxu0 0.0
    %608 = vmatprep.subr.mxu0 0.0
    %609 = vmatpush1.xpose.msra.mxu0 0.0
    %610 = vmatprep.subr.mxu0 0.0
    %611 = vmatpush1.xpose.msra.mxu0 0.0
    %612 = vmatprep.subr.mxu0 0.0
    %613 = vmatpush1.xpose.msra.mxu0 0.0
    %614 = vmatprep.subr.mxu0 0.0
    %615 = vmatpush1.xpose.msra.mxu0 0.0
    %616 = vmatprep.subr.mxu0 0.0
    %617 = vmatpush1.xpose.msra.mxu0 0.0
    %618 = vmatprep.subr.mxu0 0.0
    %619 = vmatpush1.xpose.msra.mxu0 0.0
    %620 = vmatprep.subr.mxu0 0.0
    %621 = vmatpush1.xpose.msra.mxu0 0.0
    %622 = vmatprep.subr.mxu0 0.0
    %623 = vmatpush1.xpose.msra.mxu0 0.0
    %624 = vmatprep.subr.mxu0 0.0
    %625 = vmatpush1.xpose.msra.mxu0 0.0
    %626 = vmatprep.subr.mxu0 0.0
    %627 = vmatpush1.xpose.msra.mxu0 0.0
    %628 = vmatprep.subr.mxu0 0.0
    %629 = vmatpush1.xpose.msra.mxu0 0.0
    %630 = vmatprep.subr.mxu0 0.0
    %631 = vmatpush1.xpose.msra.mxu0 0.0
    %632 = vmatprep.subr.mxu0 0.0
    %633 = vmatpush1.xpose.msra.mxu0 0.0
    %634 = vmatprep.subr.mxu0 0.0
    %635 = vmatpush1.xpose.msra.mxu0 0.0
    %636 = vmatprep.subr.mxu0 0.0
    %637 = vmatpush1.xpose.msra.mxu0 0.0
    %638 = vmatprep.subr.mxu0 0.0
    %639 = vmatpush1.xpose.msra.mxu0 0.0
    %640 = vmatprep.subr.mxu0 0.0
    %641 = vmatpush1.xpose.msra.mxu0 0.0
    %642 = vmatprep.subr.mxu0 0.0
    %643 = vmatpush1.xpose.msra.mxu0 0.0
    %644 = vmatprep.subr.mxu0 0.0
    %645 = vmatpush1.xpose.msra.mxu0 0.0
    %646 = vmatprep.subr.mxu0 0.0
    %647 = vmatpush1.xpose.msra.mxu0 0.0
    %648 = vmatprep.subr.mxu0 0.0
    %649 = vmatpush1.xpose.msra.mxu0 0.0
    %650 = vmatprep.subr.mxu0 0.0
    %651 = vmatpush1.xpose.msra.mxu0 0.0
    %652 = vmatprep.subr.mxu0 0.0
    %653 = vmatpush1.xpose.msra.mxu0 0.0
    %654 = vmatprep.subr.mxu0 0.0
    %655 = vmatpush1.xpose.msra.mxu0 0.0
    %656 = vmatprep.subr.mxu0 0.0
    %657 = vmatpush1.xpose.msra.mxu0 0.0
    %658 = vmatprep.subr.mxu0 0.0
    %659 = vmatpush1.xpose.msra.mxu0 0.0
    %660 = vmatprep.subr.mxu0 0.0
    %661 = vmatpush1.xpose.msra.mxu0 0.0
    %662 = vmatprep.mubr.f32.mxu0 0.0
    %663 = vmatmul.mubr.f32.gmra.mrb[0].mxu0 %v594
    %v664 = vpop.f32.mrb[0].mxu0
    %v665 = vadd.f32 0.0, %v664
    %v666 = vpop.f32.mrb[0].mxu0
    %667 = vdwg.mxu0
    %v668 = vmul.f32 %v587, 0.35355338
    %v669 = vmul.f32 %v665, 0.35355338
    %v670 = vadd.f32 %v668, %v56
    %v671 = vadd.f32 %v669, %v60
    %v672 = vsel %vm182, %v670, -inf
    %673 = vmax.xlane.f32.xlu0 %v672
    %v674 = vpop.xlane.xlu0 %673
    %v675 = vsel %vm182, %v671, -inf
    %676 = vmax.xlane.f32.xlu0 %v675
    %v677 = vpop.xlane.xlu0 %676
    %v678 = vsub.f32 %v670, %v674
    %v679 = vsub.f32 %v671, %v677
    %v680 = vmul.f32 %v678, 1.442695
    %v681 = vpow.pop %v680
    %v682 = vmul.f32 %v679, 1.442695
    %v683 = vpow.pop %v682
    %v684 = vsel %vm182, %v681, 0.0
    %685 = vadd.xlane.f32.xlu0 %v684
    %v686 = vpop.xlane.xlu0 %685
    %v687 = vsel %vm182, %v683, 0.0
    %688 = vadd.xlane.f32.xlu0 %v687
    %v689 = vpop.xlane.xlu0 %688
    %v690 = vrcp.pop %v686
    %v691 = vrcp.pop %v689
    %v692 = vmul.f32 %v681, %v690
    %v693 = vmul.f32 %v683, %v691
    %694 = vrot.lane.b32.xlu0 %v171, 56
    %v695 = vpop.permute.xlu0 %694
    %v698 = vsel %vm182, %v692, 0
    %700 = vmatprep.subr.mxu0 0.0
    %701 = vmatpush1.msra.mxu0 %v695
    %702 = vmatprep.subr.mxu0 0.0
    %703 = vmatpush1.msra.mxu0 0.0
    %704 = vmatprep.subr.mxu0 0.0
    %705 = vmatpush1.msra.mxu0 0.0
    %706 = vmatprep.subr.mxu0 0.0
    %707 = vmatpush1.msra.mxu0 0.0
    %708 = vmatprep.subr.mxu0 0.0
    %709 = vmatpush1.msra.mxu0 0.0
    %710 = vmatprep.subr.mxu0 0.0
    %711 = vmatpush1.msra.mxu0 0.0
    %712 = vmatprep.subr.mxu0 0.0
    %713 = vmatpush1.msra.mxu0 0.0
    %714 = vmatprep.subr.mxu0 0.0
    %715 = vmatpush1.msra.mxu0 0.0
    %716 = vmatprep.subr.mxu0 0.0
    %717 = vmatpush1.msra.mxu0 0.0
    %718 = vmatprep.subr.mxu0 0.0
    %719 = vmatpush1.msra.mxu0 0.0
    %720 = vmatprep.subr.mxu0 0.0
    %721 = vmatpush1.msra.mxu0 0.0
    %722 = vmatprep.subr.mxu0 0.0
    %723 = vmatpush1.msra.mxu0 0.0
    %724 = vmatprep.subr.mxu0 0.0
    %725 = vmatpush1.msra.mxu0 0.0
    %726 = vmatprep.subr.mxu0 0.0
    %727 = vmatpush1.msra.mxu0 0.0
    %728 = vmatprep.subr.mxu0 0.0
    %729 = vmatpush1.msra.mxu0 0.0
    %730 = vmatprep.subr.mxu0 0.0
    %731 = vmatpush1.msra.mxu0 0.0
    %732 = vmatprep.subr.mxu0 0.0
    %733 = vmatpush1.msra.mxu0 0.0
    %734 = vmatprep.subr.mxu0 0.0
    %735 = vmatpush1.msra.mxu0 0.0
    %736 = vmatprep.subr.mxu0 0.0
    %737 = vmatpush1.msra.mxu0 0.0
    %738 = vmatprep.subr.mxu0 0.0
    %739 = vmatpush1.msra.mxu0 0.0
    %740 = vmatprep.subr.mxu0 0.0
    %741 = vmatpush1.msra.mxu0 0.0
    %742 = vmatprep.subr.mxu0 0.0
    %743 = vmatpush1.msra.mxu0 0.0
    %744 = vmatprep.subr.mxu0 0.0
    %745 = vmatpush1.msra.mxu0 0.0
    %746 = vmatprep.subr.mxu0 0.0
    %747 = vmatpush1.msra.mxu0 0.0
    %748 = vmatprep.subr.mxu0 0.0
    %749 = vmatpush1.msra.mxu0 0.0
    %750 = vmatprep.subr.mxu0 0.0
    %751 = vmatpush1.msra.mxu0 0.0
    %752 = vmatprep.subr.mxu0 0.0
    %753 = vmatpush1.msra.mxu0 0.0
    %754 = vmatprep.subr.mxu0 0.0
    %755 = vmatpush1.msra.mxu0 0.0
    %756 = vmatprep.subr.mxu0 0.0
    %757 = vmatpush1.msra.mxu0 0.0
    %758 = vmatprep.subr.mxu0 0.0
    %759 = vmatpush1.msra.mxu0 0.0
    %760 = vmatprep.subr.mxu0 0.0
    %761 = vmatpush1.msra.mxu0 0.0
    %762 = vmatprep.subr.mxu0 0.0
    %763 = vmatpush1.msra.mxu0 0.0
    %764 = vmatprep.mubr.f32.mxu0 0.0
    %765 = vmatmul.mubr.f32.gmra.mrb[0].mxu0 %v698
    %v766 = vpop.f32.mrb[0].mxu0
    %v767 = vadd.f32 0.0, %v766
    %v768 = vpop.f32.mrb[0].mxu0
    %769 = vdwg.mxu0
    %770 = vrot.lane.b32.xlu0 %v176, 56
    %v771 = vpop.permute.xlu0 %770
    %v774 = vsel %vm182, %v693, 0
    %776 = vmatprep.subr.mxu0 0.0
    %777 = vmatpush1.msra.mxu0 %v771
    %778 = vmatprep.subr.mxu0 0.0
    %779 = vmatpush1.msra.mxu0 0.0
    %780 = vmatprep.subr.mxu0 0.0
    %781 = vmatpush1.msra.mxu0 0.0
    %782 = vmatprep.subr.mxu0 0.0
    %783 = vmatpush1.msra.mxu0 0.0
    %784 = vmatprep.subr.mxu0 0.0
    %785 = vmatpush1.msra.mxu0 0.0
    %786 = vmatprep.subr.mxu0 0.0
    %787 = vmatpush1.msra.mxu0 0.0
    %788 = vmatprep.subr.mxu0 0.0
    %789 = vmatpush1.msra.mxu0 0.0
    %790 = vmatprep.subr.mxu0 0.0
    %791 = vmatpush1.msra.mxu0 0.0
    %792 = vmatprep.subr.mxu0 0.0
    %793 = vmatpush1.msra.mxu0 0.0
    %794 = vmatprep.subr.mxu0 0.0
    %795 = vmatpush1.msra.mxu0 0.0
    %796 = vmatprep.subr.mxu0 0.0
    %797 = vmatpush1.msra.mxu0 0.0
    %798 = vmatprep.subr.mxu0 0.0
    %799 = vmatpush1.msra.mxu0 0.0
    %800 = vmatprep.subr.mxu0 0.0
    %801 = vmatpush1.msra.mxu0 0.0
    %802 = vmatprep.subr.mxu0 0.0
    %803 = vmatpush1.msra.mxu0 0.0
    %804 = vmatprep.subr.mxu0 0.0
    %805 = vmatpush1.msra.mxu0 0.0
    %806 = vmatprep.subr.mxu0 0.0
    %807 = vmatpush1.msra.mxu0 0.0
    %808 = vmatprep.subr.mxu0 0.0
    %809 = vmatpush1.msra.mxu0 0.0
    %810 = vmatprep.subr.mxu0 0.0
    %811 = vmatpush1.msra.mxu0 0.0
    %812 = vmatprep.subr.mxu0 0.0
    %813 = vmatpush1.msra.mxu0 0.0
    %814 = vmatprep.subr.mxu0 0.0
    %815 = vmatpush1.msra.mxu0 0.0
    %816 = vmatprep.subr.mxu0 0.0
    %817 = vmatpush1.msra.mxu0 0.0
    %818 = vmatprep.subr.mxu0 0.0
    %819 = vmatpush1.msra.mxu0 0.0
    %820 = vmatprep.subr.mxu0 0.0
    %821 = vmatpush1.msra.mxu0 0.0
    %822 = vmatprep.subr.mxu0 0.0
    %823 = vmatpush1.msra.mxu0 0.0
    %824 = vmatprep.subr.mxu0 0.0
    %825 = vmatpush1.msra.mxu0 0.0
    %826 = vmatprep.subr.mxu0 0.0
    %827 = vmatpush1.msra.mxu0 0.0
    %828 = vmatprep.subr.mxu0 0.0
    %829 = vmatpush1.msra.mxu0 0.0
    %830 = vmatprep.subr.mxu0 0.0
    %831 = vmatpush1.msra.mxu0 0.0
    %832 = vmatprep.subr.mxu0 0.0
    %833 = vmatpush1.msra.mxu0 0.0
    %834 = vmatprep.subr.mxu0 0.0
    %835 = vmatpush1.msra.mxu0 0.0
    %836 = vmatprep.subr.mxu0 0.0
    %837 = vmatpush1.msra.mxu0 0.0
    %838 = vmatprep.subr.mxu0 0.0
    %839 = vmatpush1.msra.mxu0 0.0
    %840 = vmatprep.mubr.f32.mxu0 0.0
    %841 = vmatmul.mubr.f32.gmra.mrb[0].mxu0 %v774
    %v842 = vpop.f32.mrb[0].mxu0
    %v843 = vadd.f32 0.0, %v842
    %v844 = vpop.f32.mrb[0].mxu0
    %845 = vdwg.mxu0
    %v847 = vsel %vm182, %v767, 0
    %v850 = vsel %vm182, %v843, 0
    %852 = vmatprep.subr.mxu0 0.0
    %853 = vmatpush1.msra.mxu0 %v70
    %854 = vmatprep.subr.mxu0 0.0
    %855 = vmatpush1.msra.mxu0 0.0
    %856 = vmatprep.subr.mxu0 0.0
    %857 = vmatpush1.msra.mxu0 0.0
    %858 = vmatprep.subr.mxu0 0.0
    %859 = vmatpush1.msra.mxu0 0.0
    %860 = vmatprep.subr.mxu0 0.0
    %861 = vmatpush1.msra.mxu0 0.0
    %862 = vmatprep.subr.mxu0 0.0
    %863 = vmatpush1.msra.mxu0 0.0
    %864 = vmatprep.subr.mxu0 0.0
    %865 = vmatpush1.msra.mxu0 0.0
    %866 = vmatprep.subr.mxu0 0.0
    %867 = vmatpush1.msra.mxu0 0.0
    %868 = vmatprep.subr.mxu0 0.0
    %869 = vmatpush1.msra.mxu0 0.0
    %870 = vmatprep.subr.mxu0 0.0
    %871 = vmatpush1.msra.mxu0 0.0
    %872 = vmatprep.subr.mxu0 0.0
    %873 = vmatpush1.msra.mxu0 0.0
    %874 = vmatprep.subr.mxu0 0.0
    %875 = vmatpush1.msra.mxu0 0.0
    %876 = vmatprep.subr.mxu0 0.0
    %877 = vmatpush1.msra.mxu0 0.0
    %878 = vmatprep.subr.mxu0 0.0
    %879 = vmatpush1.msra.mxu0 0.0
    %880 = vmatprep.subr.mxu0 0.0
    %881 = vmatpush1.msra.mxu0 0.0
    %882 = vmatprep.subr.mxu0 0.0
    %883 = vmatpush1.msra.mxu0 0.0
    %884 = vmatprep.subr.mxu0 0.0
    %885 = vmatpush1.msra.mxu0 0.0
    %886 = vmatprep.subr.mxu0 0.0
    %887 = vmatpush1.msra.mxu0 0.0
    %888 = vmatprep.subr.mxu0 0.0
    %889 = vmatpush1.msra.mxu0 0.0
    %890 = vmatprep.subr.mxu0 0.0
    %891 = vmatpush1.msra.mxu0 0.0
    %892 = vmatprep.subr.mxu0 0.0
    %893 = vmatpush1.msra.mxu0 0.0
    %894 = vmatprep.subr.mxu0 0.0
    %895 = vmatpush1.msra.mxu0 0.0
    %896 = vmatprep.subr.mxu0 0.0
    %897 = vmatpush1.msra.mxu0 0.0
    %898 = vmatprep.subr.mxu0 0.0
    %899 = vmatpush1.msra.mxu0 0.0
    %900 = vmatprep.subr.mxu0 0.0
    %901 = vmatpush1.msra.mxu0 0.0
    %902 = vmatprep.subr.mxu0 0.0
    %903 = vmatpush1.msra.mxu0 0.0
    %904 = vmatprep.subr.mxu0 0.0
    %905 = vmatpush1.msra.mxu0 0.0
    %906 = vmatprep.subr.mxu0 0.0
    %907 = vmatpush1.msra.mxu0 0.0
    %908 = vmatprep.subr.mxu0 0.0
    %909 = vmatpush1.msra.mxu0 0.0
    %910 = vmatprep.subr.mxu0 0.0
    %911 = vmatpush1.msra.mxu0 0.0
    %912 = vmatprep.subr.mxu0 0.0
    %913 = vmatpush1.msra.mxu0 0.0
    %914 = vmatprep.subr.mxu0 0.0
    %915 = vmatpush1.msra.mxu0 0.0
    %916 = vmatprep.mubr.f32.mxu0 0.0
    %917 = vmatmul.mubr.f32.gmra.mrb[0].mxu0 %v847
    %v918 = vpop.f32.mrb[0].mxu0
    %v919 = vadd.f32 0.0, %v918
    %v920 = vpop.f32.mrb[0].mxu0
    %921 = vmatprep.mubr.f32.mxu0 0.0
    %922 = vmatmul.mubr.f32.gmra.mrb[0].mxu0 %v850
    %v923 = vpop.f32.mrb[0].mxu0
    %v924 = vadd.f32 0.0, %v923
    %v925 = vpop.f32.mrb[0].mxu0
    %926 = vdwg.mxu0
    %v928 = vsel %vm182, %v433, 0
    %v931 = vsel %vm182, %v509, 0
    %933 = vmatprep.subr.mxu0 0.0
    %934 = vmatpush1.msra.mxu0 %v69
    %935 = vmatprep.subr.mxu0 0.0
    %936 = vmatpush1.msra.mxu0 0.0
    %937 = vmatprep.subr.mxu0 0.0
    %938 = vmatpush1.msra.mxu0 0.0
    %939 = vmatprep.subr.mxu0 0.0
    %940 = vmatpush1.msra.mxu0 0.0
    %941 = vmatprep.subr.mxu0 0.0
    %942 = vmatpush1.msra.mxu0 0.0
    %943 = vmatprep.subr.mxu0 0.0
    %944 = vmatpush1.msra.mxu0 0.0
    %945 = vmatprep.subr.mxu0 0.0
    %946 = vmatpush1.msra.mxu0 0.0
    %947 = vmatprep.subr.mxu0 0.0
    %948 = vmatpush1.msra.mxu0 0.0
    %949 = vmatprep.subr.mxu0 0.0
    %950 = vmatpush1.msra.mxu0 0.0
    %951 = vmatprep.subr.mxu0 0.0
    %952 = vmatpush1.msra.mxu0 0.0
    %953 = vmatprep.subr.mxu0 0.0
    %954 = vmatpush1.msra.mxu0 0.0
    %955 = vmatprep.subr.mxu0 0.0
    %956 = vmatpush1.msra.mxu0 0.0
    %957 = vmatprep.subr.mxu0 0.0
    %958 = vmatpush1.msra.mxu0 0.0
    %959 = vmatprep.subr.mxu0 0.0
    %960 = vmatpush1.msra.mxu0 0.0
    %961 = vmatprep.subr.mxu0 0.0
    %962 = vmatpush1.msra.mxu0 0.0
    %963 = vmatprep.subr.mxu0 0.0
    %964 = vmatpush1.msra.mxu0 0.0
    %965 = vmatprep.subr.mxu0 0.0
    %966 = vmatpush1.msra.mxu0 0.0
    %967 = vmatprep.subr.mxu0 0.0
    %968 = vmatpush1.msra.mxu0 0.0
    %969 = vmatprep.subr.mxu0 0.0
    %970 = vmatpush1.msra.mxu0 0.0
    %971 = vmatprep.subr.mxu0 0.0
    %972 = vmatpush1.msra.mxu0 0.0
    %973 = vmatprep.subr.mxu0 0.0
    %974 = vmatpush1.msra.mxu0 0.0
    %975 = vmatprep.subr.mxu0 0.0
    %976 = vmatpush1.msra.mxu0 0.0
    %977 = vmatprep.subr.mxu0 0.0
    %978 = vmatpush1.msra.mxu0 0.0
    %979 = vmatprep.subr.mxu0 0.0
    %980 = vmatpush1.msra.mxu0 0.0
    %981 = vmatprep.subr.mxu0 0.0
    %982 = vmatpush1.msra.mxu0 0.0
    %983 = vmatprep.subr.mxu0 0.0
    %984 = vmatpush1.msra.mxu0 0.0
    %985 = vmatprep.subr.mxu0 0.0
    %986 = vmatpush1.msra.mxu0 0.0
    %987 = vmatprep.subr.mxu0 0.0
    %988 = vmatpush1.msra.mxu0 0.0
    %989 = vmatprep.subr.mxu0 0.0
    %990 = vmatpush1.msra.mxu0 0.0
    %991 = vmatprep.subr.mxu0 0.0
    %992 = vmatpush1.msra.mxu0 0.0
    %993 = vmatprep.subr.mxu0 0.0
    %994 = vmatpush1.msra.mxu0 0.0
    %995 = vmatprep.subr.mxu0 0.0
    %996 = vmatpush1.msra.mxu0 0.0
    %997 = vmatprep.mubr.f32.mxu0 0.0
    %998 = vmatmul.mubr.f32.gmra.mrb[0].mxu0 %v928
    %v999 = vpop.f32.mrb[0].mxu0
    %v1000 = vadd.f32 %v919, %v999
    %v1001 = vpop.f32.mrb[0].mxu0
    %1002 = vmatprep.mubr.f32.mxu0 0.0
    %1003 = vmatmul.mubr.f32.gmra.mrb[0].mxu0 %v931
    %v1004 = vpop.f32.mrb[0].mxu0
    %v1005 = vadd.f32 %v924, %v1004
    %v1006 = vpop.f32.mrb[0].mxu0
    %1007 = vdwg.mxu0
    %1008 = vrot.lane.b32.xlu0 %v171, 112
    %v1009 = vpop.permute.xlu0 %1008
    %1010 = vrot.lane.b32.xlu0 %v171, 80
    %v1011 = vpop.permute.xlu0 %1010
    %v1012 = vsel %vm182, %v1009, 0
    %v1014 = vsel %vm182, %v1011, 0
    %1016 = vmatprep.subr.mxu0 0.0
    %1017 = vmatpush1.xpose.msra.mxu0 %v1014
    %1018 = vmatprep.subr.mxu0 0.0
    %1019 = vmatpush1.xpose.msra.mxu0 0.0
    %1020 = vmatprep.subr.mxu0 0.0
    %1021 = vmatpush1.xpose.msra.mxu0 0.0
    %1022 = vmatprep.subr.mxu0 0.0
    %1023 = vmatpush1.xpose.msra.mxu0 0.0
    %1024 = vmatprep.subr.mxu0 0.0
    %1025 = vmatpush1.xpose.msra.mxu0 0.0
    %1026 = vmatprep.subr.mxu0 0.0
    %1027 = vmatpush1.xpose.msra.mxu0 0.0
    %1028 = vmatprep.subr.mxu0 0.0
    %1029 = vmatpush1.xpose.msra.mxu0 0.0
    %1030 = vmatprep.subr.mxu0 0.0
    %1031 = vmatpush1.xpose.msra.mxu0 0.0
    %1032 = vmatprep.subr.mxu0 0.0
    %1033 = vmatpush1.xpose.msra.mxu0 0.0
    %1034 = vmatprep.subr.mxu0 0.0
    %1035 = vmatpush1.xpose.msra.mxu0 0.0
    %1036 = vmatprep.subr.mxu0 0.0
    %1037 = vmatpush1.xpose.msra.mxu0 0.0
    %1038 = vmatprep.subr.mxu0 0.0
    %1039 = vmatpush1.xpose.msra.mxu0 0.0
    %1040 = vmatprep.subr.mxu0 0.0
    %1041 = vmatpush1.xpose.msra.mxu0 0.0
    %1042 = vmatprep.subr.mxu0 0.0
    %1043 = vmatpush1.xpose.msra.mxu0 0.0
    %1044 = vmatprep.subr.mxu0 0.0
    %1045 = vmatpush1.xpose.msra.mxu0 0.0
    %1046 = vmatprep.subr.mxu0 0.0
    %1047 = vmatpush1.xpose.msra.mxu0 0.0
    %1048 = vmatprep.subr.mxu0 0.0
    %1049 = vmatpush1.xpose.msra.mxu0 0.0
    %1050 = vmatprep.subr.mxu0 0.0
    %1051 = vmatpush1.xpose.msra.mxu0 0.0
    %1052 = vmatprep.subr.mxu0 0.0
    %1053 = vmatpush1.xpose.msra.mxu0 0.0
    %1054 = vmatprep.subr.mxu0 0.0
    %1055 = vmatpush1.xpose.msra.mxu0 0.0
    %1056 = vmatprep.subr.mxu0 0.0
    %1057 = vmatpush1.xpose.msra.mxu0 0.0
    %1058 = vmatprep.subr.mxu0 0.0
    %1059 = vmatpush1.xpose.msra.mxu0 0.0
    %1060 = vmatprep.subr.mxu0 0.0
    %1061 = vmatpush1.xpose.msra.mxu0 0.0
    %1062 = vmatprep.subr.mxu0 0.0
    %1063 = vmatpush1.xpose.msra.mxu0 0.0
    %1064 = vmatprep.subr.mxu0 0.0
    %1065 = vmatpush1.xpose.msra.mxu0 0.0
    %1066 = vmatprep.subr.mxu0 0.0
    %1067 = vmatpush1.xpose.msra.mxu0 0.0
    %1068 = vmatprep.subr.mxu0 0.0
    %1069 = vmatpush1.xpose.msra.mxu0 0.0
    %1070 = vmatprep.subr.mxu0 0.0
    %1071 = vmatpush1.xpose.msra.mxu0 0.0
    %1072 = vmatprep.subr.mxu0 0.0
    %1073 = vmatpush1.xpose.msra.mxu0 0.0
    %1074 = vmatprep.subr.mxu0 0.0
    %1075 = vmatpush1.xpose.msra.mxu0 0.0
    %1076 = vmatprep.subr.mxu0 0.0
    %1077 = vmatpush1.xpose.msra.mxu0 0.0
    %1078 = vmatprep.subr.mxu0 0.0
    %1079 = vmatpush1.xpose.msra.mxu0 0.0
    %1080 = vmatprep.mubr.f32.mxu0 0.0
    %1081 = vmatmul.mubr.f32.gmra.mrb[0].mxu0 %v1012
    %v1082 = vpop.f32.mrb[0].mxu0
    %v1083 = vadd.f32 0.0, %v1082
    %v1084 = vpop.f32.mrb[0].mxu0
    %1085 = vdwg.mxu0
    %1086 = vrot.lane.b32.xlu0 %v176, 112
    %v1087 = vpop.permute.xlu0 %1086
    %1088 = vrot.lane.b32.xlu0 %v176, 80
    %v1089 = vpop.permute.xlu0 %1088
    %v1090 = vsel %vm182, %v1087, 0
    %v1092 = vsel %vm182, %v1089, 0
    %1094 = vmatprep.subr.mxu0 0.0
    %1095 = vmatpush1.xpose.msra.mxu0 %v1092
    %1096 = vmatprep.subr.mxu0 0.0
    %1097 = vmatpush1.xpose.msra.mxu0 0.0
    %1098 = vmatprep.subr.mxu0 0.0
    %1099 = vmatpush1.xpose.msra.mxu0 0.0
    %1100 = vmatprep.subr.mxu0 0.0
    %1101 = vmatpush1.xpose.msra.mxu0 0.0
    %1102 = vmatprep.subr.mxu0 0.0
    %1103 = vmatpush1.xpose.msra.mxu0 0.0
    %1104 = vmatprep.subr.mxu0 0.0
    %1105 = vmatpush1.xpose.msra.mxu0 0.0
    %1106 = vmatprep.subr.mxu0 0.0
    %1107 = vmatpush1.xpose.msra.mxu0 0.0
    %1108 = vmatprep.subr.mxu0 0.0
    %1109 = vmatpush1.xpose.msra.mxu0 0.0
    %1110 = vmatprep.subr.mxu0 0.0
    %1111 = vmatpush1.xpose.msra.mxu0 0.0
    %1112 = vmatprep.subr.mxu0 0.0
    %1113 = vmatpush1.xpose.msra.mxu0 0.0
    %1114 = vmatprep.subr.mxu0 0.0
    %1115 = vmatpush1.xpose.msra.mxu0 0.0
    %1116 = vmatprep.subr.mxu0 0.0
    %1117 = vmatpush1.xpose.msra.mxu0 0.0
    %1118 = vmatprep.subr.mxu0 0.0
    %1119 = vmatpush1.xpose.msra.mxu0 0.0
    %1120 = vmatprep.subr.mxu0 0.0
    %1121 = vmatpush1.xpose.msra.mxu0 0.0
    %1122 = vmatprep.subr.mxu0 0.0
    %1123 = vmatpush1.xpose.msra.mxu0 0.0
    %1124 = vmatprep.subr.mxu0 0.0
    %1125 = vmatpush1.xpose.msra.mxu0 0.0
    %1126 = vmatprep.subr.mxu0 0.0
    %1127 = vmatpush1.xpose.msra.mxu0 0.0
    %1128 = vmatprep.subr.mxu0 0.0
    %1129 = vmatpush1.xpose.msra.mxu0 0.0
    %1130 = vmatprep.subr.mxu0 0.0
    %1131 = vmatpush1.xpose.msra.mxu0 0.0
    %1132 = vmatprep.subr.mxu0 0.0
    %1133 = vmatpush1.xpose.msra.mxu0 0.0
    %1134 = vmatprep.subr.mxu0 0.0
    %1135 = vmatpush1.xpose.msra.mxu0 0.0
    %1136 = vmatprep.subr.mxu0 0.0
    %1137 = vmatpush1.xpose.msra.mxu0 0.0
    %1138 = vmatprep.subr.mxu0 0.0
    %1139 = vmatpush1.xpose.msra.mxu0 0.0
    %1140 = vmatprep.subr.mxu0 0.0
    %1141 = vmatpush1.xpose.msra.mxu0 0.0
    %1142 = vmatprep.subr.mxu0 0.0
    %1143 = vmatpush1.xpose.msra.mxu0 0.0
    %1144 = vmatprep.subr.mxu0 0.0
    %1145 = vmatpush1.xpose.msra.mxu0 0.0
    %1146 = vmatprep.subr.mxu0 0.0
    %1147 = vmatpush1.xpose.msra.mxu0 0.0
    %1148 = vmatprep.subr.mxu0 0.0
    %1149 = vmatpush1.xpose.msra.mxu0 0.0
    %1150 = vmatprep.subr.mxu0 0.0
    %1151 = vmatpush1.xpose.msra.mxu0 0.0
    %1152 = vmatprep.subr.mxu0 0.0
    %1153 = vmatpush1.xpose.msra.mxu0 0.0
    %1154 = vmatprep.subr.mxu0 0.0
    %1155 = vmatpush1.xpose.msra.mxu0 0.0
    %1156 = vmatprep.subr.mxu0 0.0
    %1157 = vmatpush1.xpose.msra.mxu0 0.0
    %1158 = vmatprep.mubr.f32.mxu0 0.0
    %1159 = vmatmul.mubr.f32.gmra.mrb[0].mxu0 %v1090
    %v1160 = vpop.f32.mrb[0].mxu0
    %v1161 = vadd.f32 0.0, %v1160
    %v1162 = vpop.f32.mrb[0].mxu0
    %1163 = vdwg.mxu0
    %v1164 = vmul.f32 %v1083, 0.35355338
    %v1165 = vmul.f32 %v1161, 0.35355338
    %v1166 = vadd.f32 %v1164, %v56
    %v1167 = vadd.f32 %v1165, %v60
    %v1168 = vsel %vm182, %v1166, -inf
    %1169 = vmax.xlane.f32.xlu0 %v1168
    %v1170 = vpop.xlane.xlu0 %1169
    %v1171 = vsel %vm182, %v1167, -inf
    %1172 = vmax.xlane.f32.xlu0 %v1171
    %v1173 = vpop.xlane.xlu0 %1172
    %v1174 = vsub.f32 %v1166, %v1170
    %v1175 = vsub.f32 %v1167, %v1173
    %v1176 = vmul.f32 %v1174, 1.442695
    %v1177 = vpow.pop %v1176
    %v1178 = vmul.f32 %v1175, 1.442695
    %v1179 = vpow.pop %v1178
    %v1180 = vsel %vm182, %v1177, 0.0
    %1181 = vadd.xlane.f32.xlu0 %v1180
    %v1182 = vpop.xlane.xlu0 %1181
    %v1183 = vsel %vm182, %v1179, 0.0
    %1184 = vadd.xlane.f32.xlu0 %v1183
    %v1185 = vpop.xlane.xlu0 %1184
    %v1186 = vrcp.pop %v1182
    %v1187 = vrcp.pop %v1185
    %v1188 = vmul.f32 %v1177, %v1186
    %v1189 = vmul.f32 %v1179, %v1187
    %1190 = vrot.lane.b32.xlu0 %v171, 48
    %v1191 = vpop.permute.xlu0 %1190
    %v1194 = vsel %vm182, %v1188, 0
    %1196 = vmatprep.subr.mxu0 0.0
    %1197 = vmatpush1.msra.mxu0 %v1191
    %1198 = vmatprep.subr.mxu0 0.0
    %1199 = vmatpush1.msra.mxu0 0.0
    %1200 = vmatprep.subr.mxu0 0.0
    %1201 = vmatpush1.msra.mxu0 0.0
    %1202 = vmatprep.subr.mxu0 0.0
    %1203 = vmatpush1.msra.mxu0 0.0
    %1204 = vmatprep.subr.mxu0 0.0
    %1205 = vmatpush1.msra.mxu0 0.0
    %1206 = vmatprep.subr.mxu0 0.0
    %1207 = vmatpush1.msra.mxu0 0.0
    %1208 = vmatprep.subr.mxu0 0.0
    %1209 = vmatpush1.msra.mxu0 0.0
    %1210 = vmatprep.subr.mxu0 0.0
    %1211 = vmatpush1.msra.mxu0 0.0
    %1212 = vmatprep.subr.mxu0 0.0
    %1213 = vmatpush1.msra.mxu0 0.0
    %1214 = vmatprep.subr.mxu0 0.0
    %1215 = vmatpush1.msra.mxu0 0.0
    %1216 = vmatprep.subr.mxu0 0.0
    %1217 = vmatpush1.msra.mxu0 0.0
    %1218 = vmatprep.subr.mxu0 0.0
    %1219 = vmatpush1.msra.mxu0 0.0
    %1220 = vmatprep.subr.mxu0 0.0
    %1221 = vmatpush1.msra.mxu0 0.0
    %1222 = vmatprep.subr.mxu0 0.0
    %1223 = vmatpush1.msra.mxu0 0.0
    %1224 = vmatprep.subr.mxu0 0.0
    %1225 = vmatpush1.msra.mxu0 0.0
    %1226 = vmatprep.subr.mxu0 0.0
    %1227 = vmatpush1.msra.mxu0 0.0
    %1228 = vmatprep.subr.mxu0 0.0
    %1229 = vmatpush1.msra.mxu0 0.0
    %1230 = vmatprep.subr.mxu0 0.0
    %1231 = vmatpush1.msra.mxu0 0.0
    %1232 = vmatprep.subr.mxu0 0.0
    %1233 = vmatpush1.msra.mxu0 0.0
    %1234 = vmatprep.subr.mxu0 0.0
    %1235 = vmatpush1.msra.mxu0 0.0
    %1236 = vmatprep.subr.mxu0 0.0
    %1237 = vmatpush1.msra.mxu0 0.0
    %1238 = vmatprep.subr.mxu0 0.0
    %1239 = vmatpush1.msra.mxu0 0.0
    %1240 = vmatprep.subr.mxu0 0.0
    %1241 = vmatpush1.msra.mxu0 0.0
    %1242 = vmatprep.subr.mxu0 0.0
    %1243 = vmatpush1.msra.mxu0 0.0
    %1244 = vmatprep.subr.mxu0 0.0
    %1245 = vmatpush1.msra.mxu0 0.0
    %1246 = vmatprep.subr.mxu0 0.0
    %1247 = vmatpush1.msra.mxu0 0.0
    %1248 = vmatprep.subr.mxu0 0.0
    %1249 = vmatpush1.msra.mxu0 0.0
    %1250 = vmatprep.subr.mxu0 0.0
    %1251 = vmatpush1.msra.mxu0 0.0
    %1252 = vmatprep.subr.mxu0 0.0
    %1253 = vmatpush1.msra.mxu0 0.0
    %1254 = vmatprep.subr.mxu0 0.0
    %1255 = vmatpush1.msra.mxu0 0.0
    %1256 = vmatprep.subr.mxu0 0.0
    %1257 = vmatpush1.msra.mxu0 0.0
    %1258 = vmatprep.subr.mxu0 0.0
    %1259 = vmatpush1.msra.mxu0 0.0
    %1260 = vmatprep.mubr.f32.mxu0 0.0
    %1261 = vmatmul.mubr.f32.gmra.mrb[0].mxu0 %v1194
    %v1262 = vpop.f32.mrb[0].mxu0
    %v1263 = vadd.f32 0.0, %v1262
    %v1264 = vpop.f32.mrb[0].mxu0
    %1265 = vdwg.mxu0
    %1266 = vrot.lane.b32.xlu0 %v176, 48
    %v1267 = vpop.permute.xlu0 %1266
    %v1270 = vsel %vm182, %v1189, 0
    %1272 = vmatprep.subr.mxu0 0.0
    %1273 = vmatpush1.msra.mxu0 %v1267
    %1274 = vmatprep.subr.mxu0 0.0
    %1275 = vmatpush1.msra.mxu0 0.0
    %1276 = vmatprep.subr.mxu0 0.0
    %1277 = vmatpush1.msra.mxu0 0.0
    %1278 = vmatprep.subr.mxu0 0.0
    %1279 = vmatpush1.msra.mxu0 0.0
    %1280 = vmatprep.subr.mxu0 0.0
    %1281 = vmatpush1.msra.mxu0 0.0
    %1282 = vmatprep.subr.mxu0 0.0
    %1283 = vmatpush1.msra.mxu0 0.0
    %1284 = vmatprep.subr.mxu0 0.0
    %1285 = vmatpush1.msra.mxu0 0.0
    %1286 = vmatprep.subr.mxu0 0.0
    %1287 = vmatpush1.msra.mxu0 0.0
    %1288 = vmatprep.subr.mxu0 0.0
    %1289 = vmatpush1.msra.mxu0 0.0
    %1290 = vmatprep.subr.mxu0 0.0
    %1291 = vmatpush1.msra.mxu0 0.0
    %1292 = vmatprep.subr.mxu0 0.0
    %1293 = vmatpush1.msra.mxu0 0.0
    %1294 = vmatprep.subr.mxu0 0.0
    %1295 = vmatpush1.msra.mxu0 0.0
    %1296 = vmatprep.subr.mxu0 0.0
    %1297 = vmatpush1.msra.mxu0 0.0
    %1298 = vmatprep.subr.mxu0 0.0
    %1299 = vmatpush1.msra.mxu0 0.0
    %1300 = vmatprep.subr.mxu0 0.0
    %1301 = vmatpush1.msra.mxu0 0.0
    %1302 = vmatprep.subr.mxu0 0.0
    %1303 = vmatpush1.msra.mxu0 0.0
    %1304 = vmatprep.subr.mxu0 0.0
    %1305 = vmatpush1.msra.mxu0 0.0
    %1306 = vmatprep.subr.mxu0 0.0
    %1307 = vmatpush1.msra.mxu0 0.0
    %1308 = vmatprep.subr.mxu0 0.0
    %1309 = vmatpush1.msra.mxu0 0.0
    %1310 = vmatprep.subr.mxu0 0.0
    %1311 = vmatpush1.msra.mxu0 0.0
    %1312 = vmatprep.subr.mxu0 0.0
    %1313 = vmatpush1.msra.mxu0 0.0
    %1314 = vmatprep.subr.mxu0 0.0
    %1315 = vmatpush1.msra.mxu0 0.0
    %1316 = vmatprep.subr.mxu0 0.0
    %1317 = vmatpush1.msra.mxu0 0.0
    %1318 = vmatprep.subr.mxu0 0.0
    %1319 = vmatpush1.msra.mxu0 0.0
    %1320 = vmatprep.subr.mxu0 0.0
    %1321 = vmatpush1.msra.mxu0 0.0
    %1322 = vmatprep.subr.mxu0 0.0
    %1323 = vmatpush1.msra.mxu0 0.0
    %1324 = vmatprep.subr.mxu0 0.0
    %1325 = vmatpush1.msra.mxu0 0.0
    %1326 = vmatprep.subr.mxu0 0.0
    %1327 = vmatpush1.msra.mxu0 0.0
    %1328 = vmatprep.subr.mxu0 0.0
    %1329 = vmatpush1.msra.mxu0 0.0
    %1330 = vmatprep.subr.mxu0 0.0
    %1331 = vmatpush1.msra.mxu0 0.0
    %1332 = vmatprep.subr.mxu0 0.0
    %1333 = vmatpush1.msra.mxu0 0.0
    %1334 = vmatprep.subr.mxu0 0.0
    %1335 = vmatpush1.msra.mxu0 0.0
    %1336 = vmatprep.mubr.f32.mxu0 0.0
    %1337 = vmatmul.mubr.f32.gmra.mrb[0].mxu0 %v1270
    %v1338 = vpop.f32.mrb[0].mxu0
    %v1339 = vadd.f32 0.0, %v1338
    %v1340 = vpop.f32.mrb[0].mxu0
    %1341 = vdwg.mxu0
    %v1343 = vsel %vm182, %v1263, 0
    %v1346 = vsel %vm182, %v1339, 0
    %1348 = vmatprep.subr.mxu0 0.0
    %1349 = vmatpush1.msra.mxu0 %v71
    %1350 = vmatprep.subr.mxu0 0.0
    %1351 = vmatpush1.msra.mxu0 0.0
    %1352 = vmatprep.subr.mxu0 0.0
    %1353 = vmatpush1.msra.mxu0 0.0
    %1354 = vmatprep.subr.mxu0 0.0
    %1355 = vmatpush1.msra.mxu0 0.0
    %1356 = vmatprep.subr.mxu0 0.0
    %1357 = vmatpush1.msra.mxu0 0.0
    %1358 = vmatprep.subr.mxu0 0.0
    %1359 = vmatpush1.msra.mxu0 0.0
    %1360 = vmatprep.subr.mxu0 0.0
    %1361 = vmatpush1.msra.mxu0 0.0
    %1362 = vmatprep.subr.mxu0 0.0
    %1363 = vmatpush1.msra.mxu0 0.0
    %1364 = vmatprep.subr.mxu0 0.0
    %1365 = vmatpush1.msra.mxu0 0.0
    %1366 = vmatprep.subr.mxu0 0.0
    %1367 = vmatpush1.msra.mxu0 0.0
    %1368 = vmatprep.subr.mxu0 0.0
    %1369 = vmatpush1.msra.mxu0 0.0
    %1370 = vmatprep.subr.mxu0 0.0
    %1371 = vmatpush1.msra.mxu0 0.0
    %1372 = vmatprep.subr.mxu0 0.0
    %1373 = vmatpush1.msra.mxu0 0.0
    %1374 = vmatprep.subr.mxu0 0.0
    %1375 = vmatpush1.msra.mxu0 0.0
    %1376 = vmatprep.subr.mxu0 0.0
    %1377 = vmatpush1.msra.mxu0 0.0
    %1378 = vmatprep.subr.mxu0 0.0
    %1379 = vmatpush1.msra.mxu0 0.0
    %1380 = vmatprep.subr.mxu0 0.0
    %1381 = vmatpush1.msra.mxu0 0.0
    %1382 = vmatprep.subr.mxu0 0.0
    %1383 = vmatpush1.msra.mxu0 0.0
    %1384 = vmatprep.subr.mxu0 0.0
    %1385 = vmatpush1.msra.mxu0 0.0
    %1386 = vmatprep.subr.mxu0 0.0
    %1387 = vmatpush1.msra.mxu0 0.0
    %1388 = vmatprep.subr.mxu0 0.0
    %1389 = vmatpush1.msra.mxu0 0.0
    %1390 = vmatprep.subr.mxu0 0.0
    %1391 = vmatpush1.msra.mxu0 0.0
    %1392 = vmatprep.subr.mxu0 0.0
    %1393 = vmatpush1.msra.mxu0 0.0
    %1394 = vmatprep.subr.mxu0 0.0
    %1395 = vmatpush1.msra.mxu0 0.0
    %1396 = vmatprep.subr.mxu0 0.0
    %1397 = vmatpush1.msra.mxu0 0.0
    %1398 = vmatprep.subr.mxu0 0.0
    %1399 = vmatpush1.msra.mxu0 0.0
    %1400 = vmatprep.subr.mxu0 0.0
    %1401 = vmatpush1.msra.mxu0 0.0
    %1402 = vmatprep.subr.mxu0 0.0
    %1403 = vmatpush1.msra.mxu0 0.0
    %1404 = vmatprep.subr.mxu0 0.0
    %1405 = vmatpush1.msra.mxu0 0.0
    %1406 = vmatprep.subr.mxu0 0.0
    %1407 = vmatpush1.msra.mxu0 0.0
    %1408 = vmatprep.subr.mxu0 0.0
    %1409 = vmatpush1.msra.mxu0 0.0
    %1410 = vmatprep.subr.mxu0 0.0
    %1411 = vmatpush1.msra.mxu0 0.0
    %1412 = vmatprep.mubr.f32.mxu0 0.0
    %1413 = vmatmul.mubr.f32.gmra.mrb[0].mxu0 %v1343
    %v1414 = vpop.f32.mrb[0].mxu0
    %v1415 = vadd.f32 0.0, %v1414
    %v1416 = vpop.f32.mrb[0].mxu0
    %1417 = vmatprep.mubr.f32.mxu0 0.0
    %1418 = vmatmul.mubr.f32.gmra.mrb[0].mxu0 %v1346
    %v1419 = vpop.f32.mrb[0].mxu0
    %v1420 = vadd.f32 0.0, %v1419
    %v1421 = vpop.f32.mrb[0].mxu0
    %1422 = vdwg.mxu0
    %v1423 = vadd.f32 %v1000, %v1415
    %v1424 = vadd.f32 %v1005, %v1420
    %1425 = vrot.lane.b32.xlu0 %v171, 104
    %v1426 = vpop.permute.xlu0 %1425
    %1427 = vrot.lane.b32.xlu0 %v171, 72
    %v1428 = vpop.permute.xlu0 %1427
    %v1429 = vsel %vm182, %v1426, 0
    %v1431 = vsel %vm182, %v1428, 0
    %1433 = vmatprep.subr.mxu0 0.0
    %1434 = vmatpush1.xpose.msra.mxu0 %v1431
    %1435 = vmatprep.subr.mxu0 0.0
    %1436 = vmatpush1.xpose.msra.mxu0 0.0
    %1437 = vmatprep.subr.mxu0 0.0
    %1438 = vmatpush1.xpose.msra.mxu0 0.0
    %1439 = vmatprep.subr.mxu0 0.0
    %1440 = vmatpush1.xpose.msra.mxu0 0.0
    %1441 = vmatprep.subr.mxu0 0.0
    %1442 = vmatpush1.xpose.msra.mxu0 0.0
    %1443 = vmatprep.subr.mxu0 0.0
    %1444 = vmatpush1.xpose.msra.mxu0 0.0
    %1445 = vmatprep.subr.mxu0 0.0
    %1446 = vmatpush1.xpose.msra.mxu0 0.0
    %1447 = vmatprep.subr.mxu0 0.0
    %1448 = vmatpush1.xpose.msra.mxu0 0.0
    %1449 = vmatprep.subr.mxu0 0.0
    %1450 = vmatpush1.xpose.msra.mxu0 0.0
    %1451 = vmatprep.subr.mxu0 0.0
    %1452 = vmatpush1.xpose.msra.mxu0 0.0
    %1453 = vmatprep.subr.mxu0 0.0
    %1454 = vmatpush1.xpose.msra.mxu0 0.0
    %1455 = vmatprep.subr.mxu0 0.0
    %1456 = vmatpush1.xpose.msra.mxu0 0.0
    %1457 = vmatprep.subr.mxu0 0.0
    %1458 = vmatpush1.xpose.msra.mxu0 0.0
    %1459 = vmatprep.subr.mxu0 0.0
    %1460 = vmatpush1.xpose.msra.mxu0 0.0
    %1461 = vmatprep.subr.mxu0 0.0
    %1462 = vmatpush1.xpose.msra.mxu0 0.0
    %1463 = vmatprep.subr.mxu0 0.0
    %1464 = vmatpush1.xpose.msra.mxu0 0.0
    %1465 = vmatprep.subr.mxu0 0.0
    %1466 = vmatpush1.xpose.msra.mxu0 0.0
    %1467 = vmatprep.subr.mxu0 0.0
    %1468 = vmatpush1.xpose.msra.mxu0 0.0
    %1469 = vmatprep.subr.mxu0 0.0
    %1470 = vmatpush1.xpose.msra.mxu0 0.0
    %1471 = vmatprep.subr.mxu0 0.0
    %1472 = vmatpush1.xpose.msra.mxu0 0.0
    %1473 = vmatprep.subr.mxu0 0.0
    %1474 = vmatpush1.xpose.msra.mxu0 0.0
    %1475 = vmatprep.subr.mxu0 0.0
    %1476 = vmatpush1.xpose.msra.mxu0 0.0
    %1477 = vmatprep.subr.mxu0 0.0
    %1478 = vmatpush1.xpose.msra.mxu0 0.0
    %1479 = vmatprep.subr.mxu0 0.0
    %1480 = vmatpush1.xpose.msra.mxu0 0.0
    %1481 = vmatprep.subr.mxu0 0.0
    %1482 = vmatpush1.xpose.msra.mxu0 0.0
    %1483 = vmatprep.subr.mxu0 0.0
    %1484 = vmatpush1.xpose.msra.mxu0 0.0
    %1485 = vmatprep.subr.mxu0 0.0
    %1486 = vmatpush1.xpose.msra.mxu0 0.0
    %1487 = vmatprep.subr.mxu0 0.0
    %1488 = vmatpush1.xpose.msra.mxu0 0.0
    %1489 = vmatprep.subr.mxu0 0.0
    %1490 = vmatpush1.xpose.msra.mxu0 0.0
    %1491 = vmatprep.subr.mxu0 0.0
    %1492 = vmatpush1.xpose.msra.mxu0 0.0
    %1493 = vmatprep.subr.mxu0 0.0
    %1494 = vmatpush1.xpose.msra.mxu0 0.0
    %1495 = vmatprep.subr.mxu0 0.0
    %1496 = vmatpush1.xpose.msra.mxu0 0.0
    %1497 = vmatprep.mubr.f32.mxu0 0.0
    %1498 = vmatmul.mubr.f32.gmra.mrb[0].mxu0 %v1429
    %v1499 = vpop.f32.mrb[0].mxu0
    %v1500 = vadd.f32 0.0, %v1499
    %v1501 = vpop.f32.mrb[0].mxu0
    %1502 = vdwg.mxu0
    %1503 = vrot.lane.b32.xlu0 %v176, 104
    %v1504 = vpop.permute.xlu0 %1503
    %1505 = vrot.lane.b32.xlu0 %v176, 72
    %v1506 = vpop.permute.xlu0 %1505
    %v1507 = vsel %vm182, %v1504, 0
    %v1509 = vsel %vm182, %v1506, 0
    %1511 = vmatprep.subr.mxu0 0.0
    %1512 = vmatpush1.xpose.msra.mxu0 %v1509
    %1513 = vmatprep.subr.mxu0 0.0
    %1514 = vmatpush1.xpose.msra.mxu0 0.0
    %1515 = vmatprep.subr.mxu0 0.0
    %1516 = vmatpush1.xpose.msra.mxu0 0.0
    %1517 = vmatprep.subr.mxu0 0.0
    %1518 = vmatpush1.xpose.msra.mxu0 0.0
    %1519 = vmatprep.subr.mxu0 0.0
    %1520 = vmatpush1.xpose.msra.mxu0 0.0
    %1521 = vmatprep.subr.mxu0 0.0
    %1522 = vmatpush1.xpose.msra.mxu0 0.0
    %1523 = vmatprep.subr.mxu0 0.0
    %1524 = vmatpush1.xpose.msra.mxu0 0.0
    %1525 = vmatprep.subr.mxu0 0.0
    %1526 = vmatpush1.xpose.msra.mxu0 0.0
    %1527 = vmatprep.subr.mxu0 0.0
    %1528 = vmatpush1.xpose.msra.mxu0 0.0
    %1529 = vmatprep.subr.mxu0 0.0
    %1530 = vmatpush1.xpose.msra.mxu0 0.0
    %1531 = vmatprep.subr.mxu0 0.0
    %1532 = vmatpush1.xpose.msra.mxu0 0.0
    %1533 = vmatprep.subr.mxu0 0.0
    %1534 = vmatpush1.xpose.msra.mxu0 0.0
    %1535 = vmatprep.subr.mxu0 0.0
    %1536 = vmatpush1.xpose.msra.mxu0 0.0
    %1537 = vmatprep.subr.mxu0 0.0
    %1538 = vmatpush1.xpose.msra.mxu0 0.0
    %1539 = vmatprep.subr.mxu0 0.0
    %1540 = vmatpush1.xpose.msra.mxu0 0.0
    %1541 = vmatprep.subr.mxu0 0.0
    %1542 = vmatpush1.xpose.msra.mxu0 0.0
    %1543 = vmatprep.subr.mxu0 0.0
    %1544 = vmatpush1.xpose.msra.mxu0 0.0
    %1545 = vmatprep.subr.mxu0 0.0
    %1546 = vmatpush1.xpose.msra.mxu0 0.0
    %1547 = vmatprep.subr.mxu0 0.0
    %1548 = vmatpush1.xpose.msra.mxu0 0.0
    %1549 = vmatprep.subr.mxu0 0.0
    %1550 = vmatpush1.xpose.msra.mxu0 0.0
    %1551 = vmatprep.subr.mxu0 0.0
    %1552 = vmatpush1.xpose.msra.mxu0 0.0
    %1553 = vmatprep.subr.mxu0 0.0
    %1554 = vmatpush1.xpose.msra.mxu0 0.0
    %1555 = vmatprep.subr.mxu0 0.0
    %1556 = vmatpush1.xpose.msra.mxu0 0.0
    %1557 = vmatprep.subr.mxu0 0.0
    %1558 = vmatpush1.xpose.msra.mxu0 0.0
    %1559 = vmatprep.subr.mxu0 0.0
    %1560 = vmatpush1.xpose.msra.mxu0 0.0
    %1561 = vmatprep.subr.mxu0 0.0
    %1562 = vmatpush1.xpose.msra.mxu0 0.0
    %1563 = vmatprep.subr.mxu0 0.0
    %1564 = vmatpush1.xpose.msra.mxu0 0.0
    %1565 = vmatprep.subr.mxu0 0.0
    %1566 = vmatpush1.xpose.msra.mxu0 0.0
    %1567 = vmatprep.subr.mxu0 0.0
    %1568 = vmatpush1.xpose.msra.mxu0 0.0
    %1569 = vmatprep.subr.mxu0 0.0
    %1570 = vmatpush1.xpose.msra.mxu0 0.0
    %1571 = vmatprep.subr.mxu0 0.0
    %1572 = vmatpush1.xpose.msra.mxu0 0.0
    %1573 = vmatprep.subr.mxu0 0.0
    %1574 = vmatpush1.xpose.msra.mxu0 0.0
    %1575 = vmatprep.mubr.f32.mxu0 0.0
    %1576 = vmatmul.mubr.f32.gmra.mrb[0].mxu0 %v1507
    %v1577 = vpop.f32.mrb[0].mxu0
    %v1578 = vadd.f32 0.0, %v1577
    %v1579 = vpop.f32.mrb[0].mxu0
    %1580 = vdwg.mxu0
    %v1581 = vmul.f32 %v1500, 0.35355338
    %v1582 = vmul.f32 %v1578, 0.35355338
    %v1583 = vadd.f32 %v1581, %v56
    %v1584 = vadd.f32 %v1582, %v60
    %v1585 = vsel %vm182, %v1583, -inf
    %1586 = vmax.xlane.f32.xlu0 %v1585
    %v1587 = vpop.xlane.xlu0 %1586
    %v1588 = vsel %vm182, %v1584, -inf
    %1589 = vmax.xlane.f32.xlu0 %v1588
    %v1590 = vpop.xlane.xlu0 %1589
    %v1591 = vsub.f32 %v1583, %v1587
    %v1592 = vsub.f32 %v1584, %v1590
    %v1593 = vmul.f32 %v1591, 1.442695
    %v1594 = vpow.pop %v1593
    %v1595 = vmul.f32 %v1592, 1.442695
    %v1596 = vpow.pop %v1595
    %v1597 = vsel %vm182, %v1594, 0.0
    %1598 = vadd.xlane.f32.xlu0 %v1597
    %v1599 = vpop.xlane.xlu0 %1598
    %v1600 = vsel %vm182, %v1596, 0.0
    %1601 = vadd.xlane.f32.xlu0 %v1600
    %v1602 = vpop.xlane.xlu0 %1601
    %v1603 = vrcp.pop %v1599
    %v1604 = vrcp.pop %v1602
    %v1605 = vmul.f32 %v1594, %v1603
    %v1606 = vmul.f32 %v1596, %v1604
    %1607 = vrot.lane.b32.xlu0 %v171, 40
    %v1608 = vpop.permute.xlu0 %1607
    %v1611 = vsel %vm182, %v1605, 0
    %1613 = vmatprep.subr.mxu0 0.0
    %1614 = vmatpush1.msra.mxu0 %v1608
    %1615 = vmatprep.subr.mxu0 0.0
    %1616 = vmatpush1.msra.mxu0 0.0
    %1617 = vmatprep.subr.mxu0 0.0
    %1618 = vmatpush1.msra.mxu0 0.0
    %1619 = vmatprep.subr.mxu0 0.0
    %1620 = vmatpush1.msra.mxu0 0.0
    %1621 = vmatprep.subr.mxu0 0.0
    %1622 = vmatpush1.msra.mxu0 0.0
    %1623 = vmatprep.subr.mxu0 0.0
    %1624 = vmatpush1.msra.mxu0 0.0
    %1625 = vmatprep.subr.mxu0 0.0
    %1626 = vmatpush1.msra.mxu0 0.0
    %1627 = vmatprep.subr.mxu0 0.0
    %1628 = vmatpush1.msra.mxu0 0.0
    %1629 = vmatprep.subr.mxu0 0.0
    %1630 = vmatpush1.msra.mxu0 0.0
    %1631 = vmatprep.subr.mxu0 0.0
    %1632 = vmatpush1.msra.mxu0 0.0
    %1633 = vmatprep.subr.mxu0 0.0
    %1634 = vmatpush1.msra.mxu0 0.0
    %1635 = vmatprep.subr.mxu0 0.0
    %1636 = vmatpush1.msra.mxu0 0.0
    %1637 = vmatprep.subr.mxu0 0.0
    %1638 = vmatpush1.msra.mxu0 0.0
    %1639 = vmatprep.subr.mxu0 0.0
    %1640 = vmatpush1.msra.mxu0 0.0
    %1641 = vmatprep.subr.mxu0 0.0
    %1642 = vmatpush1.msra.mxu0 0.0
    %1643 = vmatprep.subr.mxu0 0.0
    %1644 = vmatpush1.msra.mxu0 0.0
    %1645 = vmatprep.subr.mxu0 0.0
    %1646 = vmatpush1.msra.mxu0 0.0
    %1647 = vmatprep.subr.mxu0 0.0
    %1648 = vmatpush1.msra.mxu0 0.0
    %1649 = vmatprep.subr.mxu0 0.0
    %1650 = vmatpush1.msra.mxu0 0.0
    %1651 = vmatprep.subr.mxu0 0.0
    %1652 = vmatpush1.msra.mxu0 0.0
    %1653 = vmatprep.subr.mxu0 0.0
    %1654 = vmatpush1.msra.mxu0 0.0
    %1655 = vmatprep.subr.mxu0 0.0
    %1656 = vmatpush1.msra.mxu0 0.0
    %1657 = vmatprep.subr.mxu0 0.0
    %1658 = vmatpush1.msra.mxu0 0.0
    %1659 = vmatprep.subr.mxu0 0.0
    %1660 = vmatpush1.msra.mxu0 0.0
    %1661 = vmatprep.subr.mxu0 0.0
    %1662 = vmatpush1.msra.mxu0 0.0
    %1663 = vmatprep.subr.mxu0 0.0
    %1664 = vmatpush1.msra.mxu0 0.0
    %1665 = vmatprep.subr.mxu0 0.0
    %1666 = vmatpush1.msra.mxu0 0.0
    %1667 = vmatprep.subr.mxu0 0.0
    %1668 = vmatpush1.msra.mxu0 0.0
    %1669 = vmatprep.subr.mxu0 0.0
    %1670 = vmatpush1.msra.mxu0 0.0
    %1671 = vmatprep.subr.mxu0 0.0
    %1672 = vmatpush1.msra.mxu0 0.0
    %1673 = vmatprep.subr.mxu0 0.0
    %1674 = vmatpush1.msra.mxu0 0.0
    %1675 = vmatprep.subr.mxu0 0.0
    %1676 = vmatpush1.msra.mxu0 0.0
    %1677 = vmatprep.mubr.f32.mxu0 0.0
    %1678 = vmatmul.mubr.f32.gmra.mrb[0].mxu0 %v1611
    %v1679 = vpop.f32.mrb[0].mxu0
    %v1680 = vadd.f32 0.0, %v1679
    %v1681 = vpop.f32.mrb[0].mxu0
    %1682 = vdwg.mxu0
    %1683 = vrot.lane.b32.xlu0 %v176, 40
    %v1684 = vpop.permute.xlu0 %1683
    %v1687 = vsel %vm182, %v1606, 0
    %1689 = vmatprep.subr.mxu0 0.0
    %1690 = vmatpush1.msra.mxu0 %v1684
    %1691 = vmatprep.subr.mxu0 0.0
    %1692 = vmatpush1.msra.mxu0 0.0
    %1693 = vmatprep.subr.mxu0 0.0
    %1694 = vmatpush1.msra.mxu0 0.0
    %1695 = vmatprep.subr.mxu0 0.0
    %1696 = vmatpush1.msra.mxu0 0.0
    %1697 = vmatprep.subr.mxu0 0.0
    %1698 = vmatpush1.msra.mxu0 0.0
    %1699 = vmatprep.subr.mxu0 0.0
    %1700 = vmatpush1.msra.mxu0 0.0
    %1701 = vmatprep.subr.mxu0 0.0
    %1702 = vmatpush1.msra.mxu0 0.0
    %1703 = vmatprep.subr.mxu0 0.0
    %1704 = vmatpush1.msra.mxu0 0.0
    %1705 = vmatprep.subr.mxu0 0.0
    %1706 = vmatpush1.msra.mxu0 0.0
    %1707 = vmatprep.subr.mxu0 0.0
    %1708 = vmatpush1.msra.mxu0 0.0
    %1709 = vmatprep.subr.mxu0 0.0
    %1710 = vmatpush1.msra.mxu0 0.0
    %1711 = vmatprep.subr.mxu0 0.0
    %1712 = vmatpush1.msra.mxu0 0.0
    %1713 = vmatprep.subr.mxu0 0.0
    %1714 = vmatpush1.msra.mxu0 0.0
    %1715 = vmatprep.subr.mxu0 0.0
    %1716 = vmatpush1.msra.mxu0 0.0
    %1717 = vmatprep.subr.mxu0 0.0
    %1718 = vmatpush1.msra.mxu0 0.0
    %1719 = vmatprep.subr.mxu0 0.0
    %1720 = vmatpush1.msra.mxu0 0.0
    %1721 = vmatprep.subr.mxu0 0.0
    %1722 = vmatpush1.msra.mxu0 0.0
    %1723 = vmatprep.subr.mxu0 0.0
    %1724 = vmatpush1.msra.mxu0 0.0
    %1725 = vmatprep.subr.mxu0 0.0
    %1726 = vmatpush1.msra.mxu0 0.0
    %1727 = vmatprep.subr.mxu0 0.0
    %1728 = vmatpush1.msra.mxu0 0.0
    %1729 = vmatprep.subr.mxu0 0.0
    %1730 = vmatpush1.msra.mxu0 0.0
    %1731 = vmatprep.subr.mxu0 0.0
    %1732 = vmatpush1.msra.mxu0 0.0
    %1733 = vmatprep.subr.mxu0 0.0
    %1734 = vmatpush1.msra.mxu0 0.0
    %1735 = vmatprep.subr.mxu0 0.0
    %1736 = vmatpush1.msra.mxu0 0.0
    %1737 = vmatprep.subr.mxu0 0.0
    %1738 = vmatpush1.msra.mxu0 0.0
    %1739 = vmatprep.subr.mxu0 0.0
    %1740 = vmatpush1.msra.mxu0 0.0
    %1741 = vmatprep.subr.mxu0 0.0
    %1742 = vmatpush1.msra.mxu0 0.0
    %1743 = vmatprep.subr.mxu0 0.0
    %1744 = vmatpush1.msra.mxu0 0.0
    %1745 = vmatprep.subr.mxu0 0.0
    %1746 = vmatpush1.msra.mxu0 0.0
    %1747 = vmatprep.subr.mxu0 0.0
    %1748 = vmatpush1.msra.mxu0 0.0
    %1749 = vmatprep.subr.mxu0 0.0
    %1750 = vmatpush1.msra.mxu0 0.0
    %1751 = vmatprep.subr.mxu0 0.0
    %1752 = vmatpush1.msra.mxu0 0.0
    %1753 = vmatprep.mubr.f32.mxu0 0.0
    %1754 = vmatmul.mubr.f32.gmra.mrb[0].mxu0 %v1687
    %v1755 = vpop.f32.mrb[0].mxu0
    %v1756 = vadd.f32 0.0, %v1755
    %v1757 = vpop.f32.mrb[0].mxu0
    %1758 = vdwg.mxu0
    %v1760 = vsel %vm182, %v1680, 0
    %v1763 = vsel %vm182, %v1756, 0
    %1765 = vmatprep.subr.mxu0 0.0
    %1766 = vmatpush1.msra.mxu0 %v72
    %1767 = vmatprep.subr.mxu0 0.0
    %1768 = vmatpush1.msra.mxu0 0.0
    %1769 = vmatprep.subr.mxu0 0.0
    %1770 = vmatpush1.msra.mxu0 0.0
    %1771 = vmatprep.subr.mxu0 0.0
    %1772 = vmatpush1.msra.mxu0 0.0
    %1773 = vmatprep.subr.mxu0 0.0
    %1774 = vmatpush1.msra.mxu0 0.0
    %1775 = vmatprep.subr.mxu0 0.0
    %1776 = vmatpush1.msra.mxu0 0.0
    %1777 = vmatprep.subr.mxu0 0.0
    %1778 = vmatpush1.msra.mxu0 0.0
    %1779 = vmatprep.subr.mxu0 0.0
    %1780 = vmatpush1.msra.mxu0 0.0
    %1781 = vmatprep.subr.mxu0 0.0
    %1782 = vmatpush1.msra.mxu0 0.0
    %1783 = vmatprep.subr.mxu0 0.0
    %1784 = vmatpush1.msra.mxu0 0.0
    %1785 = vmatprep.subr.mxu0 0.0
    %1786 = vmatpush1.msra.mxu0 0.0
    %1787 = vmatprep.subr.mxu0 0.0
    %1788 = vmatpush1.msra.mxu0 0.0
    %1789 = vmatprep.subr.mxu0 0.0
    %1790 = vmatpush1.msra.mxu0 0.0
    %1791 = vmatprep.subr.mxu0 0.0
    %1792 = vmatpush1.msra.mxu0 0.0
    %1793 = vmatprep.subr.mxu0 0.0
    %1794 = vmatpush1.msra.mxu0 0.0
    %1795 = vmatprep.subr.mxu0 0.0
    %1796 = vmatpush1.msra.mxu0 0.0
    %1797 = vmatprep.subr.mxu0 0.0
    %1798 = vmatpush1.msra.mxu0 0.0
    %1799 = vmatprep.subr.mxu0 0.0
    %1800 = vmatpush1.msra.mxu0 0.0
    %1801 = vmatprep.subr.mxu0 0.0
    %1802 = vmatpush1.msra.mxu0 0.0
    %1803 = vmatprep.subr.mxu0 0.0
    %1804 = vmatpush1.msra.mxu0 0.0
    %1805 = vmatprep.subr.mxu0 0.0
    %1806 = vmatpush1.msra.mxu0 0.0
    %1807 = vmatprep.subr.mxu0 0.0
    %1808 = vmatpush1.msra.mxu0 0.0
    %1809 = vmatprep.subr.mxu0 0.0
    %1810 = vmatpush1.msra.mxu0 0.0
    %1811 = vmatprep.subr.mxu0 0.0
    %1812 = vmatpush1.msra.mxu0 0.0
    %1813 = vmatprep.subr.mxu0 0.0
    %1814 = vmatpush1.msra.mxu0 0.0
    %1815 = vmatprep.subr.mxu0 0.0
    %1816 = vmatpush1.msra.mxu0 0.0
    %1817 = vmatprep.subr.mxu0 0.0
    %1818 = vmatpush1.msra.mxu0 0.0
    %1819 = vmatprep.subr.mxu0 0.0
    %1820 = vmatpush1.msra.mxu0 0.0
    %1821 = vmatprep.subr.mxu0 0.0
    %1822 = vmatpush1.msra.mxu0 0.0
    %1823 = vmatprep.subr.mxu0 0.0
    %1824 = vmatpush1.msra.mxu0 0.0
    %1825 = vmatprep.subr.mxu0 0.0
    %1826 = vmatpush1.msra.mxu0 0.0
    %1827 = vmatprep.subr.mxu0 0.0
    %1828 = vmatpush1.msra.mxu0 0.0
    %1829 = vmatprep.mubr.f32.mxu0 0.0
    %1830 = vmatmul.mubr.f32.gmra.mrb[0].mxu0 %v1760
    %v1831 = vpop.f32.mrb[0].mxu0
    %v1832 = vadd.f32 0.0, %v1831
    %v1833 = vpop.f32.mrb[0].mxu0
    %1834 = vmatprep.mubr.f32.mxu0 0.0
    %1835 = vmatmul.mubr.f32.gmra.mrb[0].mxu0 %v1763
    %v1836 = vpop.f32.mrb[0].mxu0
    %v1837 = vadd.f32 0.0, %v1836
    %v1838 = vpop.f32.mrb[0].mxu0
    %1839 = vdwg.mxu0
    %v1840 = vadd.f32 %v1423, %v1832
    %v1841 = vadd.f32 %v1424, %v1837
    %v1842 = vlaneseq
    %v1843 = vshrl.u32 %v1842, 7
    %v1844 = vsub.s32 0, %v1843
    %v1845 = vrot.slane %v86, %v1844
    %v1846 = vadd.f32 %v1840, %v1845
    %v1847 = vadd.f32 %v1841, %v1845
    %v1848 = vadd.f32 %v63, %v1846
    %v1849 = vadd.f32 %v64, %v1847
    %v1850 = vsel %vm97, %v1848, 0.0
    %1851 = vadd.xlane.f32.xlu0 %v1850
    %v1852 = vpop.xlane.xlu0 %1851
    %v1853 = vsel %vm97, %v1849, 0.0
    %1854 = vadd.xlane.f32.xlu0 %v1853
    %v1855 = vpop.xlane.xlu0 %1854
    %v1856 = vrcp.pop 32.0
    %v1857 = vmul.f32 %v1852, %v1856
    %v1858 = vmul.f32 %v1855, %v1856
    %v1859 = vsub.f32 %v1848, %v1857
    %v1860 = vsub.f32 %v1849, %v1858
    %v1861 = vmul.f32 %v1859, %v1859
    %v1862 = vmul.f32 %v1860, %v1860
    %v1863 = vsel %vm97, %v1861, 0.0
    %1864 = vadd.xlane.f32.xlu0 %v1863
    %v1865 = vpop.xlane.xlu0 %1864
    %v1866 = vsel %vm97, %v1862, 0.0
    %1867 = vadd.xlane.f32.xlu0 %v1866
    %v1868 = vpop.xlane.xlu0 %1867
    %v1869 = vmul.f32 %v1865, %v1856
    %v1870 = vmul.f32 %v1868, %v1856
    %v1871 = vadd.f32 %v1869, 1e-05
    %v1872 = vadd.f32 %v1870, 1e-05
    %v1873 = vrsqrt.pop %v1871
    %v1874 = vrsqrt.pop %v1872
    %v1875 = vmul.f32 %v1859, %v1873
    %v1876 = vmul.f32 %v1860, %v1874
    %v1877 = vlaneseq
    %v1878 = vshrl.u32 %v1877, 7
    %v1879 = vsub.s32 0, %v1878
    %v1880 = vrot.slane %v89, %v1879
    %v1881 = vmul.f32 %v1875, %v1880
    %v1882 = vmul.f32 %v1876, %v1880
    %v1883 = vlaneseq
    %v1884 = vshrl.u32 %v1883, 7
    %v1885 = vsub.s32 0, %v1884
    %v1886 = vrot.slane %v90, %v1885
    %v1887 = vadd.f32 %v1881, %v1886
    %v1888 = vadd.f32 %v1882, %v1886
    %v1889 = vlaneseq
    %v1890 = vshrl.u32 %v1889, 7
    %v1891 = vsub.s32 0, %v1890
    %v1892 = vrot.slane %v87, %v1891
    %v1894 = vsel %vm97, %v1887, 0
    %v1897 = vsel %vm97, %v1888, 0
    %1899 = vmatprep.subr.mxu0 0.0
    %1900 = vmatpush1.msra.mxu0 %v73
    %1901 = vmatprep.subr.mxu0 0.0
    %1902 = vmatpush1.msra.mxu0 %v74
    %1903 = vmatprep.subr.mxu0 0.0
    %1904 = vmatpush1.msra.mxu0 %v75
    %1905 = vmatprep.subr.mxu0 0.0
    %1906 = vmatpush1.msra.mxu0 %v76
    %1907 = vmatprep.subr.mxu0 0.0
    %1908 = vmatpush1.msra.mxu0 0.0
    %1909 = vmatprep.subr.mxu0 0.0
    %1910 = vmatpush1.msra.mxu0 0.0
    %1911 = vmatprep.subr.mxu0 0.0
    %1912 = vmatpush1.msra.mxu0 0.0
    %1913 = vmatprep.subr.mxu0 0.0
    %1914 = vmatpush1.msra.mxu0 0.0
    %1915 = vmatprep.subr.mxu0 0.0
    %1916 = vmatpush1.msra.mxu0 0.0
    %1917 = vmatprep.subr.mxu0 0.0
    %1918 = vmatpush1.msra.mxu0 0.0
    %1919 = vmatprep.subr.mxu0 0.0
    %1920 = vmatpush1.msra.mxu0 0.0
    %1921 = vmatprep.subr.mxu0 0.0
    %1922 = vmatpush1.msra.mxu0 0.0
    %1923 = vmatprep.subr.mxu0 0.0
    %1924 = vmatpush1.msra.mxu0 0.0
    %1925 = vmatprep.subr.mxu0 0.0
    %1926 = vmatpush1.msra.mxu0 0.0
    %1927 = vmatprep.subr.mxu0 0.0
    %1928 = vmatpush1.msra.mxu0 0.0
    %1929 = vmatprep.subr.mxu0 0.0
    %1930 = vmatpush1.msra.mxu0 0.0
    %1931 = vmatprep.subr.mxu0 0.0
    %1932 = vmatpush1.msra.mxu0 0.0
    %1933 = vmatprep.subr.mxu0 0.0
    %1934 = vmatpush1.msra.mxu0 0.0
    %1935 = vmatprep.subr.mxu0 0.0
    %1936 = vmatpush1.msra.mxu0 0.0
    %1937 = vmatprep.subr.mxu0 0.0
    %1938 = vmatpush1.msra.mxu0 0.0
    %1939 = vmatprep.subr.mxu0 0.0
    %1940 = vmatpush1.msra.mxu0 0.0
    %1941 = vmatprep.subr.mxu0 0.0
    %1942 = vmatpush1.msra.mxu0 0.0
    %1943 = vmatprep.subr.mxu0 0.0
    %1944 = vmatpush1.msra.mxu0 0.0
    %1945 = vmatprep.subr.mxu0 0.0
    %1946 = vmatpush1.msra.mxu0 0.0
    %1947 = vmatprep.subr.mxu0 0.0
    %1948 = vmatpush1.msra.mxu0 0.0
    %1949 = vmatprep.subr.mxu0 0.0
    %1950 = vmatpush1.msra.mxu0 0.0
    %1951 = vmatprep.subr.mxu0 0.0
    %1952 = vmatpush1.msra.mxu0 0.0
    %1953 = vmatprep.subr.mxu0 0.0
    %1954 = vmatpush1.msra.mxu0 0.0
    %1955 = vmatprep.subr.mxu0 0.0
    %1956 = vmatpush1.msra.mxu0 0.0
    %1957 = vmatprep.subr.mxu0 0.0
    %1958 = vmatpush1.msra.mxu0 0.0
    %1959 = vmatprep.subr.mxu0 0.0
    %1960 = vmatpush1.msra.mxu0 0.0
    %1961 = vmatprep.subr.mxu0 0.0
    %1962 = vmatpush1.msra.mxu0 0.0
    %1963 = vmatprep.mubr.f32.mxu0 0.0
    %1964 = vmatmul.mubr.f32.gmra.mrb[0].mxu0 %v1894
    %v1965 = vpop.f32.mrb[0].mxu0
    %v1966 = vadd.f32 %v1892, %v1965
    %v1967 = vpop.f32.mrb[0].mxu0
    %1968 = vmatprep.mubr.f32.mxu0 0.0
    %1969 = vmatmul.mubr.f32.gmra.mrb[0].mxu0 %v1897
    %v1970 = vpop.f32.mrb[0].mxu0
    %v1971 = vadd.f32 %v1892, %v1970
    %v1972 = vpop.f32.mrb[0].mxu0
    %1973 = vdwg.mxu0
    %v1974 = vmax.f32 %v1966, 0.0
    %v1975 = vmax.f32 %v1971, 0.0
    %v1976 = vlaneseq
    %v1977 = vshrl.u32 %v1976, 7
    %v1978 = vsub.s32 0, %v1977
    %v1979 = vrot.slane %v88, %v1978
    %vm1980 = vcmask 523264
    %v1982 = vsel %vm1980, %v1974, 0
    %v1985 = vsel %vm1980, %v1975, 0
    %1987 = vmatprep.subr.mxu0 0.0
    %1988 = vmatpush1.msra.mxu0 %v77
    %1989 = vmatprep.subr.mxu0 0.0
    %1990 = vmatpush1.msra.mxu0 %v78
    %1991 = vmatprep.subr.mxu0 0.0
    %1992 = vmatpush1.msra.mxu0 %v79
    %1993 = vmatprep.subr.mxu0 0.0
    %1994 = vmatpush1.msra.mxu0 %v80
    %1995 = vmatprep.subr.mxu0 0.0
    %1996 = vmatpush1.msra.mxu0 %v81
    %1997 = vmatprep.subr.mxu0 0.0
    %1998 = vmatpush1.msra.mxu0 %v82
    %1999 = vmatprep.subr.mxu0 0.0
    %2000 = vmatpush1.msra.mxu0 %v83
    %2001 = vmatprep.subr.mxu0 0.0
    %2002 = vmatpush1.msra.mxu0 %v84
    %2003 = vmatprep.subr.mxu0 0.0
    %2004 = vmatpush1.msra.mxu0 0.0
    %2005 = vmatprep.subr.mxu0 0.0
    %2006 = vmatpush1.msra.mxu0 0.0
    %2007 = vmatprep.subr.mxu0 0.0
    %2008 = vmatpush1.msra.mxu0 0.0
    %2009 = vmatprep.subr.mxu0 0.0
    %2010 = vmatpush1.msra.mxu0 0.0
    %2011 = vmatprep.subr.mxu0 0.0
    %2012 = vmatpush1.msra.mxu0 0.0
    %2013 = vmatprep.subr.mxu0 0.0
    %2014 = vmatpush1.msra.mxu0 0.0
    %2015 = vmatprep.subr.mxu0 0.0
    %2016 = vmatpush1.msra.mxu0 0.0
    %2017 = vmatprep.subr.mxu0 0.0
    %2018 = vmatpush1.msra.mxu0 0.0
    %2019 = vmatprep.subr.mxu0 0.0
    %2020 = vmatpush1.msra.mxu0 0.0
    %2021 = vmatprep.subr.mxu0 0.0
    %2022 = vmatpush1.msra.mxu0 0.0
    %2023 = vmatprep.subr.mxu0 0.0
    %2024 = vmatpush1.msra.mxu0 0.0
    %2025 = vmatprep.subr.mxu0 0.0
    %2026 = vmatpush1.msra.mxu0 0.0
    %2027 = vmatprep.subr.mxu0 0.0
    %2028 = vmatpush1.msra.mxu0 0.0
    %2029 = vmatprep.subr.mxu0 0.0
    %2030 = vmatpush1.msra.mxu0 0.0
    %2031 = vmatprep.subr.mxu0 0.0
    %2032 = vmatpush1.msra.mxu0 0.0
    %2033 = vmatprep.subr.mxu0 0.0
    %2034 = vmatpush1.msra.mxu0 0.0
    %2035 = vmatprep.subr.mxu0 0.0
    %2036 = vmatpush1.msra.mxu0 0.0
    %2037 = vmatprep.subr.mxu0 0.0
    %2038 = vmatpush1.msra.mxu0 0.0
    %2039 = vmatprep.subr.mxu0 0.0
    %2040 = vmatpush1.msra.mxu0 0.0
    %2041 = vmatprep.subr.mxu0 0.0
    %2042 = vmatpush1.msra.mxu0 0.0
    %2043 = vmatprep.subr.mxu0 0.0
    %2044 = vmatpush1.msra.mxu0 0.0
    %2045 = vmatprep.subr.mxu0 0.0
    %2046 = vmatpush1.msra.mxu0 0.0
    %2047 = vmatprep.subr.mxu0 0.0
    %2048 = vmatpush1.msra.mxu0 0.0
    %2049 = vmatprep.subr.mxu0 0.0
    %2050 = vmatpush1.msra.mxu0 0.0
    %2051 = vmatprep.mubr.f32.mxu0 0.0
    %2052 = vmatmul.mubr.f32.gmra.mrb[0].mxu0 %v1982
    %v2053 = vpop.f32.mrb[0].mxu0
    %v2054 = vadd.f32 %v1979, %v2053
    %v2055 = vpop.f32.mrb[0].mxu0
    %2056 = vmatprep.mubr.f32.mxu0 0.0
    %2057 = vmatmul.mubr.f32.gmra.mrb[0].mxu0 %v1985
    %v2058 = vpop.f32.mrb[0].mxu0
    %v2059 = vadd.f32 %v1979, %v2058
    %v2060 = vpop.f32.mrb[0].mxu0
    %2061 = vdwg.mxu0
    %v2062 = vadd.f32 %v1887, %v2054
    %v2063 = vadd.f32 %v1888, %v2059
    %v2064 = vsel %vm97, %v2062, 0.0
    %2065 = vadd.xlane.f32.xlu0 %v2064
    %v2066 = vpop.xlane.xlu0 %2065
    %v2067 = vsel %vm97, %v2063, 0.0
    %2068 = vadd.xlane.f32.xlu0 %v2067
    %v2069 = vpop.xlane.xlu0 %2068
    %v2070 = vmul.f32 %v2066, %v1856
    %v2071 = vmul.f32 %v2069, %v1856
    %v2072 = vsub.f32 %v2062, %v2070
    %v2073 = vsub.f32 %v2063, %v2071
    %v2074 = vmul.f32 %v2072, %v2072
    %v2075 = vmul.f32 %v2073, %v2073
    %v2076 = vsel %vm97, %v2074, 0.0
    %2077 = vadd.xlane.f32.xlu0 %v2076
    %v2078 = vpop.xlane.xlu0 %2077
    %v2079 = vsel %vm97, %v2075, 0.0
    %2080 = vadd.xlane.f32.xlu0 %v2079
    %v2081 = vpop.xlane.xlu0 %2080
    %v2082 = vmul.f32 %v2078, %v1856
    %v2083 = vmul.f32 %v2081, %v1856
    %v2084 = vadd.f32 %v2082, 1e-05
    %v2085 = vadd.f32 %v2083, 1e-05
    %v2086 = vrsqrt.pop %v2084
    %v2087 = vrsqrt.pop %v2085
    %v2088 = vmul.f32 %v2072, %v2086
    %v2089 = vmul.f32 %v2073, %v2087
    %v2090 = vlaneseq
    %v2091 = vshrl.u32 %v2090, 7
    %v2092 = vsub.s32 0, %v2091
    %v2093 = vrot.slane %v91, %v2092
    %v2094 = vmul.f32 %v2088, %v2093
    %v2095 = vmul.f32 %v2089, %v2093
    %v2096 = vlaneseq
    %v2097 = vshrl.u32 %v2096, 7
    %v2098 = vsub.s32 0, %v2097
    %v2099 = vrot.slane %v92, %v2098
    %v2100 = vadd.f32 %v2094, %v2099
    %v2101 = vadd.f32 %v2095, %v2099
    %2102 = vst.msk [vmem:[#allocation7] sm:$0xff] %vm97, %v2100
    %2103 = vst.msk [vmem:[#allocation7 + $0x10] sm:$0xff] %vm97, %v2101
    %s2104 = scalar_lea.vmem %s2, 96
    %v2105 = vld [vmem:[%s2104] sm:$0xff]
    %v2106 = vld [vmem:[%s2104 + $0x18] sm:$0xff]
    %v2107 = vld [vmem:[%s2104 + $0x30] sm:$0xff]
    %v2108 = vld [vmem:[%s2104 + $0x48] sm:$0xff]
    %v2109 = vld [vmem:[%s2104 + $0x8] sm:$0xff]
    %v2110 = vld [vmem:[%s2104 + $0x20] sm:$0xff]
    %v2111 = vld [vmem:[%s2104 + $0x38] sm:$0xff]
    %v2112 = vld [vmem:[%s2104 + $0x50] sm:$0xff]
    %v2113 = vld [vmem:[%s2104 + $0x10] sm:$0xff]
    %v2114 = vld [vmem:[%s2104 + $0x28] sm:$0xff]
    %v2115 = vld [vmem:[%s2104 + $0x40] sm:$0xff]
    %v2116 = vld [vmem:[%s2104 + $0x58] sm:$0xff]
    %s2117 = scalar_lea.vmem %s3, 64
    %v2118 = vld [vmem:[%s2117] sm:$0xff]
    %v2119 = vld [vmem:[%s2117 + $0x8] sm:$0xff]
    %v2120 = vld [vmem:[%s2117 + $0x10] sm:$0xff]
    %v2121 = vld [vmem:[%s2117 + $0x18] sm:$0xff]
    %v2122 = vld [vmem:[%s2117 + $0x20] sm:$0xff]
    %v2123 = vld [vmem:[%s2117 + $0x28] sm:$0xff]
    %v2124 = vld [vmem:[%s2117 + $0x30] sm:$0xff]
    %v2125 = vld [vmem:[%s2117 + $0x38] sm:$0xff]
    %s2126 = scalar_lea.vmem [#allocation5], 8
    %v2127 = vld [vmem:[%s2126] sm:$0x1]
    %v2128 = vld [vmem:[%s2126 + $0x1] sm:$0x1]
    %v2129 = vld [vmem:[%s2126 + $0x2] sm:$0x1]
    %v2130 = vld [vmem:[%s2126 + $0x3] sm:$0x1]
    %v2131 = vld [vmem:[%s2126 + $0x4] sm:$0x1]
    %v2132 = vld [vmem:[%s2126 + $0x5] sm:$0x1]
    %v2133 = vld [vmem:[%s2126 + $0x6] sm:$0x1]
    %v2134 = vld [vmem:[%s2126 + $0x7] sm:$0x1]
    %v2135 = vlaneseq
    %v2136 = vshrl.u32 %v2135, 7
    %v2137 = vsub.s32 0, %v2136
    %v2138 = vrot.slane %v2127, %v2137
    %v2140 = vsel %vm97, %v2100, 0
    %v2143 = vsel %vm97, %v2101, 0
    %2145 = vmatprep.subr.mxu0 0.0
    %2146 = vmatpush1.msra.mxu0 %v2105
    %2147 = vmatprep.subr.mxu0 0.0
    %2148 = vmatpush1.msra.mxu0 %v2106
    %2149 = vmatprep.subr.mxu0 0.0
    %2150 = vmatpush1.msra.mxu0 %v2107
    %2151 = vmatprep.subr.mxu0 0.0
    %2152 = vmatpush1.msra.mxu0 %v2108
    %2153 = vmatprep.subr.mxu0 0.0
    %2154 = vmatpush1.msra.mxu0 0.0
    %2155 = vmatprep.subr.mxu0 0.0
    %2156 = vmatpush1.msra.mxu0 0.0
    %2157 = vmatprep.subr.mxu0 0.0
    %2158 = vmatpush1.msra.mxu0 0.0
    %2159 = vmatprep.subr.mxu0 0.0
    %2160 = vmatpush1.msra.mxu0 0.0
    %2161 = vmatprep.subr.mxu0 0.0
    %2162 = vmatpush1.msra.mxu0 0.0
    %2163 = vmatprep.subr.mxu0 0.0
    %2164 = vmatpush1.msra.mxu0 0.0
    %2165 = vmatprep.subr.mxu0 0.0
    %2166 = vmatpush1.msra.mxu0 0.0
    %2167 = vmatprep.subr.mxu0 0.0
    %2168 = vmatpush1.msra.mxu0 0.0
    %2169 = vmatprep.subr.mxu0 0.0
    %2170 = vmatpush1.msra.mxu0 0.0
    %2171 = vmatprep.subr.mxu0 0.0
    %2172 = vmatpush1.msra.mxu0 0.0
    %2173 = vmatprep.subr.mxu0 0.0
    %2174 = vmatpush1.msra.mxu0 0.0
    %2175 = vmatprep.subr.mxu0 0.0
    %2176 = vmatpush1.msra.mxu0 0.0
    %2177 = vmatprep.subr.mxu0 0.0
    %2178 = vmatpush1.msra.mxu0 0.0
    %2179 = vmatprep.subr.mxu0 0.0
    %2180 = vmatpush1.msra.mxu0 0.0
    %2181 = vmatprep.subr.mxu0 0.0
    %2182 = vmatpush1.msra.mxu0 0.0
    %2183 = vmatprep.subr.mxu0 0.0
    %2184 = vmatpush1.msra.mxu0 0.0
    %2185 = vmatprep.subr.mxu0 0.0
    %2186 = vmatpush1.msra.mxu0 0.0
    %2187 = vmatprep.subr.mxu0 0.0
    %2188 = vmatpush1.msra.mxu0 0.0
    %2189 = vmatprep.subr.mxu0 0.0
    %2190 = vmatpush1.msra.mxu0 0.0
    %2191 = vmatprep.subr.mxu0 0.0
    %2192 = vmatpush1.msra.mxu0 0.0
    %2193 = vmatprep.subr.mxu0 0.0
    %2194 = vmatpush1.msra.mxu0 0.0
    %2195 = vmatprep.subr.mxu0 0.0
    %2196 = vmatpush1.msra.mxu0 0.0
    %2197 = vmatprep.subr.mxu0 0.0
    %2198 = vmatpush1.msra.mxu0 0.0
    %2199 = vmatprep.subr.mxu0 0.0
    %2200 = vmatpush1.msra.mxu0 0.0
    %2201 = vmatprep.subr.mxu0 0.0
    %2202 = vmatpush1.msra.mxu0 0.0
    %2203 = vmatprep.subr.mxu0 0.0
    %2204 = vmatpush1.msra.mxu0 0.0
    %2205 = vmatprep.subr.mxu0 0.0
    %2206 = vmatpush1.msra.mxu0 0.0
    %2207 = vmatprep.subr.mxu0 0.0
    %2208 = vmatpush1.msra.mxu0 0.0
    %2209 = vmatprep.mubr.f32.mxu0 0.0
    %2210 = vmatmul.mubr.f32.gmra.mrb[0].mxu0 %v2140
    %v2211 = vpop.f32.mrb[0].mxu0
    %v2212 = vadd.f32 %v2138, %v2211
    %v2213 = vpop.f32.mrb[0].mxu0
    %2214 = vmatprep.mubr.f32.mxu0 0.0
    %2215 = vmatmul.mubr.f32.gmra.mrb[0].mxu0 %v2143
    %v2216 = vpop.f32.mrb[0].mxu0
    %v2217 = vadd.f32 %v2138, %v2216
    %v2218 = vpop.f32.mrb[0].mxu0
    %2219 = vdwg.mxu0
    %2221 = vrot.lane.b32.xlu0 %v2212, 96
    %v2222 = vpop.permute.xlu0 %2221
    %v2223 = vsel %vm182, %v2212, 0
    %v2225 = vsel %vm182, %v2222, 0
    %2227 = vmatprep.subr.mxu0 0.0
    %2228 = vmatpush1.xpose.msra.mxu0 %v2225
    %2229 = vmatprep.subr.mxu0 0.0
    %2230 = vmatpush1.xpose.msra.mxu0 0.0
    %2231 = vmatprep.subr.mxu0 0.0
    %2232 = vmatpush1.xpose.msra.mxu0 0.0
    %2233 = vmatprep.subr.mxu0 0.0
    %2234 = vmatpush1.xpose.msra.mxu0 0.0
    %2235 = vmatprep.subr.mxu0 0.0
    %2236 = vmatpush1.xpose.msra.mxu0 0.0
    %2237 = vmatprep.subr.mxu0 0.0
    %2238 = vmatpush1.xpose.msra.mxu0 0.0
    %2239 = vmatprep.subr.mxu0 0.0
    %2240 = vmatpush1.xpose.msra.mxu0 0.0
    %2241 = vmatprep.subr.mxu0 0.0
    %2242 = vmatpush1.xpose.msra.mxu0 0.0
    %2243 = vmatprep.subr.mxu0 0.0
    %2244 = vmatpush1.xpose.msra.mxu0 0.0
    %2245 = vmatprep.subr.mxu0 0.0
    %2246 = vmatpush1.xpose.msra.mxu0 0.0
    %2247 = vmatprep.subr.mxu0 0.0
    %2248 = vmatpush1.xpose.msra.mxu0 0.0
    %2249 = vmatprep.subr.mxu0 0.0
    %2250 = vmatpush1.xpose.msra.mxu0 0.0
    %2251 = vmatprep.subr.mxu0 0.0
    %2252 = vmatpush1.xpose.msra.mxu0 0.0
    %2253 = vmatprep.subr.mxu0 0.0
    %2254 = vmatpush1.xpose.msra.mxu0 0.0
    %2255 = vmatprep.subr.mxu0 0.0
    %2256 = vmatpush1.xpose.msra.mxu0 0.0
    %2257 = vmatprep.subr.mxu0 0.0
    %2258 = vmatpush1.xpose.msra.mxu0 0.0
    %2259 = vmatprep.subr.mxu0 0.0
    %2260 = vmatpush1.xpose.msra.mxu0 0.0
    %2261 = vmatprep.subr.mxu0 0.0
    %2262 = vmatpush1.xpose.msra.mxu0 0.0
    %2263 = vmatprep.subr.mxu0 0.0
    %2264 = vmatpush1.xpose.msra.mxu0 0.0
    %2265 = vmatprep.subr.mxu0 0.0
    %2266 = vmatpush1.xpose.msra.mxu0 0.0
    %2267 = vmatprep.subr.mxu0 0.0
    %2268 = vmatpush1.xpose.msra.mxu0 0.0
    %2269 = vmatprep.subr.mxu0 0.0
    %2270 = vmatpush1.xpose.msra.mxu0 0.0
    %2271 = vmatprep.subr.mxu0 0.0
    %2272 = vmatpush1.xpose.msra.mxu0 0.0
    %2273 = vmatprep.subr.mxu0 0.0
    %2274 = vmatpush1.xpose.msra.mxu0 0.0
    %2275 = vmatprep.subr.mxu0 0.0
    %2276 = vmatpush1.xpose.msra.mxu0 0.0
    %2277 = vmatprep.subr.mxu0 0.0
    %2278 = vmatpush1.xpose.msra.mxu0 0.0
    %2279 = vmatprep.subr.mxu0 0.0
    %2280 = vmatpush1.xpose.msra.mxu0 0.0
    %2281 = vmatprep.subr.mxu0 0.0
    %2282 = vmatpush1.xpose.msra.mxu0 0.0
    %2283 = vmatprep.subr.mxu0 0.0
    %2284 = vmatpush1.xpose.msra.mxu0 0.0
    %2285 = vmatprep.subr.mxu0 0.0
    %2286 = vmatpush1.xpose.msra.mxu0 0.0
    %2287 = vmatprep.subr.mxu0 0.0
    %2288 = vmatpush1.xpose.msra.mxu0 0.0
    %2289 = vmatprep.subr.mxu0 0.0
    %2290 = vmatpush1.xpose.msra.mxu0 0.0
    %2291 = vmatprep.mubr.f32.mxu0 0.0
    %2292 = vmatmul.mubr.f32.gmra.mrb[0].mxu0 %v2223
    %v2293 = vpop.f32.mrb[0].mxu0
    %v2294 = vadd.f32 0.0, %v2293
    %v2295 = vpop.f32.mrb[0].mxu0
    %2296 = vdwg.mxu0
    %2298 = vrot.lane.b32.xlu0 %v2217, 96
    %v2299 = vpop.permute.xlu0 %2298
    %v2300 = vsel %vm182, %v2217, 0
    %v2302 = vsel %vm182, %v2299, 0
    %2304 = vmatprep.subr.mxu0 0.0
    %2305 = vmatpush1.xpose.msra.mxu0 %v2302
    %2306 = vmatprep.subr.mxu0 0.0
    %2307 = vmatpush1.xpose.msra.mxu0 0.0
    %2308 = vmatprep.subr.mxu0 0.0
    %2309 = vmatpush1.xpose.msra.mxu0 0.0
    %2310 = vmatprep.subr.mxu0 0.0
    %2311 = vmatpush1.xpose.msra.mxu0 0.0
    %2312 = vmatprep.subr.mxu0 0.0
    %2313 = vmatpush1.xpose.msra.mxu0 0.0
    %2314 = vmatprep.subr.mxu0 0.0
    %2315 = vmatpush1.xpose.msra.mxu0 0.0
    %2316 = vmatprep.subr.mxu0 0.0
    %2317 = vmatpush1.xpose.msra.mxu0 0.0
    %2318 = vmatprep.subr.mxu0 0.0
    %2319 = vmatpush1.xpose.msra.mxu0 0.0
    %2320 = vmatprep.subr.mxu0 0.0
    %2321 = vmatpush1.xpose.msra.mxu0 0.0
    %2322 = vmatprep.subr.mxu0 0.0
    %2323 = vmatpush1.xpose.msra.mxu0 0.0
    %2324 = vmatprep.subr.mxu0 0.0
    %2325 = vmatpush1.xpose.msra.mxu0 0.0
    %2326 = vmatprep.subr.mxu0 0.0
    %2327 = vmatpush1.xpose.msra.mxu0 0.0
    %2328 = vmatprep.subr.mxu0 0.0
    %2329 = vmatpush1.xpose.msra.mxu0 0.0
    %2330 = vmatprep.subr.mxu0 0.0
    %2331 = vmatpush1.xpose.msra.mxu0 0.0
    %2332 = vmatprep.subr.mxu0 0.0
    %2333 = vmatpush1.xpose.msra.mxu0 0.0
    %2334 = vmatprep.subr.mxu0 0.0
    %2335 = vmatpush1.xpose.msra.mxu0 0.0
    %2336 = vmatprep.subr.mxu0 0.0
    %2337 = vmatpush1.xpose.msra.mxu0 0.0
    %2338 = vmatprep.subr.mxu0 0.0
    %2339 = vmatpush1.xpose.msra.mxu0 0.0
    %2340 = vmatprep.subr.mxu0 0.0
    %2341 = vmatpush1.xpose.msra.mxu0 0.0
    %2342 = vmatprep.subr.mxu0 0.0
    %2343 = vmatpush1.xpose.msra.mxu0 0.0
    %2344 = vmatprep.subr.mxu0 0.0
    %2345 = vmatpush1.xpose.msra.mxu0 0.0
    %2346 = vmatprep.subr.mxu0 0.0
    %2347 = vmatpush1.xpose.msra.mxu0 0.0
    %2348 = vmatprep.subr.mxu0 0.0
    %2349 = vmatpush1.xpose.msra.mxu0 0.0
    %2350 = vmatprep.subr.mxu0 0.0
    %2351 = vmatpush1.xpose.msra.mxu0 0.0
    %2352 = vmatprep.subr.mxu0 0.0
    %2353 = vmatpush1.xpose.msra.mxu0 0.0
    %2354 = vmatprep.subr.mxu0 0.0
    %2355 = vmatpush1.xpose.msra.mxu0 0.0
    %2356 = vmatprep.subr.mxu0 0.0
    %2357 = vmatpush1.xpose.msra.mxu0 0.0
    %2358 = vmatprep.subr.mxu0 0.0
    %2359 = vmatpush1.xpose.msra.mxu0 0.0
    %2360 = vmatprep.subr.mxu0 0.0
    %2361 = vmatpush1.xpose.msra.mxu0 0.0
    %2362 = vmatprep.subr.mxu0 0.0
    %2363 = vmatpush1.xpose.msra.mxu0 0.0
    %2364 = vmatprep.subr.mxu0 0.0
    %2365 = vmatpush1.xpose.msra.mxu0 0.0
    %2366 = vmatprep.subr.mxu0 0.0
    %2367 = vmatpush1.xpose.msra.mxu0 0.0
    %2368 = vmatprep.mubr.f32.mxu0 0.0
    %2369 = vmatmul.mubr.f32.gmra.mrb[0].mxu0 %v2300
    %v2370 = vpop.f32.mrb[0].mxu0
    %v2371 = vadd.f32 0.0, %v2370
    %v2372 = vpop.f32.mrb[0].mxu0
    %2373 = vdwg.mxu0
    %v2374 = vmul.f32 %v2294, 0.35355338
    %v2375 = vmul.f32 %v2371, 0.35355338
    %v2376 = vadd.f32 %v2374, %v56
    %v2377 = vadd.f32 %v2375, %v60
    %v2378 = vsel %vm182, %v2376, -inf
    %2379 = vmax.xlane.f32.xlu0 %v2378
    %v2380 = vpop.xlane.xlu0 %2379
    %v2381 = vsel %vm182, %v2377, -inf
    %2382 = vmax.xlane.f32.xlu0 %v2381
    %v2383 = vpop.xlane.xlu0 %2382
    %v2384 = vsub.f32 %v2376, %v2380
    %v2385 = vsub.f32 %v2377, %v2383
    %v2386 = vmul.f32 %v2384, 1.442695
    %v2387 = vpow.pop %v2386
    %v2388 = vmul.f32 %v2385, 1.442695
    %v2389 = vpow.pop %v2388
    %v2390 = vsel %vm182, %v2387, 0.0
    %2391 = vadd.xlane.f32.xlu0 %v2390
    %v2392 = vpop.xlane.xlu0 %2391
    %v2393 = vsel %vm182, %v2389, 0.0
    %2394 = vadd.xlane.f32.xlu0 %v2393
    %v2395 = vpop.xlane.xlu0 %2394
    %v2396 = vrcp.pop %v2392
    %v2397 = vrcp.pop %v2395
    %v2398 = vmul.f32 %v2387, %v2396
    %v2399 = vmul.f32 %v2389, %v2397
    %2400 = vrot.lane.b32.xlu0 %v2212, 64
    %v2401 = vpop.permute.xlu0 %2400
    %v2404 = vsel %vm182, %v2398, 0
    %2406 = vmatprep.subr.mxu0 0.0
    %2407 = vmatpush1.msra.mxu0 %v2401
    %2408 = vmatprep.subr.mxu0 0.0
    %2409 = vmatpush1.msra.mxu0 0.0
    %2410 = vmatprep.subr.mxu0 0.0
    %2411 = vmatpush1.msra.mxu0 0.0
    %2412 = vmatprep.subr.mxu0 0.0
    %2413 = vmatpush1.msra.mxu0 0.0
    %2414 = vmatprep.subr.mxu0 0.0
    %2415 = vmatpush1.msra.mxu0 0.0
    %2416 = vmatprep.subr.mxu0 0.0
    %2417 = vmatpush1.msra.mxu0 0.0
    %2418 = vmatprep.subr.mxu0 0.0
    %2419 = vmatpush1.msra.mxu0 0.0
    %2420 = vmatprep.subr.mxu0 0.0
    %2421 = vmatpush1.msra.mxu0 0.0
    %2422 = vmatprep.subr.mxu0 0.0
    %2423 = vmatpush1.msra.mxu0 0.0
    %2424 = vmatprep.subr.mxu0 0.0
    %2425 = vmatpush1.msra.mxu0 0.0
    %2426 = vmatprep.subr.mxu0 0.0
    %2427 = vmatpush1.msra.mxu0 0.0
    %2428 = vmatprep.subr.mxu0 0.0
    %2429 = vmatpush1.msra.mxu0 0.0
    %2430 = vmatprep.subr.mxu0 0.0
    %2431 = vmatpush1.msra.mxu0 0.0
    %2432 = vmatprep.subr.mxu0 0.0
    %2433 = vmatpush1.msra.mxu0 0.0
    %2434 = vmatprep.subr.mxu0 0.0
    %2435 = vmatpush1.msra.mxu0 0.0
    %2436 = vmatprep.subr.mxu0 0.0
    %2437 = vmatpush1.msra.mxu0 0.0
    %2438 = vmatprep.subr.mxu0 0.0
    %2439 = vmatpush1.msra.mxu0 0.0
    %2440 = vmatprep.subr.mxu0 0.0
    %2441 = vmatpush1.msra.mxu0 0.0
    %2442 = vmatprep.subr.mxu0 0.0
    %2443 = vmatpush1.msra.mxu0 0.0
    %2444 = vmatprep.subr.mxu0 0.0
    %2445 = vmatpush1.msra.mxu0 0.0
    %2446 = vmatprep.subr.mxu0 0.0
    %2447 = vmatpush1.msra.mxu0 0.0
    %2448 = vmatprep.subr.mxu0 0.0
    %2449 = vmatpush1.msra.mxu0 0.0
    %2450 = vmatprep.subr.mxu0 0.0
    %2451 = vmatpush1.msra.mxu0 0.0
    %2452 = vmatprep.subr.mxu0 0.0
    %2453 = vmatpush1.msra.mxu0 0.0
    %2454 = vmatprep.subr.mxu0 0.0
    %2455 = vmatpush1.msra.mxu0 0.0
    %2456 = vmatprep.subr.mxu0 0.0
    %2457 = vmatpush1.msra.mxu0 0.0
    %2458 = vmatprep.subr.mxu0 0.0
    %2459 = vmatpush1.msra.mxu0 0.0
    %2460 = vmatprep.subr.mxu0 0.0
    %2461 = vmatpush1.msra.mxu0 0.0
    %2462 = vmatprep.subr.mxu0 0.0
    %2463 = vmatpush1.msra.mxu0 0.0
    %2464 = vmatprep.subr.mxu0 0.0
    %2465 = vmatpush1.msra.mxu0 0.0
    %2466 = vmatprep.subr.mxu0 0.0
    %2467 = vmatpush1.msra.mxu0 0.0
    %2468 = vmatprep.subr.mxu0 0.0
    %2469 = vmatpush1.msra.mxu0 0.0
    %2470 = vmatprep.mubr.f32.mxu0 0.0
    %2471 = vmatmul.mubr.f32.gmra.mrb[0].mxu0 %v2404
    %v2472 = vpop.f32.mrb[0].mxu0
    %v2473 = vadd.f32 0.0, %v2472
    %v2474 = vpop.f32.mrb[0].mxu0
    %2475 = vdwg.mxu0
    %2476 = vrot.lane.b32.xlu0 %v2217, 64
    %v2477 = vpop.permute.xlu0 %2476
    %v2480 = vsel %vm182, %v2399, 0
    %2482 = vmatprep.subr.mxu0 0.0
    %2483 = vmatpush1.msra.mxu0 %v2477
    %2484 = vmatprep.subr.mxu0 0.0
    %2485 = vmatpush1.msra.mxu0 0.0
    %2486 = vmatprep.subr.mxu0 0.0
    %2487 = vmatpush1.msra.mxu0 0.0
    %2488 = vmatprep.subr.mxu0 0.0
    %2489 = vmatpush1.msra.mxu0 0.0
    %2490 = vmatprep.subr.mxu0 0.0
    %2491 = vmatpush1.msra.mxu0 0.0
    %2492 = vmatprep.subr.mxu0 0.0
    %2493 = vmatpush1.msra.mxu0 0.0
    %2494 = vmatprep.subr.mxu0 0.0
    %2495 = vmatpush1.msra.mxu0 0.0
    %2496 = vmatprep.subr.mxu0 0.0
    %2497 = vmatpush1.msra.mxu0 0.0
    %2498 = vmatprep.subr.mxu0 0.0
    %2499 = vmatpush1.msra.mxu0 0.0
    %2500 = vmatprep.subr.mxu0 0.0
    %2501 = vmatpush1.msra.mxu0 0.0
    %2502 = vmatprep.subr.mxu0 0.0
    %2503 = vmatpush1.msra.mxu0 0.0
    %2504 = vmatprep.subr.mxu0 0.0
    %2505 = vmatpush1.msra.mxu0 0.0
    %2506 = vmatprep.subr.mxu0 0.0
    %2507 = vmatpush1.msra.mxu0 0.0
    %2508 = vmatprep.subr.mxu0 0.0
    %2509 = vmatpush1.msra.mxu0 0.0
    %2510 = vmatprep.subr.mxu0 0.0
    %2511 = vmatpush1.msra.mxu0 0.0
    %2512 = vmatprep.subr.mxu0 0.0
    %2513 = vmatpush1.msra.mxu0 0.0
    %2514 = vmatprep.subr.mxu0 0.0
    %2515 = vmatpush1.msra.mxu0 0.0
    %2516 = vmatprep.subr.mxu0 0.0
    %2517 = vmatpush1.msra.mxu0 0.0
    %2518 = vmatprep.subr.mxu0 0.0
    %2519 = vmatpush1.msra.mxu0 0.0
    %2520 = vmatprep.subr.mxu0 0.0
    %2521 = vmatpush1.msra.mxu0 0.0
    %2522 = vmatprep.subr.mxu0 0.0
    %2523 = vmatpush1.msra.mxu0 0.0
    %2524 = vmatprep.subr.mxu0 0.0
    %2525 = vmatpush1.msra.mxu0 0.0
    %2526 = vmatprep.subr.mxu0 0.0
    %2527 = vmatpush1.msra.mxu0 0.0
    %2528 = vmatprep.subr.mxu0 0.0
    %2529 = vmatpush1.msra.mxu0 0.0
    %2530 = vmatprep.subr.mxu0 0.0
    %2531 = vmatpush1.msra.mxu0 0.0
    %2532 = vmatprep.subr.mxu0 0.0
    %2533 = vmatpush1.msra.mxu0 0.0
    %2534 = vmatprep.subr.mxu0 0.0
    %2535 = vmatpush1.msra.mxu0 0.0
    %2536 = vmatprep.subr.mxu0 0.0
    %2537 = vmatpush1.msra.mxu0 0.0
    %2538 = vmatprep.subr.mxu0 0.0
    %2539 = vmatpush1.msra.mxu0 0.0
    %2540 = vmatprep.subr.mxu0 0.0
    %2541 = vmatpush1.msra.mxu0 0.0
    %2542 = vmatprep.subr.mxu0 0.0
    %2543 = vmatpush1.msra.mxu0 0.0
    %2544 = vmatprep.subr.mxu0 0.0
    %2545 = vmatpush1.msra.mxu0 0.0
    %2546 = vmatprep.mubr.f32.mxu0 0.0
    %2547 = vmatmul.mubr.f32.gmra.mrb[0].mxu0 %v2480
    %v2548 = vpop.f32.mrb[0].mxu0
    %v2549 = vadd.f32 0.0, %v2548
    %v2550 = vpop.f32.mrb[0].mxu0
    %2551 = vdwg.mxu0
    %2552 = vrot.lane.b32.xlu0 %v2212, 120
    %v2553 = vpop.permute.xlu0 %2552
    %2554 = vrot.lane.b32.xlu0 %v2212, 88
    %v2555 = vpop.permute.xlu0 %2554
    %v2556 = vsel %vm182, %v2553, 0
    %v2558 = vsel %vm182, %v2555, 0
    %2560 = vmatprep.subr.mxu0 0.0
    %2561 = vmatpush1.xpose.msra.mxu0 %v2558
    %2562 = vmatprep.subr.mxu0 0.0
    %2563 = vmatpush1.xpose.msra.mxu0 0.0
    %2564 = vmatprep.subr.mxu0 0.0
    %2565 = vmatpush1.xpose.msra.mxu0 0.0
    %2566 = vmatprep.subr.mxu0 0.0
    %2567 = vmatpush1.xpose.msra.mxu0 0.0
    %2568 = vmatprep.subr.mxu0 0.0
    %2569 = vmatpush1.xpose.msra.mxu0 0.0
    %2570 = vmatprep.subr.mxu0 0.0
    %2571 = vmatpush1.xpose.msra.mxu0 0.0
    %2572 = vmatprep.subr.mxu0 0.0
    %2573 = vmatpush1.xpose.msra.mxu0 0.0
    %2574 = vmatprep.subr.mxu0 0.0
    %2575 = vmatpush1.xpose.msra.mxu0 0.0
    %2576 = vmatprep.subr.mxu0 0.0
    %2577 = vmatpush1.xpose.msra.mxu0 0.0
    %2578 = vmatprep.subr.mxu0 0.0
    %2579 = vmatpush1.xpose.msra.mxu0 0.0
    %2580 = vmatprep.subr.mxu0 0.0
    %2581 = vmatpush1.xpose.msra.mxu0 0.0
    %2582 = vmatprep.subr.mxu0 0.0
    %2583 = vmatpush1.xpose.msra.mxu0 0.0
    %2584 = vmatprep.subr.mxu0 0.0
    %2585 = vmatpush1.xpose.msra.mxu0 0.0
    %2586 = vmatprep.subr.mxu0 0.0
    %2587 = vmatpush1.xpose.msra.mxu0 0.0
    %2588 = vmatprep.subr.mxu0 0.0
    %2589 = vmatpush1.xpose.msra.mxu0 0.0
    %2590 = vmatprep.subr.mxu0 0.0
    %2591 = vmatpush1.xpose.msra.mxu0 0.0
    %2592 = vmatprep.subr.mxu0 0.0
    %2593 = vmatpush1.xpose.msra.mxu0 0.0
    %2594 = vmatprep.subr.mxu0 0.0
    %2595 = vmatpush1.xpose.msra.mxu0 0.0
    %2596 = vmatprep.subr.mxu0 0.0
    %2597 = vmatpush1.xpose.msra.mxu0 0.0
    %2598 = vmatprep.subr.mxu0 0.0
    %2599 = vmatpush1.xpose.msra.mxu0 0.0
    %2600 = vmatprep.subr.mxu0 0.0
    %2601 = vmatpush1.xpose.msra.mxu0 0.0
    %2602 = vmatprep.subr.mxu0 0.0
    %2603 = vmatpush1.xpose.msra.mxu0 0.0
    %2604 = vmatprep.subr.mxu0 0.0
    %2605 = vmatpush1.xpose.msra.mxu0 0.0
    %2606 = vmatprep.subr.mxu0 0.0
    %2607 = vmatpush1.xpose.msra.mxu0 0.0
    %2608 = vmatprep.subr.mxu0 0.0
    %2609 = vmatpush1.xpose.msra.mxu0 0.0
    %2610 = vmatprep.subr.mxu0 0.0
    %2611 = vmatpush1.xpose.msra.mxu0 0.0
    %2612 = vmatprep.subr.mxu0 0.0
    %2613 = vmatpush1.xpose.msra.mxu0 0.0
    %2614 = vmatprep.subr.mxu0 0.0
    %2615 = vmatpush1.xpose.msra.mxu0 0.0
    %2616 = vmatprep.subr.mxu0 0.0
    %2617 = vmatpush1.xpose.msra.mxu0 0.0
    %2618 = vmatprep.subr.mxu0 0.0
    %2619 = vmatpush1.xpose.msra.mxu0 0.0
    %2620 = vmatprep.subr.mxu0 0.0
    %2621 = vmatpush1.xpose.msra.mxu0 0.0
    %2622 = vmatprep.subr.mxu0 0.0
    %2623 = vmatpush1.xpose.msra.mxu0 0.0
    %2624 = vmatprep.mubr.f32.mxu0 0.0
    %2625 = vmatmul.mubr.f32.gmra.mrb[0].mxu0 %v2556
    %v2626 = vpop.f32.mrb[0].mxu0
    %v2627 = vadd.f32 0.0, %v2626
    %v2628 = vpop.f32.mrb[0].mxu0
    %2629 = vdwg.mxu0
    %2630 = vrot.lane.b32.xlu0 %v2217, 120
    %v2631 = vpop.permute.xlu0 %2630
    %2632 = vrot.lane.b32.xlu0 %v2217, 88
    %v2633 = vpop.permute.xlu0 %2632
    %v2634 = vsel %vm182, %v2631, 0
    %v2636 = vsel %vm182, %v2633, 0
    %2638 = vmatprep.subr.mxu0 0.0
    %2639 = vmatpush1.xpose.msra.mxu0 %v2636
    %2640 = vmatprep.subr.mxu0 0.0
    %2641 = vmatpush1.xpose.msra.mxu0 0.0
    %2642 = vmatprep.subr.mxu0 0.0
    %2643 = vmatpush1.xpose.msra.mxu0 0.0
    %2644 = vmatprep.subr.mxu0 0.0
    %2645 = vmatpush1.xpose.msra.mxu0 0.0
    %2646 = vmatprep.subr.mxu0 0.0
    %2647 = vmatpush1.xpose.msra.mxu0 0.0
    %2648 = vmatprep.subr.mxu0 0.0
    %2649 = vmatpush1.xpose.msra.mxu0 0.0
    %2650 = vmatprep.subr.mxu0 0.0
    %2651 = vmatpush1.xpose.msra.mxu0 0.0
    %2652 = vmatprep.subr.mxu0 0.0
    %2653 = vmatpush1.xpose.msra.mxu0 0.0
    %2654 = vmatprep.subr.mxu0 0.0
    %2655 = vmatpush1.xpose.msra.mxu0 0.0
    %2656 = vmatprep.subr.mxu0 0.0
    %2657 = vmatpush1.xpose.msra.mxu0 0.0
    %2658 = vmatprep.subr.mxu0 0.0
    %2659 = vmatpush1.xpose.msra.mxu0 0.0
    %2660 = vmatprep.subr.mxu0 0.0
    %2661 = vmatpush1.xpose.msra.mxu0 0.0
    %2662 = vmatprep.subr.mxu0 0.0
    %2663 = vmatpush1.xpose.msra.mxu0 0.0
    %2664 = vmatprep.subr.mxu0 0.0
    %2665 = vmatpush1.xpose.msra.mxu0 0.0
    %2666 = vmatprep.subr.mxu0 0.0
    %2667 = vmatpush1.xpose.msra.mxu0 0.0
    %2668 = vmatprep.subr.mxu0 0.0
    %2669 = vmatpush1.xpose.msra.mxu0 0.0
    %2670 = vmatprep.subr.mxu0 0.0
    %2671 = vmatpush1.xpose.msra.mxu0 0.0
    %2672 = vmatprep.subr.mxu0 0.0
    %2673 = vmatpush1.xpose.msra.mxu0 0.0
    %2674 = vmatprep.subr.mxu0 0.0
    %2675 = vmatpush1.xpose.msra.mxu0 0.0
    %2676 = vmatprep.subr.mxu0 0.0
    %2677 = vmatpush1.xpose.msra.mxu0 0.0
    %2678 = vmatprep.subr.mxu0 0.0
    %2679 = vmatpush1.xpose.msra.mxu0 0.0
    %2680 = vmatprep.subr.mxu0 0.0
    %2681 = vmatpush1.xpose.msra.mxu0 0.0
    %2682 = vmatprep.subr.mxu0 0.0
    %2683 = vmatpush1.xpose.msra.mxu0 0.0
    %2684 = vmatprep.subr.mxu0 0.0
    %2685 = vmatpush1.xpose.msra.mxu0 0.0
    %2686 = vmatprep.subr.mxu0 0.0
    %2687 = vmatpush1.xpose.msra.mxu0 0.0
    %2688 = vmatprep.subr.mxu0 0.0
    %2689 = vmatpush1.xpose.msra.mxu0 0.0
    %2690 = vmatprep.subr.mxu0 0.0
    %2691 = vmatpush1.xpose.msra.mxu0 0.0
    %2692 = vmatprep.subr.mxu0 0.0
    %2693 = vmatpush1.xpose.msra.mxu0 0.0
    %2694 = vmatprep.subr.mxu0 0.0
    %2695 = vmatpush1.xpose.msra.mxu0 0.0
    %2696 = vmatprep.subr.mxu0 0.0
    %2697 = vmatpush1.xpose.msra.mxu0 0.0
    %2698 = vmatprep.subr.mxu0 0.0
    %2699 = vmatpush1.xpose.msra.mxu0 0.0
    %2700 = vmatprep.subr.mxu0 0.0
    %2701 = vmatpush1.xpose.msra.mxu0 0.0
    %2702 = vmatprep.mubr.f32.mxu0 0.0
    %2703 = vmatmul.mubr.f32.gmra.mrb[0].mxu0 %v2634
    %v2704 = vpop.f32.mrb[0].mxu0
    %v2705 = vadd.f32 0.0, %v2704
    %v2706 = vpop.f32.mrb[0].mxu0
    %2707 = vdwg.mxu0
    %v2708 = vmul.f32 %v2627, 0.35355338
    %v2709 = vmul.f32 %v2705, 0.35355338
    %v2710 = vadd.f32 %v2708, %v56
    %v2711 = vadd.f32 %v2709, %v60
    %v2712 = vsel %vm182, %v2710, -inf
    %2713 = vmax.xlane.f32.xlu0 %v2712
    %v2714 = vpop.xlane.xlu0 %2713
    %v2715 = vsel %vm182, %v2711, -inf
    %2716 = vmax.xlane.f32.xlu0 %v2715
    %v2717 = vpop.xlane.xlu0 %2716
    %v2718 = vsub.f32 %v2710, %v2714
    %v2719 = vsub.f32 %v2711, %v2717
    %v2720 = vmul.f32 %v2718, 1.442695
    %v2721 = vpow.pop %v2720
    %v2722 = vmul.f32 %v2719, 1.442695
    %v2723 = vpow.pop %v2722
    %v2724 = vsel %vm182, %v2721, 0.0
    %2725 = vadd.xlane.f32.xlu0 %v2724
    %v2726 = vpop.xlane.xlu0 %2725
    %v2727 = vsel %vm182, %v2723, 0.0
    %2728 = vadd.xlane.f32.xlu0 %v2727
    %v2729 = vpop.xlane.xlu0 %2728
    %v2730 = vrcp.pop %v2726
    %v2731 = vrcp.pop %v2729
    %v2732 = vmul.f32 %v2721, %v2730
    %v2733 = vmul.f32 %v2723, %v2731
    %2734 = vrot.lane.b32.xlu0 %v2212, 56
    %v2735 = vpop.permute.xlu0 %2734
    %v2738 = vsel %vm182, %v2732, 0
    %2740 = vmatprep.subr.mxu0 0.0
    %2741 = vmatpush1.msra.mxu0 %v2735
    %2742 = vmatprep.subr.mxu0 0.0
    %2743 = vmatpush1.msra.mxu0 0.0
    %2744 = vmatprep.subr.mxu0 0.0
    %2745 = vmatpush1.msra.mxu0 0.0
    %2746 = vmatprep.subr.mxu0 0.0
    %2747 = vmatpush1.msra.mxu0 0.0
    %2748 = vmatprep.subr.mxu0 0.0
    %2749 = vmatpush1.msra.mxu0 0.0
    %2750 = vmatprep.subr.mxu0 0.0
    %2751 = vmatpush1.msra.mxu0 0.0
    %2752 = vmatprep.subr.mxu0 0.0
    %2753 = vmatpush1.msra.mxu0 0.0
    %2754 = vmatprep.subr.mxu0 0.0
    %2755 = vmatpush1.msra.mxu0 0.0
    %2756 = vmatprep.subr.mxu0 0.0
    %2757 = vmatpush1.msra.mxu0 0.0
    %2758 = vmatprep.subr.mxu0 0.0
    %2759 = vmatpush1.msra.mxu0 0.0
    %2760 = vmatprep.subr.mxu0 0.0
    %2761 = vmatpush1.msra.mxu0 0.0
    %2762 = vmatprep.subr.mxu0 0.0
    %2763 = vmatpush1.msra.mxu0 0.0
    %2764 = vmatprep.subr.mxu0 0.0
    %2765 = vmatpush1.msra.mxu0 0.0
    %2766 = vmatprep.subr.mxu0 0.0
    %2767 = vmatpush1.msra.mxu0 0.0
    %2768 = vmatprep.subr.mxu0 0.0
    %2769 = vmatpush1.msra.mxu0 0.0
    %2770 = vmatprep.subr.mxu0 0.0
    %2771 = vmatpush1.msra.mxu0 0.0
    %2772 = vmatprep.subr.mxu0 0.0
    %2773 = vmatpush1.msra.mxu0 0.0
    %2774 = vmatprep.subr.mxu0 0.0
    %2775 = vmatpush1.msra.mxu0 0.0
    %2776 = vmatprep.subr.mxu0 0.0
    %2777 = vmatpush1.msra.mxu0 0.0
    %2778 = vmatprep.subr.mxu0 0.0
    %2779 = vmatpush1.msra.mxu0 0.0
    %2780 = vmatprep.subr.mxu0 0.0
    %2781 = vmatpush1.msra.mxu0 0.0
    %2782 = vmatprep.subr.mxu0 0.0
    %2783 = vmatpush1.msra.mxu0 0.0
    %2784 = vmatprep.subr.mxu0 0.0
    %2785 = vmatpush1.msra.mxu0 0.0
    %2786 = vmatprep.subr.mxu0 0.0
    %2787 = vmatpush1.msra.mxu0 0.0
    %2788 = vmatprep.subr.mxu0 0.0
    %2789 = vmatpush1.msra.mxu0 0.0
    %2790 = vmatprep.subr.mxu0 0.0
    %2791 = vmatpush1.msra.mxu0 0.0
    %2792 = vmatprep.subr.mxu0 0.0
    %2793 = vmatpush1.msra.mxu0 0.0
    %2794 = vmatprep.subr.mxu0 0.0
    %2795 = vmatpush1.msra.mxu0 0.0
    %2796 = vmatprep.subr.mxu0 0.0
    %2797 = vmatpush1.msra.mxu0 0.0
    %2798 = vmatprep.subr.mxu0 0.0
    %2799 = vmatpush1.msra.mxu0 0.0
    %2800 = vmatprep.subr.mxu0 0.0
    %2801 = vmatpush1.msra.mxu0 0.0
    %2802 = vmatprep.subr.mxu0 0.0
    %2803 = vmatpush1.msra.mxu0 0.0
    %2804 = vmatprep.mubr.f32.mxu0 0.0
    %2805 = vmatmul.mubr.f32.gmra.mrb[0].mxu0 %v2738
    %v2806 = vpop.f32.mrb[0].mxu0
    %v2807 = vadd.f32 0.0, %v2806
    %v2808 = vpop.f32.mrb[0].mxu0
    %2809 = vdwg.mxu0
    %2810 = vrot.lane.b32.xlu0 %v2217, 56
    %v2811 = vpop.permute.xlu0 %2810
    %v2814 = vsel %vm182, %v2733, 0
    %2816 = vmatprep.subr.mxu0 0.0
    %2817 = vmatpush1.msra.mxu0 %v2811
    %2818 = vmatprep.subr.mxu0 0.0
    %2819 = vmatpush1.msra.mxu0 0.0
    %2820 = vmatprep.subr.mxu0 0.0
    %2821 = vmatpush1.msra.mxu0 0.0
    %2822 = vmatprep.subr.mxu0 0.0
    %2823 = vmatpush1.msra.mxu0 0.0
    %2824 = vmatprep.subr.mxu0 0.0
    %2825 = vmatpush1.msra.mxu0 0.0
    %2826 = vmatprep.subr.mxu0 0.0
    %2827 = vmatpush1.msra.mxu0 0.0
    %2828 = vmatprep.subr.mxu0 0.0
    %2829 = vmatpush1.msra.mxu0 0.0
    %2830 = vmatprep.subr.mxu0 0.0
    %2831 = vmatpush1.msra.mxu0 0.0
    %2832 = vmatprep.subr.mxu0 0.0
    %2833 = vmatpush1.msra.mxu0 0.0
    %2834 = vmatprep.subr.mxu0 0.0
    %2835 = vmatpush1.msra.mxu0 0.0
    %2836 = vmatprep.subr.mxu0 0.0
    %2837 = vmatpush1.msra.mxu0 0.0
    %2838 = vmatprep.subr.mxu0 0.0
    %2839 = vmatpush1.msra.mxu0 0.0
    %2840 = vmatprep.subr.mxu0 0.0
    %2841 = vmatpush1.msra.mxu0 0.0
    %2842 = vmatprep.subr.mxu0 0.0
    %2843 = vmatpush1.msra.mxu0 0.0
    %2844 = vmatprep.subr.mxu0 0.0
    %2845 = vmatpush1.msra.mxu0 0.0
    %2846 = vmatprep.subr.mxu0 0.0
    %2847 = vmatpush1.msra.mxu0 0.0
    %2848 = vmatprep.subr.mxu0 0.0
    %2849 = vmatpush1.msra.mxu0 0.0
    %2850 = vmatprep.subr.mxu0 0.0
    %2851 = vmatpush1.msra.mxu0 0.0
    %2852 = vmatprep.subr.mxu0 0.0
    %2853 = vmatpush1.msra.mxu0 0.0
    %2854 = vmatprep.subr.mxu0 0.0
    %2855 = vmatpush1.msra.mxu0 0.0
    %2856 = vmatprep.subr.mxu0 0.0
    %2857 = vmatpush1.msra.mxu0 0.0
    %2858 = vmatprep.subr.mxu0 0.0
    %2859 = vmatpush1.msra.mxu0 0.0
    %2860 = vmatprep.subr.mxu0 0.0
    %2861 = vmatpush1.msra.mxu0 0.0
    %2862 = vmatprep.subr.mxu0 0.0
    %2863 = vmatpush1.msra.mxu0 0.0
    %2864 = vmatprep.subr.mxu0 0.0
    %2865 = vmatpush1.msra.mxu0 0.0
    %2866 = vmatprep.subr.mxu0 0.0
    %2867 = vmatpush1.msra.mxu0 0.0
    %2868 = vmatprep.subr.mxu0 0.0
    %2869 = vmatpush1.msra.mxu0 0.0
    %2870 = vmatprep.subr.mxu0 0.0
    %2871 = vmatpush1.msra.mxu0 0.0
    %2872 = vmatprep.subr.mxu0 0.0
    %2873 = vmatpush1.msra.mxu0 0.0
    %2874 = vmatprep.subr.mxu0 0.0
    %2875 = vmatpush1.msra.mxu0 0.0
    %2876 = vmatprep.subr.mxu0 0.0
    %2877 = vmatpush1.msra.mxu0 0.0
    %2878 = vmatprep.subr.mxu0 0.0
    %2879 = vmatpush1.msra.mxu0 0.0
    %2880 = vmatprep.mubr.f32.mxu0 0.0
    %2881 = vmatmul.mubr.f32.gmra.mrb[0].mxu0 %v2814
    %v2882 = vpop.f32.mrb[0].mxu0
    %v2883 = vadd.f32 0.0, %v2882
    %v2884 = vpop.f32.mrb[0].mxu0
    %2885 = vdwg.mxu0
    %v2887 = vsel %vm182, %v2807, 0
    %v2890 = vsel %vm182, %v2883, 0
    %2892 = vmatprep.subr.mxu0 0.0
    %2893 = vmatpush1.msra.mxu0 %v2110
    %2894 = vmatprep.subr.mxu0 0.0
    %2895 = vmatpush1.msra.mxu0 0.0
    %2896 = vmatprep.subr.mxu0 0.0
    %2897 = vmatpush1.msra.mxu0 0.0
    %2898 = vmatprep.subr.mxu0 0.0
    %2899 = vmatpush1.msra.mxu0 0.0
    %2900 = vmatprep.subr.mxu0 0.0
    %2901 = vmatpush1.msra.mxu0 0.0
    %2902 = vmatprep.subr.mxu0 0.0
    %2903 = vmatpush1.msra.mxu0 0.0
    %2904 = vmatprep.subr.mxu0 0.0
    %2905 = vmatpush1.msra.mxu0 0.0
    %2906 = vmatprep.subr.mxu0 0.0
    %2907 = vmatpush1.msra.mxu0 0.0
    %2908 = vmatprep.subr.mxu0 0.0
    %2909 = vmatpush1.msra.mxu0 0.0
    %2910 = vmatprep.subr.mxu0 0.0
    %2911 = vmatpush1.msra.mxu0 0.0
    %2912 = vmatprep.subr.mxu0 0.0
    %2913 = vmatpush1.msra.mxu0 0.0
    %2914 = vmatprep.subr.mxu0 0.0
    %2915 = vmatpush1.msra.mxu0 0.0
    %2916 = vmatprep.subr.mxu0 0.0
    %2917 = vmatpush1.msra.mxu0 0.0
    %2918 = vmatprep.subr.mxu0 0.0
    %2919 = vmatpush1.msra.mxu0 0.0
    %2920 = vmatprep.subr.mxu0 0.0
    %2921 = vmatpush1.msra.mxu0 0.0
    %2922 = vmatprep.subr.mxu0 0.0
    %2923 = vmatpush1.msra.mxu0 0.0
    %2924 = vmatprep.subr.mxu0 0.0
    %2925 = vmatpush1.msra.mxu0 0.0
    %2926 = vmatprep.subr.mxu0 0.0
    %2927 = vmatpush1.msra.mxu0 0.0
    %2928 = vmatprep.subr.mxu0 0.0
    %2929 = vmatpush1.msra.mxu0 0.0
    %2930 = vmatprep.subr.mxu0 0.0
    %2931 = vmatpush1.msra.mxu0 0.0
    %2932 = vmatprep.subr.mxu0 0.0
    %2933 = vmatpush1.msra.mxu0 0.0
    %2934 = vmatprep.subr.mxu0 0.0
    %2935 = vmatpush1.msra.mxu0 0.0
    %2936 = vmatprep.subr.mxu0 0.0
    %2937 = vmatpush1.msra.mxu0 0.0
    %2938 = vmatprep.subr.mxu0 0.0
    %2939 = vmatpush1.msra.mxu0 0.0
    %2940 = vmatprep.subr.mxu0 0.0
    %2941 = vmatpush1.msra.mxu0 0.0
    %2942 = vmatprep.subr.mxu0 0.0
    %2943 = vmatpush1.msra.mxu0 0.0
    %2944 = vmatprep.subr.mxu0 0.0
    %2945 = vmatpush1.msra.mxu0 0.0
    %2946 = vmatprep.subr.mxu0 0.0
    %2947 = vmatpush1.msra.mxu0 0.0
    %2948 = vmatprep.subr.mxu0 0.0
    %2949 = vmatpush1.msra.mxu0 0.0
    %2950 = vmatprep.subr.mxu0 0.0
    %2951 = vmatpush1.msra.mxu0 0.0
    %2952 = vmatprep.subr.mxu0 0.0
    %2953 = vmatpush1.msra.mxu0 0.0
    %2954 = vmatprep.subr.mxu0 0.0
    %2955 = vmatpush1.msra.mxu0 0.0
    %2956 = vmatprep.mubr.f32.mxu0 0.0
    %2957 = vmatmul.mubr.f32.gmra.mrb[0].mxu0 %v2887
    %v2958 = vpop.f32.mrb[0].mxu0
    %v2959 = vadd.f32 0.0, %v2958
    %v2960 = vpop.f32.mrb[0].mxu0
    %2961 = vmatprep.mubr.f32.mxu0 0.0
    %2962 = vmatmul.mubr.f32.gmra.mrb[0].mxu0 %v2890
    %v2963 = vpop.f32.mrb[0].mxu0
    %v2964 = vadd.f32 0.0, %v2963
    %v2965 = vpop.f32.mrb[0].mxu0
    %2966 = vdwg.mxu0
    %v2968 = vsel %vm182, %v2473, 0
    %v2971 = vsel %vm182, %v2549, 0
    %2973 = vmatprep.subr.mxu0 0.0
    %2974 = vmatpush1.msra.mxu0 %v2109
    %2975 = vmatprep.subr.mxu0 0.0
    %2976 = vmatpush1.msra.mxu0 0.0
    %2977 = vmatprep.subr.mxu0 0.0
    %2978 = vmatpush1.msra.mxu0 0.0
    %2979 = vmatprep.subr.mxu0 0.0
    %2980 = vmatpush1.msra.mxu0 0.0
    %2981 = vmatprep.subr.mxu0 0.0
    %2982 = vmatpush1.msra.mxu0 0.0
    %2983 = vmatprep.subr.mxu0 0.0
    %2984 = vmatpush1.msra.mxu0 0.0
    %2985 = vmatprep.subr.mxu0 0.0
    %2986 = vmatpush1.msra.mxu0 0.0
    %2987 = vmatprep.subr.mxu0 0.0
    %2988 = vmatpush1.msra.mxu0 0.0
    %2989 = vmatprep.subr.mxu0 0.0
    %2990 = vmatpush1.msra.mxu0 0.0
    %2991 = vmatprep.subr.mxu0 0.0
    %2992 = vmatpush1.msra.mxu0 0.0
    %2993 = vmatprep.subr.mxu0 0.0
    %2994 = vmatpush1.msra.mxu0 0.0
    %2995 = vmatprep.subr.mxu0 0.0
    %2996 = vmatpush1.msra.mxu0 0.0
    %2997 = vmatprep.subr.mxu0 0.0
    %2998 = vmatpush1.msra.mxu0 0.0
    %2999 = vmatprep.subr.mxu0 0.0
    %3000 = vmatpush1.msra.mxu0 0.0
    %3001 = vmatprep.subr.mxu0 0.0
    %3002 = vmatpush1.msra.mxu0 0.0
    %3003 = vmatprep.subr.mxu0 0.0
    %3004 = vmatpush1.msra.mxu0 0.0
    %3005 = vmatprep.subr.mxu0 0.0
    %3006 = vmatpush1.msra.mxu0 0.0
    %3007 = vmatprep.subr.mxu0 0.0
    %3008 = vmatpush1.msra.mxu0 0.0
    %3009 = vmatprep.subr.mxu0 0.0
    %3010 = vmatpush1.msra.mxu0 0.0
    %3011 = vmatprep.subr.mxu0 0.0
    %3012 = vmatpush1.msra.mxu0 0.0
    %3013 = vmatprep.subr.mxu0 0.0
    %3014 = vmatpush1.msra.mxu0 0.0
    %3015 = vmatprep.subr.mxu0 0.0
    %3016 = vmatpush1.msra.mxu0 0.0
    %3017 = vmatprep.subr.mxu0 0.0
    %3018 = vmatpush1.msra.mxu0 0.0
    %3019 = vmatprep.subr.mxu0 0.0
    %3020 = vmatpush1.msra.mxu0 0.0
    %3021 = vmatprep.subr.mxu0 0.0
    %3022 = vmatpush1.msra.mxu0 0.0
    %3023 = vmatprep.subr.mxu0 0.0
    %3024 = vmatpush1.msra.mxu0 0.0
    %3025 = vmatprep.subr.mxu0 0.0
    %3026 = vmatpush1.msra.mxu0 0.0
    %3027 = vmatprep.subr.mxu0 0.0
    %3028 = vmatpush1.msra.mxu0 0.0
    %3029 = vmatprep.subr.mxu0 0.0
    %3030 = vmatpush1.msra.mxu0 0.0
    %3031 = vmatprep.subr.mxu0 0.0
    %3032 = vmatpush1.msra.mxu0 0.0
    %3033 = vmatprep.subr.mxu0 0.0
    %3034 = vmatpush1.msra.mxu0 0.0
    %3035 = vmatprep.subr.mxu0 0.0
    %3036 = vmatpush1.msra.mxu0 0.0
    %3037 = vmatprep.mubr.f32.mxu0 0.0
    %3038 = vmatmul.mubr.f32.gmra.mrb[0].mxu0 %v2968
    %v3039 = vpop.f32.mrb[0].mxu0
    %v3040 = vadd.f32 %v2959, %v3039
    %v3041 = vpop.f32.mrb[0].mxu0
    %3042 = vmatprep.mubr.f32.mxu0 0.0
    %3043 = vmatmul.mubr.f32.gmra.mrb[0].mxu0 %v2971
    %v3044 = vpop.f32.mrb[0].mxu0
    %v3045 = vadd.f32 %v2964, %v3044
    %v3046 = vpop.f32.mrb[0].mxu0
    %3047 = vdwg.mxu0
    %3048 = vrot.lane.b32.xlu0 %v2212, 112
    %v3049 = vpop.permute.xlu0 %3048
    %3050 = vrot.lane.b32.xlu0 %v2212, 80
    %v3051 = vpop.permute.xlu0 %3050
    %v3052 = vsel %vm182, %v3049, 0
    %v3054 = vsel %vm182, %v3051, 0
    %3056 = vmatprep.subr.mxu0 0.0
    %3057 = vmatpush1.xpose.msra.mxu0 %v3054
    %3058 = vmatprep.subr.mxu0 0.0
    %3059 = vmatpush1.xpose.msra.mxu0 0.0
    %3060 = vmatprep.subr.mxu0 0.0
    %3061 = vmatpush1.xpose.msra.mxu0 0.0
    %3062 = vmatprep.subr.mxu0 0.0
    %3063 = vmatpush1.xpose.msra.mxu0 0.0
    %3064 = vmatprep.subr.mxu0 0.0
    %3065 = vmatpush1.xpose.msra.mxu0 0.0
    %3066 = vmatprep.subr.mxu0 0.0
    %3067 = vmatpush1.xpose.msra.mxu0 0.0
    %3068 = vmatprep.subr.mxu0 0.0
    %3069 = vmatpush1.xpose.msra.mxu0 0.0
    %3070 = vmatprep.subr.mxu0 0.0
    %3071 = vmatpush1.xpose.msra.mxu0 0.0
    %3072 = vmatprep.subr.mxu0 0.0
    %3073 = vmatpush1.xpose.msra.mxu0 0.0
    %3074 = vmatprep.subr.mxu0 0.0
    %3075 = vmatpush1.xpose.msra.mxu0 0.0
    %3076 = vmatprep.subr.mxu0 0.0
    %3077 = vmatpush1.xpose.msra.mxu0 0.0
    %3078 = vmatprep.subr.mxu0 0.0
    %3079 = vmatpush1.xpose.msra.mxu0 0.0
    %3080 = vmatprep.subr.mxu0 0.0
    %3081 = vmatpush1.xpose.msra.mxu0 0.0
    %3082 = vmatprep.subr.mxu0 0.0
    %3083 = vmatpush1.xpose.msra.mxu0 0.0
    %3084 = vmatprep.subr.mxu0 0.0
    %3085 = vmatpush1.xpose.msra.mxu0 0.0
    %3086 = vmatprep.subr.mxu0 0.0
    %3087 = vmatpush1.xpose.msra.mxu0 0.0
    %3088 = vmatprep.subr.mxu0 0.0
    %3089 = vmatpush1.xpose.msra.mxu0 0.0
    %3090 = vmatprep.subr.mxu0 0.0
    %3091 = vmatpush1.xpose.msra.mxu0 0.0
    %3092 = vmatprep.subr.mxu0 0.0
    %3093 = vmatpush1.xpose.msra.mxu0 0.0
    %3094 = vmatprep.subr.mxu0 0.0
    %3095 = vmatpush1.xpose.msra.mxu0 0.0
    %3096 = vmatprep.subr.mxu0 0.0
    %3097 = vmatpush1.xpose.msra.mxu0 0.0
    %3098 = vmatprep.subr.mxu0 0.0
    %3099 = vmatpush1.xpose.msra.mxu0 0.0
    %3100 = vmatprep.subr.mxu0 0.0
    %3101 = vmatpush1.xpose.msra.mxu0 0.0
    %3102 = vmatprep.subr.mxu0 0.0
    %3103 = vmatpush1.xpose.msra.mxu0 0.0
    %3104 = vmatprep.subr.mxu0 0.0
    %3105 = vmatpush1.xpose.msra.mxu0 0.0
    %3106 = vmatprep.subr.mxu0 0.0
    %3107 = vmatpush1.xpose.msra.mxu0 0.0
    %3108 = vmatprep.subr.mxu0 0.0
    %3109 = vmatpush1.xpose.msra.mxu0 0.0
    %3110 = vmatprep.subr.mxu0 0.0
    %3111 = vmatpush1.xpose.msra.mxu0 0.0
    %3112 = vmatprep.subr.mxu0 0.0
    %3113 = vmatpush1.xpose.msra.mxu0 0.0
    %3114 = vmatprep.subr.mxu0 0.0
    %3115 = vmatpush1.xpose.msra.mxu0 0.0
    %3116 = vmatprep.subr.mxu0 0.0
    %3117 = vmatpush1.xpose.msra.mxu0 0.0
    %3118 = vmatprep.subr.mxu0 0.0
    %3119 = vmatpush1.xpose.msra.mxu0 0.0
    %3120 = vmatprep.mubr.f32.mxu0 0.0
    %3121 = vmatmul.mubr.f32.gmra.mrb[0].mxu0 %v3052
    %v3122 = vpop.f32.mrb[0].mxu0
    %v3123 = vadd.f32 0.0, %v3122
    %v3124 = vpop.f32.mrb[0].mxu0
    %3125 = vdwg.mxu0
    %3126 = vrot.lane.b32.xlu0 %v2217, 112
    %v3127 = vpop.permute.xlu0 %3126
    %3128 = vrot.lane.b32.xlu0 %v2217, 80
    %v3129 = vpop.permute.xlu0 %3128
    %v3130 = vsel %vm182, %v3127, 0
    %v3132 = vsel %vm182, %v3129, 0
    %3134 = vmatprep.subr.mxu0 0.0
    %3135 = vmatpush1.xpose.msra.mxu0 %v3132
    %3136 = vmatprep.subr.mxu0 0.0
    %3137 = vmatpush1.xpose.msra.mxu0 0.0
    %3138 = vmatprep.subr.mxu0 0.0
    %3139 = vmatpush1.xpose.msra.mxu0 0.0
    %3140 = vmatprep.subr.mxu0 0.0
    %3141 = vmatpush1.xpose.msra.mxu0 0.0
    %3142 = vmatprep.subr.mxu0 0.0
    %3143 = vmatpush1.xpose.msra.mxu0 0.0
    %3144 = vmatprep.subr.mxu0 0.0
    %3145 = vmatpush1.xpose.msra.mxu0 0.0
    %3146 = vmatprep.subr.mxu0 0.0
    %3147 = vmatpush1.xpose.msra.mxu0 0.0
    %3148 = vmatprep.subr.mxu0 0.0
    %3149 = vmatpush1.xpose.msra.mxu0 0.0
    %3150 = vmatprep.subr.mxu0 0.0
    %3151 = vmatpush1.xpose.msra.mxu0 0.0
    %3152 = vmatprep.subr.mxu0 0.0
    %3153 = vmatpush1.xpose.msra.mxu0 0.0
    %3154 = vmatprep.subr.mxu0 0.0
    %3155 = vmatpush1.xpose.msra.mxu0 0.0
    %3156 = vmatprep.subr.mxu0 0.0
    %3157 = vmatpush1.xpose.msra.mxu0 0.0
    %3158 = vmatprep.subr.mxu0 0.0
    %3159 = vmatpush1.xpose.msra.mxu0 0.0
    %3160 = vmatprep.subr.mxu0 0.0
    %3161 = vmatpush1.xpose.msra.mxu0 0.0
    %3162 = vmatprep.subr.mxu0 0.0
    %3163 = vmatpush1.xpose.msra.mxu0 0.0
    %3164 = vmatprep.subr.mxu0 0.0
    %3165 = vmatpush1.xpose.msra.mxu0 0.0
    %3166 = vmatprep.subr.mxu0 0.0
    %3167 = vmatpush1.xpose.msra.mxu0 0.0
    %3168 = vmatprep.subr.mxu0 0.0
    %3169 = vmatpush1.xpose.msra.mxu0 0.0
    %3170 = vmatprep.subr.mxu0 0.0
    %3171 = vmatpush1.xpose.msra.mxu0 0.0
    %3172 = vmatprep.subr.mxu0 0.0
    %3173 = vmatpush1.xpose.msra.mxu0 0.0
    %3174 = vmatprep.subr.mxu0 0.0
    %3175 = vmatpush1.xpose.msra.mxu0 0.0
    %3176 = vmatprep.subr.mxu0 0.0
    %3177 = vmatpush1.xpose.msra.mxu0 0.0
    %3178 = vmatprep.subr.mxu0 0.0
    %3179 = vmatpush1.xpose.msra.mxu0 0.0
    %3180 = vmatprep.subr.mxu0 0.0
    %3181 = vmatpush1.xpose.msra.mxu0 0.0
    %3182 = vmatprep.subr.mxu0 0.0
    %3183 = vmatpush1.xpose.msra.mxu0 0.0
    %3184 = vmatprep.subr.mxu0 0.0
    %3185 = vmatpush1.xpose.msra.mxu0 0.0
    %3186 = vmatprep.subr.mxu0 0.0
    %3187 = vmatpush1.xpose.msra.mxu0 0.0
    %3188 = vmatprep.subr.mxu0 0.0
    %3189 = vmatpush1.xpose.msra.mxu0 0.0
    %3190 = vmatprep.subr.mxu0 0.0
    %3191 = vmatpush1.xpose.msra.mxu0 0.0
    %3192 = vmatprep.subr.mxu0 0.0
    %3193 = vmatpush1.xpose.msra.mxu0 0.0
    %3194 = vmatprep.subr.mxu0 0.0
    %3195 = vmatpush1.xpose.msra.mxu0 0.0
    %3196 = vmatprep.subr.mxu0 0.0
    %3197 = vmatpush1.xpose.msra.mxu0 0.0
    %3198 = vmatprep.mubr.f32.mxu0 0.0
    %3199 = vmatmul.mubr.f32.gmra.mrb[0].mxu0 %v3130
    %v3200 = vpop.f32.mrb[0].mxu0
    %v3201 = vadd.f32 0.0, %v3200
    %v3202 = vpop.f32.mrb[0].mxu0
    %3203 = vdwg.mxu0
    %v3204 = vmul.f32 %v3123, 0.35355338
    %v3205 = vmul.f32 %v3201, 0.35355338
    %v3206 = vadd.f32 %v3204, %v56
    %v3207 = vadd.f32 %v3205, %v60
    %v3208 = vsel %vm182, %v3206, -inf
    %3209 = vmax.xlane.f32.xlu0 %v3208
    %v3210 = vpop.xlane.xlu0 %3209
    %v3211 = vsel %vm182, %v3207, -inf
    %3212 = vmax.xlane.f32.xlu0 %v3211
    %v3213 = vpop.xlane.xlu0 %3212
    %v3214 = vsub.f32 %v3206, %v3210
    %v3215 = vsub.f32 %v3207, %v3213
    %v3216 = vmul.f32 %v3214, 1.442695
    %v3217 = vpow.pop %v3216
    %v3218 = vmul.f32 %v3215, 1.442695
    %v3219 = vpow.pop %v3218
    %v3220 = vsel %vm182, %v3217, 0.0
    %3221 = vadd.xlane.f32.xlu0 %v3220
    %v3222 = vpop.xlane.xlu0 %3221
    %v3223 = vsel %vm182, %v3219, 0.0
    %3224 = vadd.xlane.f32.xlu0 %v3223
    %v3225 = vpop.xlane.xlu0 %3224
    %v3226 = vrcp.pop %v3222
    %v3227 = vrcp.pop %v3225
    %v3228 = vmul.f32 %v3217, %v3226
    %v3229 = vmul.f32 %v3219, %v3227
    %3230 = vrot.lane.b32.xlu0 %v2212, 48
    %v3231 = vpop.permute.xlu0 %3230
    %v3234 = vsel %vm182, %v3228, 0
    %3236 = vmatprep.subr.mxu0 0.0
    %3237 = vmatpush1.msra.mxu0 %v3231
    %3238 = vmatprep.subr.mxu0 0.0
    %3239 = vmatpush1.msra.mxu0 0.0
    %3240 = vmatprep.subr.mxu0 0.0
    %3241 = vmatpush1.msra.mxu0 0.0
    %3242 = vmatprep.subr.mxu0 0.0
    %3243 = vmatpush1.msra.mxu0 0.0
    %3244 = vmatprep.subr.mxu0 0.0
    %3245 = vmatpush1.msra.mxu0 0.0
    %3246 = vmatprep.subr.mxu0 0.0
    %3247 = vmatpush1.msra.mxu0 0.0
    %3248 = vmatprep.subr.mxu0 0.0
    %3249 = vmatpush1.msra.mxu0 0.0
    %3250 = vmatprep.subr.mxu0 0.0
    %3251 = vmatpush1.msra.mxu0 0.0
    %3252 = vmatprep.subr.mxu0 0.0
    %3253 = vmatpush1.msra.mxu0 0.0
    %3254 = vmatprep.subr.mxu0 0.0
    %3255 = vmatpush1.msra.mxu0 0.0
    %3256 = vmatprep.subr.mxu0 0.0
    %3257 = vmatpush1.msra.mxu0 0.0
    %3258 = vmatprep.subr.mxu0 0.0
    %3259 = vmatpush1.msra.mxu0 0.0
    %3260 = vmatprep.subr.mxu0 0.0
    %3261 = vmatpush1.msra.mxu0 0.0
    %3262 = vmatprep.subr.mxu0 0.0
    %3263 = vmatpush1.msra.mxu0 0.0
    %3264 = vmatprep.subr.mxu0 0.0
    %3265 = vmatpush1.msra.mxu0 0.0
    %3266 = vmatprep.subr.mxu0 0.0
    %3267 = vmatpush1.msra.mxu0 0.0
    %3268 = vmatprep.subr.mxu0 0.0
    %3269 = vmatpush1.msra.mxu0 0.0
    %3270 = vmatprep.subr.mxu0 0.0
    %3271 = vmatpush1.msra.mxu0 0.0
    %3272 = vmatprep.subr.mxu0 0.0
    %3273 = vmatpush1.msra.mxu0 0.0
    %3274 = vmatprep.subr.mxu0 0.0
    %3275 = vmatpush1.msra.mxu0 0.0
    %3276 = vmatprep.subr.mxu0 0.0
    %3277 = vmatpush1.msra.mxu0 0.0
    %3278 = vmatprep.subr.mxu0 0.0
    %3279 = vmatpush1.msra.mxu0 0.0
    %3280 = vmatprep.subr.mxu0 0.0
    %3281 = vmatpush1.msra.mxu0 0.0
    %3282 = vmatprep.subr.mxu0 0.0
    %3283 = vmatpush1.msra.mxu0 0.0
    %3284 = vmatprep.subr.mxu0 0.0
    %3285 = vmatpush1.msra.mxu0 0.0
    %3286 = vmatprep.subr.mxu0 0.0
    %3287 = vmatpush1.msra.mxu0 0.0
    %3288 = vmatprep.subr.mxu0 0.0
    %3289 = vmatpush1.msra.mxu0 0.0
    %3290 = vmatprep.subr.mxu0 0.0
    %3291 = vmatpush1.msra.mxu0 0.0
    %3292 = vmatprep.subr.mxu0 0.0
    %3293 = vmatpush1.msra.mxu0 0.0
    %3294 = vmatprep.subr.mxu0 0.0
    %3295 = vmatpush1.msra.mxu0 0.0
    %3296 = vmatprep.subr.mxu0 0.0
    %3297 = vmatpush1.msra.mxu0 0.0
    %3298 = vmatprep.subr.mxu0 0.0
    %3299 = vmatpush1.msra.mxu0 0.0
    %3300 = vmatprep.mubr.f32.mxu0 0.0
    %3301 = vmatmul.mubr.f32.gmra.mrb[0].mxu0 %v3234
    %v3302 = vpop.f32.mrb[0].mxu0
    %v3303 = vadd.f32 0.0, %v3302
    %v3304 = vpop.f32.mrb[0].mxu0
    %3305 = vdwg.mxu0
    %3306 = vrot.lane.b32.xlu0 %v2217, 48
    %v3307 = vpop.permute.xlu0 %3306
    %v3310 = vsel %vm182, %v3229, 0
    %3312 = vmatprep.subr.mxu0 0.0
    %3313 = vmatpush1.msra.mxu0 %v3307
    %3314 = vmatprep.subr.mxu0 0.0
    %3315 = vmatpush1.msra.mxu0 0.0
    %3316 = vmatprep.subr.mxu0 0.0
    %3317 = vmatpush1.msra.mxu0 0.0
    %3318 = vmatprep.subr.mxu0 0.0
    %3319 = vmatpush1.msra.mxu0 0.0
    %3320 = vmatprep.subr.mxu0 0.0
    %3321 = vmatpush1.msra.mxu0 0.0
    %3322 = vmatprep.subr.mxu0 0.0
    %3323 = vmatpush1.msra.mxu0 0.0
    %3324 = vmatprep.subr.mxu0 0.0
    %3325 = vmatpush1.msra.mxu0 0.0
    %3326 = vmatprep.subr.mxu0 0.0
    %3327 = vmatpush1.msra.mxu0 0.0
    %3328 = vmatprep.subr.mxu0 0.0
    %3329 = vmatpush1.msra.mxu0 0.0
    %3330 = vmatprep.subr.mxu0 0.0
    %3331 = vmatpush1.msra.mxu0 0.0
    %3332 = vmatprep.subr.mxu0 0.0
    %3333 = vmatpush1.msra.mxu0 0.0
    %3334 = vmatprep.subr.mxu0 0.0
    %3335 = vmatpush1.msra.mxu0 0.0
    %3336 = vmatprep.subr.mxu0 0.0
    %3337 = vmatpush1.msra.mxu0 0.0
    %3338 = vmatprep.subr.mxu0 0.0
    %3339 = vmatpush1.msra.mxu0 0.0
    %3340 = vmatprep.subr.mxu0 0.0
    %3341 = vmatpush1.msra.mxu0 0.0
    %3342 = vmatprep.subr.mxu0 0.0
    %3343 = vmatpush1.msra.mxu0 0.0
    %3344 = vmatprep.subr.mxu0 0.0
    %3345 = vmatpush1.msra.mxu0 0.0
    %3346 = vmatprep.subr.mxu0 0.0
    %3347 = vmatpush1.msra.mxu0 0.0
    %3348 = vmatprep.subr.mxu0 0.0
    %3349 = vmatpush1.msra.mxu0 0.0
    %3350 = vmatprep.subr.mxu0 0.0
    %3351 = vmatpush1.msra.mxu0 0.0
    %3352 = vmatprep.subr.mxu0 0.0
    %3353 = vmatpush1.msra.mxu0 0.0
    %3354 = vmatprep.subr.mxu0 0.0
    %3355 = vmatpush1.msra.mxu0 0.0
    %3356 = vmatprep.subr.mxu0 0.0
    %3357 = vmatpush1.msra.mxu0 0.0
    %3358 = vmatprep.subr.mxu0 0.0
    %3359 = vmatpush1.msra.mxu0 0.0
    %3360 = vmatprep.subr.mxu0 0.0
    %3361 = vmatpush1.msra.mxu0 0.0
    %3362 = vmatprep.subr.mxu0 0.0
    %3363 = vmatpush1.msra.mxu0 0.0
    %3364 = vmatprep.subr.mxu0 0.0
    %3365 = vmatpush1.msra.mxu0 0.0
    %3366 = vmatprep.subr.mxu0 0.0
    %3367 = vmatpush1.msra.mxu0 0.0
    %3368 = vmatprep.subr.mxu0 0.0
    %3369 = vmatpush1.msra.mxu0 0.0
    %3370 = vmatprep.subr.mxu0 0.0
    %3371 = vmatpush1.msra.mxu0 0.0
    %3372 = vmatprep.subr.mxu0 0.0
    %3373 = vmatpush1.msra.mxu0 0.0
    %3374 = vmatprep.subr.mxu0 0.0
    %3375 = vmatpush1.msra.mxu0 0.0
    %3376 = vmatprep.mubr.f32.mxu0 0.0
    %3377 = vmatmul.mubr.f32.gmra.mrb[0].mxu0 %v3310
    %v3378 = vpop.f32.mrb[0].mxu0
    %v3379 = vadd.f32 0.0, %v3378
    %v3380 = vpop.f32.mrb[0].mxu0
    %3381 = vdwg.mxu0
    %v3383 = vsel %vm182, %v3303, 0
    %v3386 = vsel %vm182, %v3379, 0
    %3388 = vmatprep.subr.mxu0 0.0
    %3389 = vmatpush1.msra.mxu0 %v2111
    %3390 = vmatprep.subr.mxu0 0.0
    %3391 = vmatpush1.msra.mxu0 0.0
    %3392 = vmatprep.subr.mxu0 0.0
    %3393 = vmatpush1.msra.mxu0 0.0
    %3394 = vmatprep.subr.mxu0 0.0
    %3395 = vmatpush1.msra.mxu0 0.0
    %3396 = vmatprep.subr.mxu0 0.0
    %3397 = vmatpush1.msra.mxu0 0.0
    %3398 = vmatprep.subr.mxu0 0.0
    %3399 = vmatpush1.msra.mxu0 0.0
    %3400 = vmatprep.subr.mxu0 0.0
    %3401 = vmatpush1.msra.mxu0 0.0
    %3402 = vmatprep.subr.mxu0 0.0
    %3403 = vmatpush1.msra.mxu0 0.0
    %3404 = vmatprep.subr.mxu0 0.0
    %3405 = vmatpush1.msra.mxu0 0.0
    %3406 = vmatprep.subr.mxu0 0.0
    %3407 = vmatpush1.msra.mxu0 0.0
    %3408 = vmatprep.subr.mxu0 0.0
    %3409 = vmatpush1.msra.mxu0 0.0
    %3410 = vmatprep.subr.mxu0 0.0
    %3411 = vmatpush1.msra.mxu0 0.0
    %3412 = vmatprep.subr.mxu0 0.0
    %3413 = vmatpush1.msra.mxu0 0.0
    %3414 = vmatprep.subr.mxu0 0.0
    %3415 = vmatpush1.msra.mxu0 0.0
    %3416 = vmatprep.subr.mxu0 0.0
    %3417 = vmatpush1.msra.mxu0 0.0
    %3418 = vmatprep.subr.mxu0 0.0
    %3419 = vmatpush1.msra.mxu0 0.0
    %3420 = vmatprep.subr.mxu0 0.0
    %3421 = vmatpush1.msra.mxu0 0.0
    %3422 = vmatprep.subr.mxu0 0.0
    %3423 = vmatpush1.msra.mxu0 0.0
    %3424 = vmatprep.subr.mxu0 0.0
    %3425 = vmatpush1.msra.mxu0 0.0
    %3426 = vmatprep.subr.mxu0 0.0
    %3427 = vmatpush1.msra.mxu0 0.0
    %3428 = vmatprep.subr.mxu0 0.0
    %3429 = vmatpush1.msra.mxu0 0.0
    %3430 = vmatprep.subr.mxu0 0.0
    %3431 = vmatpush1.msra.mxu0 0.0
    %3432 = vmatprep.subr.mxu0 0.0
    %3433 = vmatpush1.msra.mxu0 0.0
    %3434 = vmatprep.subr.mxu0 0.0
    %3435 = vmatpush1.msra.mxu0 0.0
    %3436 = vmatprep.subr.mxu0 0.0
    %3437 = vmatpush1.msra.mxu0 0.0
    %3438 = vmatprep.subr.mxu0 0.0
    %3439 = vmatpush1.msra.mxu0 0.0
    %3440 = vmatprep.subr.mxu0 0.0
    %3441 = vmatpush1.msra.mxu0 0.0
    %3442 = vmatprep.subr.mxu0 0.0
    %3443 = vmatpush1.msra.mxu0 0.0
    %3444 = vmatprep.subr.mxu0 0.0
    %3445 = vmatpush1.msra.mxu0 0.0
    %3446 = vmatprep.subr.mxu0 0.0
    %3447 = vmatpush1.msra.mxu0 0.0
    %3448 = vmatprep.subr.mxu0 0.0
    %3449 = vmatpush1.msra.mxu0 0.0
    %3450 = vmatprep.subr.mxu0 0.0
    %3451 = vmatpush1.msra.mxu0 0.0
    %3452 = vmatprep.mubr.f32.mxu0 0.0
    %3453 = vmatmul.mubr.f32.gmra.mrb[0].mxu0 %v3383
    %v3454 = vpop.f32.mrb[0].mxu0
    %v3455 = vadd.f32 0.0, %v3454
    %v3456 = vpop.f32.mrb[0].mxu0
    %3457 = vmatprep.mubr.f32.mxu0 0.0
    %3458 = vmatmul.mubr.f32.gmra.mrb[0].mxu0 %v3386
    %v3459 = vpop.f32.mrb[0].mxu0
    %v3460 = vadd.f32 0.0, %v3459
    %v3461 = vpop.f32.mrb[0].mxu0
    %3462 = vdwg.mxu0
    %v3463 = vadd.f32 %v3040, %v3455
    %v3464 = vadd.f32 %v3045, %v3460
    %3465 = vrot.lane.b32.xlu0 %v2212, 104
    %v3466 = vpop.permute.xlu0 %3465
    %3467 = vrot.lane.b32.xlu0 %v2212, 72
    %v3468 = vpop.permute.xlu0 %3467
    %v3469 = vsel %vm182, %v3466, 0
    %v3471 = vsel %vm182, %v3468, 0
    %3473 = vmatprep.subr.mxu0 0.0
    %3474 = vmatpush1.xpose.msra.mxu0 %v3471
    %3475 = vmatprep.subr.mxu0 0.0
    %3476 = vmatpush1.xpose.msra.mxu0 0.0
    %3477 = vmatprep.subr.mxu0 0.0
    %3478 = vmatpush1.xpose.msra.mxu0 0.0
    %3479 = vmatprep.subr.mxu0 0.0
    %3480 = vmatpush1.xpose.msra.mxu0 0.0
    %3481 = vmatprep.subr.mxu0 0.0
    %3482 = vmatpush1.xpose.msra.mxu0 0.0
    %3483 = vmatprep.subr.mxu0 0.0
    %3484 = vmatpush1.xpose.msra.mxu0 0.0
    %3485 = vmatprep.subr.mxu0 0.0
    %3486 = vmatpush1.xpose.msra.mxu0 0.0
    %3487 = vmatprep.subr.mxu0 0.0
    %3488 = vmatpush1.xpose.msra.mxu0 0.0
    %3489 = vmatprep.subr.mxu0 0.0
    %3490 = vmatpush1.xpose.msra.mxu0 0.0
    %3491 = vmatprep.subr.mxu0 0.0
    %3492 = vmatpush1.xpose.msra.mxu0 0.0
    %3493 = vmatprep.subr.mxu0 0.0
    %3494 = vmatpush1.xpose.msra.mxu0 0.0
    %3495 = vmatprep.subr.mxu0 0.0
    %3496 = vmatpush1.xpose.msra.mxu0 0.0
    %3497 = vmatprep.subr.mxu0 0.0
    %3498 = vmatpush1.xpose.msra.mxu0 0.0
    %3499 = vmatprep.subr.mxu0 0.0
    %3500 = vmatpush1.xpose.msra.mxu0 0.0
    %3501 = vmatprep.subr.mxu0 0.0
    %3502 = vmatpush1.xpose.msra.mxu0 0.0
    %3503 = vmatprep.subr.mxu0 0.0
    %3504 = vmatpush1.xpose.msra.mxu0 0.0
    %3505 = vmatprep.subr.mxu0 0.0
    %3506 = vmatpush1.xpose.msra.mxu0 0.0
    %3507 = vmatprep.subr.mxu0 0.0
    %3508 = vmatpush1.xpose.msra.mxu0 0.0
    %3509 = vmatprep.subr.mxu0 0.0
    %3510 = vmatpush1.xpose.msra.mxu0 0.0
    %3511 = vmatprep.subr.mxu0 0.0
    %3512 = vmatpush1.xpose.msra.mxu0 0.0
    %3513 = vmatprep.subr.mxu0 0.0
    %3514 = vmatpush1.xpose.msra.mxu0 0.0
    %3515 = vmatprep.subr.mxu0 0.0
    %3516 = vmatpush1.xpose.msra.mxu0 0.0
    %3517 = vmatprep.subr.mxu0 0.0
    %3518 = vmatpush1.xpose.msra.mxu0 0.0
    %3519 = vmatprep.subr.mxu0 0.0
    %3520 = vmatpush1.xpose.msra.mxu0 0.0
    %3521 = vmatprep.subr.mxu0 0.0
    %3522 = vmatpush1.xpose.msra.mxu0 0.0
    %3523 = vmatprep.subr.mxu0 0.0
    %3524 = vmatpush1.xpose.msra.mxu0 0.0
    %3525 = vmatprep.subr.mxu0 0.0
    %3526 = vmatpush1.xpose.msra.mxu0 0.0
    %3527 = vmatprep.subr.mxu0 0.0
    %3528 = vmatpush1.xpose.msra.mxu0 0.0
    %3529 = vmatprep.subr.mxu0 0.0
    %3530 = vmatpush1.xpose.msra.mxu0 0.0
    %3531 = vmatprep.subr.mxu0 0.0
    %3532 = vmatpush1.xpose.msra.mxu0 0.0
    %3533 = vmatprep.subr.mxu0 0.0
    %3534 = vmatpush1.xpose.msra.mxu0 0.0
    %3535 = vmatprep.subr.mxu0 0.0
    %3536 = vmatpush1.xpose.msra.mxu0 0.0
    %3537 = vmatprep.mubr.f32.mxu0 0.0
    %3538 = vmatmul.mubr.f32.gmra.mrb[0].mxu0 %v3469
    %v3539 = vpop.f32.mrb[0].mxu0
    %v3540 = vadd.f32 0.0, %v3539
    %v3541 = vpop.f32.mrb[0].mxu0
    %3542 = vdwg.mxu0
    %3543 = vrot.lane.b32.xlu0 %v2217, 104
    %v3544 = vpop.permute.xlu0 %3543
    %3545 = vrot.lane.b32.xlu0 %v2217, 72
    %v3546 = vpop.permute.xlu0 %3545
    %v3547 = vsel %vm182, %v3544, 0
    %v3549 = vsel %vm182, %v3546, 0
    %3551 = vmatprep.subr.mxu0 0.0
    %3552 = vmatpush1.xpose.msra.mxu0 %v3549
    %3553 = vmatprep.subr.mxu0 0.0
    %3554 = vmatpush1.xpose.msra.mxu0 0.0
    %3555 = vmatprep.subr.mxu0 0.0
    %3556 = vmatpush1.xpose.msra.mxu0 0.0
    %3557 = vmatprep.subr.mxu0 0.0
    %3558 = vmatpush1.xpose.msra.mxu0 0.0
    %3559 = vmatprep.subr.mxu0 0.0
    %3560 = vmatpush1.xpose.msra.mxu0 0.0
    %3561 = vmatprep.subr.mxu0 0.0
    %3562 = vmatpush1.xpose.msra.mxu0 0.0
    %3563 = vmatprep.subr.mxu0 0.0
    %3564 = vmatpush1.xpose.msra.mxu0 0.0
    %3565 = vmatprep.subr.mxu0 0.0
    %3566 = vmatpush1.xpose.msra.mxu0 0.0
    %3567 = vmatprep.subr.mxu0 0.0
    %3568 = vmatpush1.xpose.msra.mxu0 0.0
    %3569 = vmatprep.subr.mxu0 0.0
    %3570 = vmatpush1.xpose.msra.mxu0 0.0
    %3571 = vmatprep.subr.mxu0 0.0
    %3572 = vmatpush1.xpose.msra.mxu0 0.0
    %3573 = vmatprep.subr.mxu0 0.0
    %3574 = vmatpush1.xpose.msra.mxu0 0.0
    %3575 = vmatprep.subr.mxu0 0.0
    %3576 = vmatpush1.xpose.msra.mxu0 0.0
    %3577 = vmatprep.subr.mxu0 0.0
    %3578 = vmatpush1.xpose.msra.mxu0 0.0
    %3579 = vmatprep.subr.mxu0 0.0
    %3580 = vmatpush1.xpose.msra.mxu0 0.0
    %3581 = vmatprep.subr.mxu0 0.0
    %3582 = vmatpush1.xpose.msra.mxu0 0.0
    %3583 = vmatprep.subr.mxu0 0.0
    %3584 = vmatpush1.xpose.msra.mxu0 0.0
    %3585 = vmatprep.subr.mxu0 0.0
    %3586 = vmatpush1.xpose.msra.mxu0 0.0
    %3587 = vmatprep.subr.mxu0 0.0
    %3588 = vmatpush1.xpose.msra.mxu0 0.0
    %3589 = vmatprep.subr.mxu0 0.0
    %3590 = vmatpush1.xpose.msra.mxu0 0.0
    %3591 = vmatprep.subr.mxu0 0.0
    %3592 = vmatpush1.xpose.msra.mxu0 0.0
    %3593 = vmatprep.subr.mxu0 0.0
    %3594 = vmatpush1.xpose.msra.mxu0 0.0
    %3595 = vmatprep.subr.mxu0 0.0
    %3596 = vmatpush1.xpose.msra.mxu0 0.0
    %3597 = vmatprep.subr.mxu0 0.0
    %3598 = vmatpush1.xpose.msra.mxu0 0.0
    %3599 = vmatprep.subr.mxu0 0.0
    %3600 = vmatpush1.xpose.msra.mxu0 0.0
    %3601 = vmatprep.subr.mxu0 0.0
    %3602 = vmatpush1.xpose.msra.mxu0 0.0
    %3603 = vmatprep.subr.mxu0 0.0
    %3604 = vmatpush1.xpose.msra.mxu0 0.0
    %3605 = vmatprep.subr.mxu0 0.0
    %3606 = vmatpush1.xpose.msra.mxu0 0.0
    %3607 = vmatprep.subr.mxu0 0.0
    %3608 = vmatpush1.xpose.msra.mxu0 0.0
    %3609 = vmatprep.subr.mxu0 0.0
    %3610 = vmatpush1.xpose.msra.mxu0 0.0
    %3611 = vmatprep.subr.mxu0 0.0
    %3612 = vmatpush1.xpose.msra.mxu0 0.0
    %3613 = vmatprep.subr.mxu0 0.0
    %3614 = vmatpush1.xpose.msra.mxu0 0.0
    %3615 = vmatprep.mubr.f32.mxu0 0.0
    %3616 = vmatmul.mubr.f32.gmra.mrb[0].mxu0 %v3547
    %v3617 = vpop.f32.mrb[0].mxu0
    %v3618 = vadd.f32 0.0, %v3617
    %v3619 = vpop.f32.mrb[0].mxu0
    %3620 = vdwg.mxu0
    %v3621 = vmul.f32 %v3540, 0.35355338
    %v3622 = vmul.f32 %v3618, 0.35355338
    %v3623 = vadd.f32 %v3621, %v56
    %v3624 = vadd.f32 %v3622, %v60
    %v3625 = vsel %vm182, %v3623, -inf
    %3626 = vmax.xlane.f32.xlu0 %v3625
    %v3627 = vpop.xlane.xlu0 %3626
    %v3628 = vsel %vm182, %v3624, -inf
    %3629 = vmax.xlane.f32.xlu0 %v3628
    %v3630 = vpop.xlane.xlu0 %3629
    %v3631 = vsub.f32 %v3623, %v3627
    %v3632 = vsub.f32 %v3624, %v3630
    %v3633 = vmul.f32 %v3631, 1.442695
    %v3634 = vpow.pop %v3633
    %v3635 = vmul.f32 %v3632, 1.442695
    %v3636 = vpow.pop %v3635
    %v3637 = vsel %vm182, %v3634, 0.0
    %3638 = vadd.xlane.f32.xlu0 %v3637
    %v3639 = vpop.xlane.xlu0 %3638
    %v3640 = vsel %vm182, %v3636, 0.0
    %3641 = vadd.xlane.f32.xlu0 %v3640
    %v3642 = vpop.xlane.xlu0 %3641
    %v3643 = vrcp.pop %v3639
    %v3644 = vrcp.pop %v3642
    %v3645 = vmul.f32 %v3634, %v3643
    %v3646 = vmul.f32 %v3636, %v3644
    %3647 = vrot.lane.b32.xlu0 %v2212, 40
    %v3648 = vpop.permute.xlu0 %3647
    %v3651 = vsel %vm182, %v3645, 0
    %3653 = vmatprep.subr.mxu0 0.0
    %3654 = vmatpush1.msra.mxu0 %v3648
    %3655 = vmatprep.subr.mxu0 0.0
    %3656 = vmatpush1.msra.mxu0 0.0
    %3657 = vmatprep.subr.mxu0 0.0
    %3658 = vmatpush1.msra.mxu0 0.0
    %3659 = vmatprep.subr.mxu0 0.0
    %3660 = vmatpush1.msra.mxu0 0.0
    %3661 = vmatprep.subr.mxu0 0.0
    %3662 = vmatpush1.msra.mxu0 0.0
    %3663 = vmatprep.subr.mxu0 0.0
    %3664 = vmatpush1.msra.mxu0 0.0
    %3665 = vmatprep.subr.mxu0 0.0
    %3666 = vmatpush1.msra.mxu0 0.0
    %3667 = vmatprep.subr.mxu0 0.0
    %3668 = vmatpush1.msra.mxu0 0.0
    %3669 = vmatprep.subr.mxu0 0.0
    %3670 = vmatpush1.msra.mxu0 0.0
    %3671 = vmatprep.subr.mxu0 0.0
    %3672 = vmatpush1.msra.mxu0 0.0
    %3673 = vmatprep.subr.mxu0 0.0
    %3674 = vmatpush1.msra.mxu0 0.0
    %3675 = vmatprep.subr.mxu0 0.0
    %3676 = vmatpush1.msra.mxu0 0.0
    %3677 = vmatprep.subr.mxu0 0.0
    %3678 = vmatpush1.msra.mxu0 0.0
    %3679 = vmatprep.subr.mxu0 0.0
    %3680 = vmatpush1.msra.mxu0 0.0
    %3681 = vmatprep.subr.mxu0 0.0
    %3682 = vmatpush1.msra.mxu0 0.0
    %3683 = vmatprep.subr.mxu0 0.0
    %3684 = vmatpush1.msra.mxu0 0.0
    %3685 = vmatprep.subr.mxu0 0.0
    %3686 = vmatpush1.msra.mxu0 0.0
    %3687 = vmatprep.subr.mxu0 0.0
    %3688 = vmatpush1.msra.mxu0 0.0
    %3689 = vmatprep.subr.mxu0 0.0
    %3690 = vmatpush1.msra.mxu0 0.0
    %3691 = vmatprep.subr.mxu0 0.0
    %3692 = vmatpush1.msra.mxu0 0.0
    %3693 = vmatprep.subr.mxu0 0.0
    %3694 = vmatpush1.msra.mxu0 0.0
    %3695 = vmatprep.subr.mxu0 0.0
    %3696 = vmatpush1.msra.mxu0 0.0
    %3697 = vmatprep.subr.mxu0 0.0
    %3698 = vmatpush1.msra.mxu0 0.0
    %3699 = vmatprep.subr.mxu0 0.0
    %3700 = vmatpush1.msra.mxu0 0.0
    %3701 = vmatprep.subr.mxu0 0.0
    %3702 = vmatpush1.msra.mxu0 0.0
    %3703 = vmatprep.subr.mxu0 0.0
    %3704 = vmatpush1.msra.mxu0 0.0
    %3705 = vmatprep.subr.mxu0 0.0
    %3706 = vmatpush1.msra.mxu0 0.0
    %3707 = vmatprep.subr.mxu0 0.0
    %3708 = vmatpush1.msra.mxu0 0.0
    %3709 = vmatprep.subr.mxu0 0.0
    %3710 = vmatpush1.msra.mxu0 0.0
    %3711 = vmatprep.subr.mxu0 0.0
    %3712 = vmatpush1.msra.mxu0 0.0
    %3713 = vmatprep.subr.mxu0 0.0
    %3714 = vmatpush1.msra.mxu0 0.0
    %3715 = vmatprep.subr.mxu0 0.0
    %3716 = vmatpush1.msra.mxu0 0.0
    %3717 = vmatprep.mubr.f32.mxu0 0.0
    %3718 = vmatmul.mubr.f32.gmra.mrb[0].mxu0 %v3651
    %v3719 = vpop.f32.mrb[0].mxu0
    %v3720 = vadd.f32 0.0, %v3719
    %v3721 = vpop.f32.mrb[0].mxu0
    %3722 = vdwg.mxu0
    %3723 = vrot.lane.b32.xlu0 %v2217, 40
    %v3724 = vpop.permute.xlu0 %3723
    %v3727 = vsel %vm182, %v3646, 0
    %3729 = vmatprep.subr.mxu0 0.0
    %3730 = vmatpush1.msra.mxu0 %v3724
    %3731 = vmatprep.subr.mxu0 0.0
    %3732 = vmatpush1.msra.mxu0 0.0
    %3733 = vmatprep.subr.mxu0 0.0
    %3734 = vmatpush1.msra.mxu0 0.0
    %3735 = vmatprep.subr.mxu0 0.0
    %3736 = vmatpush1.msra.mxu0 0.0
    %3737 = vmatprep.subr.mxu0 0.0
    %3738 = vmatpush1.msra.mxu0 0.0
    %3739 = vmatprep.subr.mxu0 0.0
    %3740 = vmatpush1.msra.mxu0 0.0
    %3741 = vmatprep.subr.mxu0 0.0
    %3742 = vmatpush1.msra.mxu0 0.0
    %3743 = vmatprep.subr.mxu0 0.0
    %3744 = vmatpush1.msra.mxu0 0.0
    %3745 = vmatprep.subr.mxu0 0.0
    %3746 = vmatpush1.msra.mxu0 0.0
    %3747 = vmatprep.subr.mxu0 0.0
    %3748 = vmatpush1.msra.mxu0 0.0
    %3749 = vmatprep.subr.mxu0 0.0
    %3750 = vmatpush1.msra.mxu0 0.0
    %3751 = vmatprep.subr.mxu0 0.0
    %3752 = vmatpush1.msra.mxu0 0.0
    %3753 = vmatprep.subr.mxu0 0.0
    %3754 = vmatpush1.msra.mxu0 0.0
    %3755 = vmatprep.subr.mxu0 0.0
    %3756 = vmatpush1.msra.mxu0 0.0
    %3757 = vmatprep.subr.mxu0 0.0
    %3758 = vmatpush1.msra.mxu0 0.0
    %3759 = vmatprep.subr.mxu0 0.0
    %3760 = vmatpush1.msra.mxu0 0.0
    %3761 = vmatprep.subr.mxu0 0.0
    %3762 = vmatpush1.msra.mxu0 0.0
    %3763 = vmatprep.subr.mxu0 0.0
    %3764 = vmatpush1.msra.mxu0 0.0
    %3765 = vmatprep.subr.mxu0 0.0
    %3766 = vmatpush1.msra.mxu0 0.0
    %3767 = vmatprep.subr.mxu0 0.0
    %3768 = vmatpush1.msra.mxu0 0.0
    %3769 = vmatprep.subr.mxu0 0.0
    %3770 = vmatpush1.msra.mxu0 0.0
    %3771 = vmatprep.subr.mxu0 0.0
    %3772 = vmatpush1.msra.mxu0 0.0
    %3773 = vmatprep.subr.mxu0 0.0
    %3774 = vmatpush1.msra.mxu0 0.0
    %3775 = vmatprep.subr.mxu0 0.0
    %3776 = vmatpush1.msra.mxu0 0.0
    %3777 = vmatprep.subr.mxu0 0.0
    %3778 = vmatpush1.msra.mxu0 0.0
    %3779 = vmatprep.subr.mxu0 0.0
    %3780 = vmatpush1.msra.mxu0 0.0
    %3781 = vmatprep.subr.mxu0 0.0
    %3782 = vmatpush1.msra.mxu0 0.0
    %3783 = vmatprep.subr.mxu0 0.0
    %3784 = vmatpush1.msra.mxu0 0.0
    %3785 = vmatprep.subr.mxu0 0.0
    %3786 = vmatpush1.msra.mxu0 0.0
    %3787 = vmatprep.subr.mxu0 0.0
    %3788 = vmatpush1.msra.mxu0 0.0
    %3789 = vmatprep.subr.mxu0 0.0
    %3790 = vmatpush1.msra.mxu0 0.0
    %3791 = vmatprep.subr.mxu0 0.0
    %3792 = vmatpush1.msra.mxu0 0.0
    %3793 = vmatprep.mubr.f32.mxu0 0.0
    %3794 = vmatmul.mubr.f32.gmra.mrb[0].mxu0 %v3727
    %v3795 = vpop.f32.mrb[0].mxu0
    %v3796 = vadd.f32 0.0, %v3795
    %v3797 = vpop.f32.mrb[0].mxu0
    %3798 = vdwg.mxu0
    %v3800 = vsel %vm182, %v3720, 0
    %v3803 = vsel %vm182, %v3796, 0
    %3805 = vmatprep.subr.mxu0 0.0
    %3806 = vmatpush1.msra.mxu0 %v2112
    %3807 = vmatprep.subr.mxu0 0.0
    %3808 = vmatpush1.msra.mxu0 0.0
    %3809 = vmatprep.subr.mxu0 0.0
    %3810 = vmatpush1.msra.mxu0 0.0
    %3811 = vmatprep.subr.mxu0 0.0
    %3812 = vmatpush1.msra.mxu0 0.0
    %3813 = vmatprep.subr.mxu0 0.0
    %3814 = vmatpush1.msra.mxu0 0.0
    %3815 = vmatprep.subr.mxu0 0.0
    %3816 = vmatpush1.msra.mxu0 0.0
    %3817 = vmatprep.subr.mxu0 0.0
    %3818 = vmatpush1.msra.mxu0 0.0
    %3819 = vmatprep.subr.mxu0 0.0
    %3820 = vmatpush1.msra.mxu0 0.0
    %3821 = vmatprep.subr.mxu0 0.0
    %3822 = vmatpush1.msra.mxu0 0.0
    %3823 = vmatprep.subr.mxu0 0.0
    %3824 = vmatpush1.msra.mxu0 0.0
    %3825 = vmatprep.subr.mxu0 0.0
    %3826 = vmatpush1.msra.mxu0 0.0
    %3827 = vmatprep.subr.mxu0 0.0
    %3828 = vmatpush1.msra.mxu0 0.0
    %3829 = vmatprep.subr.mxu0 0.0
    %3830 = vmatpush1.msra.mxu0 0.0
    %3831 = vmatprep.subr.mxu0 0.0
    %3832 = vmatpush1.msra.mxu0 0.0
    %3833 = vmatprep.subr.mxu0 0.0
    %3834 = vmatpush1.msra.mxu0 0.0
    %3835 = vmatprep.subr.mxu0 0.0
    %3836 = vmatpush1.msra.mxu0 0.0
    %3837 = vmatprep.subr.mxu0 0.0
    %3838 = vmatpush1.msra.mxu0 0.0
    %3839 = vmatprep.subr.mxu0 0.0
    %3840 = vmatpush1.msra.mxu0 0.0
    %3841 = vmatprep.subr.mxu0 0.0
    %3842 = vmatpush1.msra.mxu0 0.0
    %3843 = vmatprep.subr.mxu0 0.0
    %3844 = vmatpush1.msra.mxu0 0.0
    %3845 = vmatprep.subr.mxu0 0.0
    %3846 = vmatpush1.msra.mxu0 0.0
    %3847 = vmatprep.subr.mxu0 0.0
    %3848 = vmatpush1.msra.mxu0 0.0
    %3849 = vmatprep.subr.mxu0 0.0
    %3850 = vmatpush1.msra.mxu0 0.0
    %3851 = vmatprep.subr.mxu0 0.0
    %3852 = vmatpush1.msra.mxu0 0.0
    %3853 = vmatprep.subr.mxu0 0.0
    %3854 = vmatpush1.msra.mxu0 0.0
    %3855 = vmatprep.subr.mxu0 0.0
    %3856 = vmatpush1.msra.mxu0 0.0
    %3857 = vmatprep.subr.mxu0 0.0
    %3858 = vmatpush1.msra.mxu0 0.0
    %3859 = vmatprep.subr.mxu0 0.0
    %3860 = vmatpush1.msra.mxu0 0.0
    %3861 = vmatprep.subr.mxu0 0.0
    %3862 = vmatpush1.msra.mxu0 0.0
    %3863 = vmatprep.subr.mxu0 0.0
    %3864 = vmatpush1.msra.mxu0 0.0
    %3865 = vmatprep.subr.mxu0 0.0
    %3866 = vmatpush1.msra.mxu0 0.0
    %3867 = vmatprep.subr.mxu0 0.0
    %3868 = vmatpush1.msra.mxu0 0.0
    %3869 = vmatprep.mubr.f32.mxu0 0.0
    %3870 = vmatmul.mubr.f32.gmra.mrb[0].mxu0 %v3800
    %v3871 = vpop.f32.mrb[0].mxu0
    %v3872 = vadd.f32 0.0, %v3871
    %v3873 = vpop.f32.mrb[0].mxu0
    %3874 = vmatprep.mubr.f32.mxu0 0.0
    %3875 = vmatmul.mubr.f32.gmra.mrb[0].mxu0 %v3803
    %v3876 = vpop.f32.mrb[0].mxu0
    %v3877 = vadd.f32 0.0, %v3876
    %v3878 = vpop.f32.mrb[0].mxu0
    %3879 = vdwg.mxu0
    %v3880 = vadd.f32 %v3463, %v3872
    %v3881 = vadd.f32 %v3464, %v3877
    %v3882 = vlaneseq
    %v3883 = vshrl.u32 %v3882, 7
    %v3884 = vsub.s32 0, %v3883
    %v3885 = vrot.slane %v2128, %v3884
    %v3886 = vadd.f32 %v3880, %v3885
    %v3887 = vadd.f32 %v3881, %v3885
    %v3888 = vadd.f32 %v2100, %v3886
    %v3889 = vadd.f32 %v2101, %v3887
    %v3890 = vsel %vm97, %v3888, 0.0
    %3891 = vadd.xlane.f32.xlu0 %v3890
    %v3892 = vpop.xlane.xlu0 %3891
    %v3893 = vsel %vm97, %v3889, 0.0
    %3894 = vadd.xlane.f32.xlu0 %v3893
    %v3895 = vpop.xlane.xlu0 %3894
    %v3896 = vmul.f32 %v3892, %v1856
    %v3897 = vmul.f32 %v3895, %v1856
    %v3898 = vsub.f32 %v3888, %v3896
    %v3899 = vsub.f32 %v3889, %v3897
    %v3900 = vmul.f32 %v3898, %v3898
    %v3901 = vmul.f32 %v3899, %v3899
    %v3902 = vsel %vm97, %v3900, 0.0
    %3903 = vadd.xlane.f32.xlu0 %v3902
    %v3904 = vpop.xlane.xlu0 %3903
    %v3905 = vsel %vm97, %v3901, 0.0
    %3906 = vadd.xlane.f32.xlu0 %v3905
    %v3907 = vpop.xlane.xlu0 %3906
    %v3908 = vmul.f32 %v3904, %v1856
    %v3909 = vmul.f32 %v3907, %v1856
    %v3910 = vadd.f32 %v3908, 1e-05
    %v3911 = vadd.f32 %v3909, 1e-05
    %v3912 = vrsqrt.pop %v3910
    %v3913 = vrsqrt.pop %v3911
    %v3914 = vmul.f32 %v3898, %v3912
    %v3915 = vmul.f32 %v3899, %v3913
    %v3916 = vlaneseq
    %v3917 = vshrl.u32 %v3916, 7
    %v3918 = vsub.s32 0, %v3917
    %v3919 = vrot.slane %v2131, %v3918
    %v3920 = vmul.f32 %v3914, %v3919
    %v3921 = vmul.f32 %v3915, %v3919
    %v3922 = vlaneseq
    %v3923 = vshrl.u32 %v3922, 7
    %v3924 = vsub.s32 0, %v3923
    %v3925 = vrot.slane %v2132, %v3924
    %v3926 = vadd.f32 %v3920, %v3925
    %v3927 = vadd.f32 %v3921, %v3925
    %v3928 = vlaneseq
    %v3929 = vshrl.u32 %v3928, 7
    %v3930 = vsub.s32 0, %v3929
    %v3931 = vrot.slane %v2129, %v3930
    %v3933 = vsel %vm97, %v3926, 0
    %v3936 = vsel %vm97, %v3927, 0
    %3938 = vmatprep.subr.mxu0 0.0
    %3939 = vmatpush1.msra.mxu0 %v2113
    %3940 = vmatprep.subr.mxu0 0.0
    %3941 = vmatpush1.msra.mxu0 %v2114
    %3942 = vmatprep.subr.mxu0 0.0
    %3943 = vmatpush1.msra.mxu0 %v2115
    %3944 = vmatprep.subr.mxu0 0.0
    %3945 = vmatpush1.msra.mxu0 %v2116
    %3946 = vmatprep.subr.mxu0 0.0
    %3947 = vmatpush1.msra.mxu0 0.0
    %3948 = vmatprep.subr.mxu0 0.0
    %3949 = vmatpush1.msra.mxu0 0.0
    %3950 = vmatprep.subr.mxu0 0.0
    %3951 = vmatpush1.msra.mxu0 0.0
    %3952 = vmatprep.subr.mxu0 0.0
    %3953 = vmatpush1.msra.mxu0 0.0
    %3954 = vmatprep.subr.mxu0 0.0
    %3955 = vmatpush1.msra.mxu0 0.0
    %3956 = vmatprep.subr.mxu0 0.0
    %3957 = vmatpush1.msra.mxu0 0.0
    %3958 = vmatprep.subr.mxu0 0.0
    %3959 = vmatpush1.msra.mxu0 0.0
    %3960 = vmatprep.subr.mxu0 0.0
    %3961 = vmatpush1.msra.mxu0 0.0
    %3962 = vmatprep.subr.mxu0 0.0
    %3963 = vmatpush1.msra.mxu0 0.0
    %3964 = vmatprep.subr.mxu0 0.0
    %3965 = vmatpush1.msra.mxu0 0.0
    %3966 = vmatprep.subr.mxu0 0.0
    %3967 = vmatpush1.msra.mxu0 0.0
    %3968 = vmatprep.subr.mxu0 0.0
    %3969 = vmatpush1.msra.mxu0 0.0
    %3970 = vmatprep.subr.mxu0 0.0
    %3971 = vmatpush1.msra.mxu0 0.0
    %3972 = vmatprep.subr.mxu0 0.0
    %3973 = vmatpush1.msra.mxu0 0.0
    %3974 = vmatprep.subr.mxu0 0.0
    %3975 = vmatpush1.msra.mxu0 0.0
    %3976 = vmatprep.subr.mxu0 0.0
    %3977 = vmatpush1.msra.mxu0 0.0
    %3978 = vmatprep.subr.mxu0 0.0
    %3979 = vmatpush1.msra.mxu0 0.0
    %3980 = vmatprep.subr.mxu0 0.0
    %3981 = vmatpush1.msra.mxu0 0.0
    %3982 = vmatprep.subr.mxu0 0.0
    %3983 = vmatpush1.msra.mxu0 0.0
    %3984 = vmatprep.subr.mxu0 0.0
    %3985 = vmatpush1.msra.mxu0 0.0
    %3986 = vmatprep.subr.mxu0 0.0
    %3987 = vmatpush1.msra.mxu0 0.0
    %3988 = vmatprep.subr.mxu0 0.0
    %3989 = vmatpush1.msra.mxu0 0.0
    %3990 = vmatprep.subr.mxu0 0.0
    %3991 = vmatpush1.msra.mxu0 0.0
    %3992 = vmatprep.subr.mxu0 0.0
    %3993 = vmatpush1.msra.mxu0 0.0
    %3994 = vmatprep.subr.mxu0 0.0
    %3995 = vmatpush1.msra.mxu0 0.0
    %3996 = vmatprep.subr.mxu0 0.0
    %3997 = vmatpush1.msra.mxu0 0.0
    %3998 = vmatprep.subr.mxu0 0.0
    %3999 = vmatpush1.msra.mxu0 0.0
    %4000 = vmatprep.subr.mxu0 0.0
    %4001 = vmatpush1.msra.mxu0 0.0
    %4002 = vmatprep.mubr.f32.mxu0 0.0
    %4003 = vmatmul.mubr.f32.gmra.mrb[0].mxu0 %v3933
    %v4004 = vpop.f32.mrb[0].mxu0
    %v4005 = vadd.f32 %v3931, %v4004
    %v4006 = vpop.f32.mrb[0].mxu0
    %4007 = vmatprep.mubr.f32.mxu0 0.0
    %4008 = vmatmul.mubr.f32.gmra.mrb[0].mxu0 %v3936
    %v4009 = vpop.f32.mrb[0].mxu0
    %v4010 = vadd.f32 %v3931, %v4009
    %v4011 = vpop.f32.mrb[0].mxu0
    %4012 = vdwg.mxu0
    %v4013 = vmax.f32 %v4005, 0.0
    %v4014 = vmax.f32 %v4010, 0.0
    %v4015 = vlaneseq
    %v4016 = vshrl.u32 %v4015, 7
    %v4017 = vsub.s32 0, %v4016
    %v4018 = vrot.slane %v2130, %v4017
    %v4020 = vsel %vm1980, %v4013, 0
    %v4023 = vsel %vm1980, %v4014, 0
    %4025 = vmatprep.subr.mxu0 0.0
    %4026 = vmatpush1.msra.mxu0 %v2118
    %4027 = vmatprep.subr.mxu0 0.0
    %4028 = vmatpush1.msra.mxu0 %v2119
    %4029 = vmatprep.subr.mxu0 0.0
    %4030 = vmatpush1.msra.mxu0 %v2120
    %4031 = vmatprep.subr.mxu0 0.0
    %4032 = vmatpush1.msra.mxu0 %v2121
    %4033 = vmatprep.subr.mxu0 0.0
    %4034 = vmatpush1.msra.mxu0 %v2122
    %4035 = vmatprep.subr.mxu0 0.0
    %4036 = vmatpush1.msra.mxu0 %v2123
    %4037 = vmatprep.subr.mxu0 0.0
    %4038 = vmatpush1.msra.mxu0 %v2124
    %4039 = vmatprep.subr.mxu0 0.0
    %4040 = vmatpush1.msra.mxu0 %v2125
    %4041 = vmatprep.subr.mxu0 0.0
    %4042 = vmatpush1.msra.mxu0 0.0
    %4043 = vmatprep.subr.mxu0 0.0
    %4044 = vmatpush1.msra.mxu0 0.0
    %4045 = vmatprep.subr.mxu0 0.0
    %4046 = vmatpush1.msra.mxu0 0.0
    %4047 = vmatprep.subr.mxu0 0.0
    %4048 = vmatpush1.msra.mxu0 0.0
    %4049 = vmatprep.subr.mxu0 0.0
    %4050 = vmatpush1.msra.mxu0 0.0
    %4051 = vmatprep.subr.mxu0 0.0
    %4052 = vmatpush1.msra.mxu0 0.0
    %4053 = vmatprep.subr.mxu0 0.0
    %4054 = vmatpush1.msra.mxu0 0.0
    %4055 = vmatprep.subr.mxu0 0.0
    %4056 = vmatpush1.msra.mxu0 0.0
    %4057 = vmatprep.subr.mxu0 0.0
    %4058 = vmatpush1.msra.mxu0 0.0
    %4059 = vmatprep.subr.mxu0 0.0
    %4060 = vmatpush1.msra.mxu0 0.0
    %4061 = vmatprep.subr.mxu0 0.0
    %4062 = vmatpush1.msra.mxu0 0.0
    %4063 = vmatprep.subr.mxu0 0.0
    %4064 = vmatpush1.msra.mxu0 0.0
    %4065 = vmatprep.subr.mxu0 0.0
    %4066 = vmatpush1.msra.mxu0 0.0
    %4067 = vmatprep.subr.mxu0 0.0
    %4068 = vmatpush1.msra.mxu0 0.0
    %4069 = vmatprep.subr.mxu0 0.0
    %4070 = vmatpush1.msra.mxu0 0.0
    %4071 = vmatprep.subr.mxu0 0.0
    %4072 = vmatpush1.msra.mxu0 0.0
    %4073 = vmatprep.subr.mxu0 0.0
    %4074 = vmatpush1.msra.mxu0 0.0
    %4075 = vmatprep.subr.mxu0 0.0
    %4076 = vmatpush1.msra.mxu0 0.0
    %4077 = vmatprep.subr.mxu0 0.0
    %4078 = vmatpush1.msra.mxu0 0.0
    %4079 = vmatprep.subr.mxu0 0.0
    %4080 = vmatpush1.msra.mxu0 0.0
    %4081 = vmatprep.subr.mxu0 0.0
    %4082 = vmatpush1.msra.mxu0 0.0
    %4083 = vmatprep.subr.mxu0 0.0
    %4084 = vmatpush1.msra.mxu0 0.0
    %4085 = vmatprep.subr.mxu0 0.0
    %4086 = vmatpush1.msra.mxu0 0.0
    %4087 = vmatprep.subr.mxu0 0.0
    %4088 = vmatpush1.msra.mxu0 0.0
    %4089 = vmatprep.mubr.f32.mxu0 0.0
    %4090 = vmatmul.mubr.f32.gmra.mrb[0].mxu0 %v4020
    %v4091 = vpop.f32.mrb[0].mxu0
    %v4092 = vadd.f32 %v4018, %v4091
    %v4093 = vpop.f32.mrb[0].mxu0
    %4094 = vmatprep.mubr.f32.mxu0 0.0
    %4095 = vmatmul.mubr.f32.gmra.mrb[0].mxu0 %v4023
    %v4096 = vpop.f32.mrb[0].mxu0
    %v4097 = vadd.f32 %v4018, %v4096
    %v4098 = vpop.f32.mrb[0].mxu0
    %4099 = vdwg.mxu0
    %v4100 = vadd.f32 %v3926, %v4092
    %v4101 = vadd.f32 %v3927, %v4097
    %v4102 = vsel %vm97, %v4100, 0.0
    %4103 = vadd.xlane.f32.xlu0 %v4102
    %v4104 = vpop.xlane.xlu0 %4103
    %v4105 = vsel %vm97, %v4101, 0.0
    %4106 = vadd.xlane.f32.xlu0 %v4105
    %v4107 = vpop.xlane.xlu0 %4106
    %v4108 = vmul.f32 %v4104, %v1856
    %v4109 = vmul.f32 %v4107, %v1856
    %v4110 = vsub.f32 %v4100, %v4108
    %v4111 = vsub.f32 %v4101, %v4109
    %v4112 = vmul.f32 %v4110, %v4110
    %v4113 = vmul.f32 %v4111, %v4111
    %v4114 = vsel %vm97, %v4112, 0.0
    %4115 = vadd.xlane.f32.xlu0 %v4114
    %v4116 = vpop.xlane.xlu0 %4115
    %v4117 = vsel %vm97, %v4113, 0.0
    %4118 = vadd.xlane.f32.xlu0 %v4117
    %v4119 = vpop.xlane.xlu0 %4118
    %v4120 = vmul.f32 %v4116, %v1856
    %v4121 = vmul.f32 %v4119, %v1856
    %v4122 = vadd.f32 %v4120, 1e-05
    %v4123 = vadd.f32 %v4121, 1e-05
    %v4124 = vrsqrt.pop %v4122
    %v4125 = vrsqrt.pop %v4123
    %v4126 = vmul.f32 %v4110, %v4124
    %v4127 = vmul.f32 %v4111, %v4125
    %v4128 = vlaneseq
    %v4129 = vshrl.u32 %v4128, 7
    %v4130 = vsub.s32 0, %v4129
    %v4131 = vrot.slane %v2133, %v4130
    %v4132 = vmul.f32 %v4126, %v4131
    %v4133 = vmul.f32 %v4127, %v4131
    %v4134 = vlaneseq
    %v4135 = vshrl.u32 %v4134, 7
    %v4136 = vsub.s32 0, %v4135
    %v4137 = vrot.slane %v2134, %v4136
    %v4138 = vadd.f32 %v4132, %v4137
    %v4139 = vadd.f32 %v4133, %v4137
    %s4140 = scalar_lea.vmem [#allocation7], 8
    %4141 = vst.msk [vmem:[%s4140] sm:$0xff] %vm97, %v4138
    %4142 = vst.msk [vmem:[%s4140 + $0x10] sm:$0xff] %vm97, %v4139
    // Predicated region
    $region30: #{tpu_custom_call.1} parent=1 // pred_check
      _
    $region31: #{tpu_custom_call.1} parent=1 // pred_check_branch
      %4144 = sbr.rel (0) target = $region33
    $region32: #{tpu_custom_call.1} parent=1 // pred_region
      %s4146 = ssub.s32 512, 512
      %4147 = vsyncadd [#allocation4], %s4146
      %s4148 = sshll.u32 [#allocation7], 4
      %s4149 = int_to_ptr.vmem [resolvable:$true] %s4148
      %4154 = dma.vmem_to_hbm [thread:$0]  %s4149, 512, %s5, [#allocation4], 128, 128, 8
    $region33: #{tpu_custom_call.1} parent=1 // pred_fallthru
      _
    // Predicated region
    $region34: #{tpu_custom_call.1} parent=1 // pred_check
      _
    $region35: #{tpu_custom_call.1} parent=1 // pred_check_branch
      %4156 = sbr.rel (0) target = $region37
    $region36: #{tpu_custom_call.1} parent=1 // pred_region
      %4157 = dma.done [#allocation4], 512
    $region37: #{tpu_custom_call.1} parent=1 // pred_fallthru
      _
    %4158 = vsyncpa [#allocation3], 1
    %4159 = vsyncpa [#allocation6], 1
    %4160 = vsyncpa [#allocation4], 1

</llo_original>
